<compile_context>
chip_gen: v6e
topology: v6e:2x2x1
jax: 0.10.0
libtpu: 0.0.40
codegen_flags: <defaults>
</compile_context>

<pallas_src>
import functools

import jax
import jax.numpy as jnp
from jax.experimental import pallas as pl
from jax.experimental.pallas import tpu as pltpu

EPS = 1e-5
# MXU operand dtype.  Accumulation (preferred_element_type) and the whole
# bias/ReLU/BatchNorm epilogue remain f32 (v5e has no bf16 VPU path).
MATMUL_DTYPE = jnp.bfloat16


# ---------------------------------------------------------------------------
# Fused Pallas kernel
# ---------------------------------------------------------------------------
def _conv_bn_block(src_ref, B_ref, b_ref, g_ref, beta_ref, dst_ref,
                   N, Ho, Wo, Cout, relu):
    """conv3x3(stride2,pad1) + bias (+ReLU) + train-mode BatchNorm2d, one layer.

    src_ref:  (N, 2, Hh, W*Cin)   H-padded, H-parity-split, lane-dense activation
                                  (plane p, row r holds padded row 2*r + p; NO W pad).
    B_ref:    (3*W*Cin, Wo*Cout)  banded conv weight, the 3 kh taps stacked along K.
    b_ref:    (1, Wo*Cout)        conv bias, pre-tiled along W on the host.
    g_ref, beta_ref: (1, Cout)    BN gamma / beta.
    dst_ref:  next layer's scratch (N, 2, Ho//2 + 1, Wo*Cout), or None (last layer).

    Returns the BN output as an (Ho*N, Wo*Cout) f32 value, rows ordered (ho, n).
    """
    WoC = Wo * Cout

    # ---- ONE matmul per layer: M = N*Ho, K = 3*W*Cin (taps folded into K).
    # LHS rows are ordered (ho, n) so the writeback below is Ho contiguous
    # lane-dense block stores.  Tap kh of output row ho is padded input row
    # 2*ho + kh  ->  parity plane kh & 1, row ho + (kh >> 1): a static slice.
    rows = []
    for ho in range(Ho):
        taps = [src_ref[:, kh & 1, ho + (kh >> 1), :] for kh in range(3)]  # 3 x (N, W*Cin)
        rows.append(jnp.concatenate(taps, axis=-1))                        # (N, 3*W*Cin)
    lhs = rows[0] if Ho == 1 else jnp.concatenate(rows, axis=0)            # (Ho*N, 3*W*Cin)
    y = jnp.dot(lhs.astype(MATMUL_DTYPE), B_ref[...],
                preferred_element_type=jnp.float32)                        # (Ho*N, WoC) f32

    y = y + b_ref[...]                       # pre-tiled bias, broadcast over rows
    if relu:
        y = jnp.maximum(y, 0.0)

    # ---- BatchNorm2d (training mode, biased variance): per-channel stats over
    # (N, Ho, Wo), single-pass sum / sum-of-squares in f32.
    cnt = float(N * Ho * Wo)
    s1 = jnp.sum(y, axis=0, keepdims=True)          # (1, WoC)
    s2 = jnp.sum(y * y, axis=0, keepdims=True)
    csum, csq = s1[:, :Cout], s2[:, :Cout]
    for wo in range(1, Wo):                          # fold Wo lane groups -> (1, Cout)
        csum = csum + s1[:, wo * Cout:(wo + 1) * Cout]
        csq = csq + s2[:, wo * Cout:(wo + 1) * Cout]
    mean = csum / cnt
    var = csq / cnt - mean * mean                    # biased variance
    inv = jax.lax.rsqrt(var + EPS)
    scale = g_ref[...] * inv                         # (1, Cout)
    shift = beta_ref[...] - mean * scale
    if Wo > 1:                                       # lane-tile the runtime stats
        scale = jnp.concatenate([scale] * Wo, axis=1)
        shift = jnp.concatenate([shift] * Wo, axis=1)
    y = y * scale + shift

    # ---- writeback into the next layer's parity-split scratch: Ho contiguous
    # (N, WoC) offset-0 unmasked block stores + 2 padding-row zero stores.
    if dst_ref is not None:
        for ho in range(Ho):
            h = ho + 1                               # +1: top H-padding row
            dst_ref[:, h & 1, h >> 1, :] = y[ho * N:(ho + 1) * N, :]
        zero = jnp.zeros((N, WoC), jnp.float32)
        dst_ref[:, 0, 0, :] = zero                   # padded row 0 (read by kh=0, ho=0)
        dst_ref[:, 1, Ho // 2, :] = zero             # padded row Ho+1 (hygiene only)
    return y


def _encoder_fused_kernel(x_ref,
                          B1, b1, g1, t1, B2, b2, g2, t2,
                          B3, b3, g3, t3, B4, b4, g4, t4,
                          wfc_ref, bfc_ref,
                          out_ref,
                          act2, act3, act4,
                          *, N, layer_dims):
    layers = (
        (x_ref, B1, b1, g1, t1, act2, True),
        (act2, B2, b2, g2, t2, act3, True),
        (act3, B3, b3, g3, t3, act4, True),
        (act4, B4, b4, g4, t4, None, False),   # conv4 feeds bn4 directly (no ReLU)
    )
    y = None
    for (src, B, b, g, t, dst, relu), (Ho, Wo, Cout) in zip(layers, layer_dims):
        y = _conv_bn_block(src, B, b, g, t, dst, N, Ho, Wo, Cout, relu)

    # ---- fc1 as ONE matmul: (N, Ho4*Wo4*C4) @ (K, Epad) + bias.  The fc weight is
    # host-permuted to the kernel's (h, w, c) flatten order and E is padded to a
    # lane-aligned width so the output store is unmasked.
    Ho4, Wo4, C4 = layer_dims[-1]
    if Ho4 == 1:
        flat = y                                     # already (N, Wo4*C4), n-ordered
    else:
        # Generic path (e.g. 128x128 inputs): regroup rows (ho, n) -> (n, h, w, c).
        per_n = []
        for n in range(N):
            per_n.append(jnp.concatenate(
                [y[ho * N + n:ho * N + n + 1, :] for ho in range(Ho4)], axis=1))
        flat = jnp.concatenate(per_n, axis=0)        # (N, Ho4*Wo4*C4)
    out = jnp.dot(flat.astype(MATMUL_DTYPE), wfc_ref[...],
                  preferred_element_type=jnp.float32) + bfc_ref[...]
    out_ref[...] = out.astype(out_ref.dtype)


# ---------------------------------------------------------------------------
# Host-side (one-time) parameter preparation
# ---------------------------------------------------------------------------
def _banded_weights(w_oihw, W, Wo):
    """Fold the 3x3 stride-2 conv into ONE (3*W*Cin, Wo*Cout) banded matmul weight.

    B[kh*W*Cin + w*Cin + ci, wo*Cout + co] = w[co, ci, kh, kw] with kw = w + 1 - 2*wo
    (the +1 accounts for padding=1 along W), zero elsewhere.  The W-padding columns
    are NOT represented (they would only multiply zeros), keeping the activation
    layout lane-dense."""
    Cout, Cin, KH, KW = w_oihw.shape
    wk = jnp.transpose(w_oihw, (2, 3, 1, 0))          # (KH, KW, Cin, Cout)
    B = jnp.zeros((KH, W * Cin, Wo * Cout), jnp.float32)
    for wo in range(Wo):
        for kw in range(KW):
            w = 2 * wo + kw - 1                       # unpadded input column
            if 0 <= w < W:
                B = B.at[:, w * Cin:(w + 1) * Cin,
                         wo * Cout:(wo + 1) * Cout].set(wk[:, kw])
    return B.reshape(KH * W * Cin, Wo * Cout)


def _pad_parity_split(x_nhwc):
    """NHWC -> (N, 2, (H+2)//2, W*C): zero-pad H by 1, split padded rows by parity,
    flatten each row to a lane-dense (W*C) vector (no W padding)."""
    N, H, W, C = x_nhwc.shape
    assert H % 2 == 0, "H-parity-split layout assumes an even height"
    xp = jnp.pad(x_nhwc, ((0, 0), (1, 1), (0, 0), (0, 0)))
    Hh = (H + 2) // 2
    xps = jnp.stack([xp[:, 0::2], xp[:, 1::2]], axis=1)   # (N, 2, Hh, W, C)
    return xps.reshape(N, 2, Hh, W * C)


def prepare_params(params, input_shape):
    """Banded bf16 conv weights, pre-tiled f32 bias, (1, C) BN vectors, and the fc
    weight permuted from PyTorch's (c, h, w) flatten to the kernel's (h, w, c) order
    with E padded up to a multiple of 128 lanes."""
    h, w = input_shape
    layers, layer_dims = [], []
    for (wc, bc, gc, betac) in params["convs"]:
        Cout = wc.shape[0]
        Ho, Wo = (h - 1) // 2 + 1, (w - 1) // 2 + 1
        B = _banded_weights(wc, w, Wo).astype(MATMUL_DTYPE)
        b_t = jnp.tile(bc.reshape(1, -1).astype(jnp.float32), (1, Wo))   # (1, Wo*Cout)
        layers.append((B, b_t,
                       gc.reshape(1, -1).astype(jnp.float32),
                       betac.reshape(1, -1).astype(jnp.float32)))
        layer_dims.append((Ho, Wo, Cout))
        h, w = Ho, Wo
    H4, W4, C4 = layer_dims[-1]
    wf, bf = params["fc"]
    E = wf.shape[0]
    Epad = ((E + 127) // 128) * 128
    wfc = wf.reshape(E, C4, H4, W4).transpose(0, 2, 3, 1).reshape(E, -1).T  # (K, E)
    wfc = jnp.pad(wfc, ((0, 0), (0, Epad - E))).astype(MATMUL_DTYPE)
    bfc = jnp.pad(bf.reshape(1, -1), ((0, 0), (0, Epad - E))).astype(jnp.float32)
    return {"layers": layers, "fc": (wfc, bfc),
            "layer_dims": tuple(layer_dims),
            "embedding_dim": int(E), "embedding_dim_padded": int(Epad)}


# ---------------------------------------------------------------------------
# Public forward: one fused pallas_call
# ---------------------------------------------------------------------------
def encoder_cnn_forward(x_nchw, prepped):
    """Forward pass of EncoderCNN (input: NCHW float32)."""
    N = x_nchw.shape[0]
    layer_dims = prepped["layer_dims"]
    E, Epad = prepped["embedding_dim"], prepped["embedding_dim_padded"]

    # Host-side prep: NCHW->NHWC, H-pad, parity-split (one cheap pass over the input).
    # TODO(synk): at production image sizes, fold this prep into the kernel (BlockSpec
    # index_map over the raw input) and add a batch grid: batch axis "parallel" for
    # v7x's 2 TensorCores with a two-phase BN reduction, block sized to v7x's 64 MiB
    # VMEM (vs 128 MiB on v5e/v6e), weights kept VMEM-resident via constant index_maps.
    x_ps = _pad_parity_split(jnp.transpose(x_nchw, (0, 2, 3, 1)))

    # VMEM scratch for the padded, parity-split activations of layers 2..4.
    scratch_shapes = []
    for (Ho, Wo, Cout) in layer_dims[:-1]:
        assert Ho % 2 == 0, "intermediate heights must be even for the parity split"
        scratch_shapes.append(
            pltpu.VMEM((N, 2, Ho // 2 + 1, Wo * Cout), jnp.float32))

    kernel = functools.partial(_encoder_fused_kernel, N=N, layer_dims=layer_dims)
    inputs = [x_ps]
    for layer in prepped["layers"]:
        inputs.extend(layer)
    inputs.extend(prepped["fc"])

    out = pl.pallas_call(
        kernel,
        out_shape=jax.ShapeDtypeStruct((N, Epad), jnp.float32),
        scratch_shapes=scratch_shapes,
    )(*inputs)
    return out[:, :E] if Epad != E else out


# ---------------------------------------------------------------------------
# Pure-JAX reference (for correctness check)
# ---------------------------------------------------------------------------
def reference_forward(x_nchw, params, matmul_dtype=jnp.float32):
    """Pure-JAX reference.  With matmul_dtype=bf16 it mirrors the kernel's mixed
    precision exactly (bf16 MXU operands, f32 accumulation, f32 bias/ReLU/BN)."""
    prec = jax.lax.Precision.HIGHEST if matmul_dtype == jnp.float32 else None
    x = x_nchw
    for i, (w, b, gamma, beta) in enumerate(params["convs"]):
        x = jax.lax.conv_general_dilated(
            x.astype(matmul_dtype), w.astype(matmul_dtype),
            window_strides=(2, 2), padding=((1, 1), (1, 1)),
            dimension_numbers=("NCHW", "OIHW", "NCHW"),
            preferred_element_type=jnp.float32,
            precision=prec,
        ) + b.reshape(1, -1, 1, 1)
        if i < 3:
            x = jnp.maximum(x, 0.0)
        m = jnp.mean(x, axis=(0, 2, 3), keepdims=True)
        v = jnp.mean((x - m) ** 2, axis=(0, 2, 3), keepdims=True)
        x = gamma.reshape(1, -1, 1, 1) * (x - m) * jax.lax.rsqrt(v + EPS) \
            + beta.reshape(1, -1, 1, 1)
    flat = x.reshape(x.shape[0], -1)
    wf, bf = params["fc"]
    return jnp.dot(flat.astype(matmul_dtype), wf.T.astype(matmul_dtype),
                   preferred_element_type=jnp.float32) + bf


# ---------------------------------------------------------------------------
# Deterministic parameter init (shapes from EncoderCNN.__init__)
# ---------------------------------------------------------------------------
def init_params(key, in_channels, embedding_dim, input_shape):
    chans = [in_channels, 32, 64, 128, 256]
    convs = []
    for li in range(4):
        key, kw_, kb_ = jax.random.split(key, 3)
        cin, cout = chans[li], chans[li + 1]
        w = jax.random.normal(kw_, (cout, cin, 3, 3), jnp.float32) * 0.1
        b = jax.random.normal(kb_, (cout,), jnp.float32) * 0.1
        gamma = jnp.ones((cout,), jnp.float32)    # nn.BatchNorm2d default init
        beta = jnp.zeros((cout,), jnp.float32)
        convs.append((w, b, gamma, beta))
    h, w_ = input_shape
    for _ in range(4):
        h = (h - 1) // 2 + 1
        w_ = (w_ - 1) // 2 + 1
    fc_in = 256 * h * w_
    key, kw_, kb_ = jax.random.split(key, 3)
    wf = jax.random.normal(kw_, (embedding_dim, fc_in), jnp.float32) * 0.05
    bf = jax.random.normal(kb_, (embedding_dim,), jnp.float32) * 0.05
    return {"convs": convs, "fc": (wf, bf)}


if __name__ == "__main__":
    key = jax.random.PRNGKey(0)
    N, C_in, H, W = 2, 4, 16, 16
    embedding_dim = 32

    key, kx = jax.random.split(key)
    x = jax.random.normal(kx, (N, C_in, H, W), jnp.float32)
    params = init_params(key, C_in, embedding_dim, (H, W))
    prepped = prepare_params(params, (H, W))

    out = jax.block_until_ready(encoder_cnn_forward(x, prepped))
    assert out.shape == (N, embedding_dim), out.shape
    assert bool(jnp.all(jnp.isfinite(out)))

    # Matched-precision reference (same bf16 operands / f32 accumulation as the
    # kernel), so the fusion/layout logic is validated tightly despite bf16 matmuls.
    ref = jax.block_until_ready(reference_forward(x, params, MATMUL_DTYPE))
    assert jnp.allclose(out, ref, atol=5e-3, rtol=5e-3), \
        float(jnp.max(jnp.abs(out - ref)))

    print("KERNEL_OK")
</pallas_src>

<mosaic_0001>
module attributes {stable_mosaic.version = 11 : i64} {
  func.func @_encoder_fused_kernel(%arg0: memref<2x2x9x64xf32, #tpu.memory_space<vmem>>, %arg1: memref<192x256xbf16, #tpu.memory_space<vmem>>, %arg2: memref<1x256xf32, #tpu.memory_space<vmem>>, %arg3: memref<1x32xf32, #tpu.memory_space<vmem>>, %arg4: memref<1x32xf32, #tpu.memory_space<vmem>>, %arg5: memref<768x256xbf16, #tpu.memory_space<vmem>>, %arg6: memref<1x256xf32, #tpu.memory_space<vmem>>, %arg7: memref<1x64xf32, #tpu.memory_space<vmem>>, %arg8: memref<1x64xf32, #tpu.memory_space<vmem>>, %arg9: memref<768x256xbf16, #tpu.memory_space<vmem>>, %arg10: memref<1x256xf32, #tpu.memory_space<vmem>>, %arg11: memref<1x128xf32, #tpu.memory_space<vmem>>, %arg12: memref<1x128xf32, #tpu.memory_space<vmem>>, %arg13: memref<768x256xbf16, #tpu.memory_space<vmem>>, %arg14: memref<1x256xf32, #tpu.memory_space<vmem>>, %arg15: memref<1x256xf32, #tpu.memory_space<vmem>>, %arg16: memref<1x256xf32, #tpu.memory_space<vmem>>, %arg17: memref<256x128xbf16, #tpu.memory_space<vmem>>, %arg18: memref<1x128xf32, #tpu.memory_space<vmem>>, %arg19: memref<2x128xf32, #tpu.memory_space<vmem>>, %arg20: memref<2x2x5x256xf32, #tpu.memory_space<vmem>>, %arg21: memref<2x2x3x256xf32, #tpu.memory_space<vmem>>, %arg22: memref<2x2x2x256xf32, #tpu.memory_space<vmem>>) attributes {dimension_semantics = [], scalar_prefetch = 0 : i64, scratch_operands = 3 : i64, tpu.core_type = #tpu.core_type<tc>} {
    %c0 = arith.constant 0 : index
    %c0_0 = arith.constant 0 : index
    %c0_1 = arith.constant 0 : index
    %c0_2 = arith.constant 0 : index
    %0 = vector.load %arg0[%c0, %c0_0, %c0_1, %c0_2] : memref<2x2x9x64xf32, #tpu.memory_space<vmem>>, vector<2x1x1x64xf32>
    %1 = vector.shape_cast %0 : vector<2x1x1x64xf32> to vector<2x64xf32>
    %c0_3 = arith.constant 0 : index
    %c1 = arith.constant 1 : index
    %c0_4 = arith.constant 0 : index
    %c0_5 = arith.constant 0 : index
    %2 = vector.load %arg0[%c0_3, %c1, %c0_4, %c0_5] : memref<2x2x9x64xf32, #tpu.memory_space<vmem>>, vector<2x1x1x64xf32>
    %3 = vector.shape_cast %2 : vector<2x1x1x64xf32> to vector<2x64xf32>
    %c0_6 = arith.constant 0 : index
    %c0_7 = arith.constant 0 : index
    %c1_8 = arith.constant 1 : index
    %c0_9 = arith.constant 0 : index
    %4 = vector.load %arg0[%c0_6, %c0_7, %c1_8, %c0_9] : memref<2x2x9x64xf32, #tpu.memory_space<vmem>>, vector<2x1x1x64xf32>
    %5 = vector.shape_cast %4 : vector<2x1x1x64xf32> to vector<2x64xf32>
    %6 = tpu.concatenate %1, %3, %5 in 1 : vector<2x64xf32>, vector<2x64xf32>, vector<2x64xf32> -> vector<2x192xf32>
    %c0_10 = arith.constant 0 : index
    %c0_11 = arith.constant 0 : index
    %c1_12 = arith.constant 1 : index
    %c0_13 = arith.constant 0 : index
    %7 = vector.load %arg0[%c0_10, %c0_11, %c1_12, %c0_13] : memref<2x2x9x64xf32, #tpu.memory_space<vmem>>, vector<2x1x1x64xf32>
    %8 = vector.shape_cast %7 : vector<2x1x1x64xf32> to vector<2x64xf32>
    %c0_14 = arith.constant 0 : index
    %c1_15 = arith.constant 1 : index
    %c1_16 = arith.constant 1 : index
    %c0_17 = arith.constant 0 : index
    %9 = vector.load %arg0[%c0_14, %c1_15, %c1_16, %c0_17] : memref<2x2x9x64xf32, #tpu.memory_space<vmem>>, vector<2x1x1x64xf32>
    %10 = vector.shape_cast %9 : vector<2x1x1x64xf32> to vector<2x64xf32>
    %c0_18 = arith.constant 0 : index
    %c0_19 = arith.constant 0 : index
    %c2 = arith.constant 2 : index
    %c0_20 = arith.constant 0 : index
    %11 = vector.load %arg0[%c0_18, %c0_19, %c2, %c0_20] : memref<2x2x9x64xf32, #tpu.memory_space<vmem>>, vector<2x1x1x64xf32>
    %12 = vector.shape_cast %11 : vector<2x1x1x64xf32> to vector<2x64xf32>
    %13 = tpu.concatenate %8, %10, %12 in 1 : vector<2x64xf32>, vector<2x64xf32>, vector<2x64xf32> -> vector<2x192xf32>
    %c0_21 = arith.constant 0 : index
    %c0_22 = arith.constant 0 : index
    %c2_23 = arith.constant 2 : index
    %c0_24 = arith.constant 0 : index
    %14 = vector.load %arg0[%c0_21, %c0_22, %c2_23, %c0_24] : memref<2x2x9x64xf32, #tpu.memory_space<vmem>>, vector<2x1x1x64xf32>
    %15 = vector.shape_cast %14 : vector<2x1x1x64xf32> to vector<2x64xf32>
    %c0_25 = arith.constant 0 : index
    %c1_26 = arith.constant 1 : index
    %c2_27 = arith.constant 2 : index
    %c0_28 = arith.constant 0 : index
    %16 = vector.load %arg0[%c0_25, %c1_26, %c2_27, %c0_28] : memref<2x2x9x64xf32, #tpu.memory_space<vmem>>, vector<2x1x1x64xf32>
    %17 = vector.shape_cast %16 : vector<2x1x1x64xf32> to vector<2x64xf32>
    %c0_29 = arith.constant 0 : index
    %c0_30 = arith.constant 0 : index
    %c3 = arith.constant 3 : index
    %c0_31 = arith.constant 0 : index
    %18 = vector.load %arg0[%c0_29, %c0_30, %c3, %c0_31] : memref<2x2x9x64xf32, #tpu.memory_space<vmem>>, vector<2x1x1x64xf32>
    %19 = vector.shape_cast %18 : vector<2x1x1x64xf32> to vector<2x64xf32>
    %20 = tpu.concatenate %15, %17, %19 in 1 : vector<2x64xf32>, vector<2x64xf32>, vector<2x64xf32> -> vector<2x192xf32>
    %c0_32 = arith.constant 0 : index
    %c0_33 = arith.constant 0 : index
    %c3_34 = arith.constant 3 : index
    %c0_35 = arith.constant 0 : index
    %21 = vector.load %arg0[%c0_32, %c0_33, %c3_34, %c0_35] : memref<2x2x9x64xf32, #tpu.memory_space<vmem>>, vector<2x1x1x64xf32>
    %22 = vector.shape_cast %21 : vector<2x1x1x64xf32> to vector<2x64xf32>
    %c0_36 = arith.constant 0 : index
    %c1_37 = arith.constant 1 : index
    %c3_38 = arith.constant 3 : index
    %c0_39 = arith.constant 0 : index
    %23 = vector.load %arg0[%c0_36, %c1_37, %c3_38, %c0_39] : memref<2x2x9x64xf32, #tpu.memory_space<vmem>>, vector<2x1x1x64xf32>
    %24 = vector.shape_cast %23 : vector<2x1x1x64xf32> to vector<2x64xf32>
    %c0_40 = arith.constant 0 : index
    %c0_41 = arith.constant 0 : index
    %c4 = arith.constant 4 : index
    %c0_42 = arith.constant 0 : index
    %25 = vector.load %arg0[%c0_40, %c0_41, %c4, %c0_42] : memref<2x2x9x64xf32, #tpu.memory_space<vmem>>, vector<2x1x1x64xf32>
    %26 = vector.shape_cast %25 : vector<2x1x1x64xf32> to vector<2x64xf32>
    %27 = tpu.concatenate %22, %24, %26 in 1 : vector<2x64xf32>, vector<2x64xf32>, vector<2x64xf32> -> vector<2x192xf32>
    %c0_43 = arith.constant 0 : index
    %c0_44 = arith.constant 0 : index
    %c4_45 = arith.constant 4 : index
    %c0_46 = arith.constant 0 : index
    %28 = vector.load %arg0[%c0_43, %c0_44, %c4_45, %c0_46] : memref<2x2x9x64xf32, #tpu.memory_space<vmem>>, vector<2x1x1x64xf32>
    %29 = vector.shape_cast %28 : vector<2x1x1x64xf32> to vector<2x64xf32>
    %c0_47 = arith.constant 0 : index
    %c1_48 = arith.constant 1 : index
    %c4_49 = arith.constant 4 : index
    %c0_50 = arith.constant 0 : index
    %30 = vector.load %arg0[%c0_47, %c1_48, %c4_49, %c0_50] : memref<2x2x9x64xf32, #tpu.memory_space<vmem>>, vector<2x1x1x64xf32>
    %31 = vector.shape_cast %30 : vector<2x1x1x64xf32> to vector<2x64xf32>
    %c0_51 = arith.constant 0 : index
    %c0_52 = arith.constant 0 : index
    %c5 = arith.constant 5 : index
    %c0_53 = arith.constant 0 : index
    %32 = vector.load %arg0[%c0_51, %c0_52, %c5, %c0_53] : memref<2x2x9x64xf32, #tpu.memory_space<vmem>>, vector<2x1x1x64xf32>
    %33 = vector.shape_cast %32 : vector<2x1x1x64xf32> to vector<2x64xf32>
    %34 = tpu.concatenate %29, %31, %33 in 1 : vector<2x64xf32>, vector<2x64xf32>, vector<2x64xf32> -> vector<2x192xf32>
    %c0_54 = arith.constant 0 : index
    %c0_55 = arith.constant 0 : index
    %c5_56 = arith.constant 5 : index
    %c0_57 = arith.constant 0 : index
    %35 = vector.load %arg0[%c0_54, %c0_55, %c5_56, %c0_57] : memref<2x2x9x64xf32, #tpu.memory_space<vmem>>, vector<2x1x1x64xf32>
    %36 = vector.shape_cast %35 : vector<2x1x1x64xf32> to vector<2x64xf32>
    %c0_58 = arith.constant 0 : index
    %c1_59 = arith.constant 1 : index
    %c5_60 = arith.constant 5 : index
    %c0_61 = arith.constant 0 : index
    %37 = vector.load %arg0[%c0_58, %c1_59, %c5_60, %c0_61] : memref<2x2x9x64xf32, #tpu.memory_space<vmem>>, vector<2x1x1x64xf32>
    %38 = vector.shape_cast %37 : vector<2x1x1x64xf32> to vector<2x64xf32>
    %c0_62 = arith.constant 0 : index
    %c0_63 = arith.constant 0 : index
    %c6 = arith.constant 6 : index
    %c0_64 = arith.constant 0 : index
    %39 = vector.load %arg0[%c0_62, %c0_63, %c6, %c0_64] : memref<2x2x9x64xf32, #tpu.memory_space<vmem>>, vector<2x1x1x64xf32>
    %40 = vector.shape_cast %39 : vector<2x1x1x64xf32> to vector<2x64xf32>
    %41 = tpu.concatenate %36, %38, %40 in 1 : vector<2x64xf32>, vector<2x64xf32>, vector<2x64xf32> -> vector<2x192xf32>
    %c0_65 = arith.constant 0 : index
    %c0_66 = arith.constant 0 : index
    %c6_67 = arith.constant 6 : index
    %c0_68 = arith.constant 0 : index
    %42 = vector.load %arg0[%c0_65, %c0_66, %c6_67, %c0_68] : memref<2x2x9x64xf32, #tpu.memory_space<vmem>>, vector<2x1x1x64xf32>
    %43 = vector.shape_cast %42 : vector<2x1x1x64xf32> to vector<2x64xf32>
    %c0_69 = arith.constant 0 : index
    %c1_70 = arith.constant 1 : index
    %c6_71 = arith.constant 6 : index
    %c0_72 = arith.constant 0 : index
    %44 = vector.load %arg0[%c0_69, %c1_70, %c6_71, %c0_72] : memref<2x2x9x64xf32, #tpu.memory_space<vmem>>, vector<2x1x1x64xf32>
    %45 = vector.shape_cast %44 : vector<2x1x1x64xf32> to vector<2x64xf32>
    %c0_73 = arith.constant 0 : index
    %c0_74 = arith.constant 0 : index
    %c7 = arith.constant 7 : index
    %c0_75 = arith.constant 0 : index
    %46 = vector.load %arg0[%c0_73, %c0_74, %c7, %c0_75] : memref<2x2x9x64xf32, #tpu.memory_space<vmem>>, vector<2x1x1x64xf32>
    %47 = vector.shape_cast %46 : vector<2x1x1x64xf32> to vector<2x64xf32>
    %48 = tpu.concatenate %43, %45, %47 in 1 : vector<2x64xf32>, vector<2x64xf32>, vector<2x64xf32> -> vector<2x192xf32>
    %c0_76 = arith.constant 0 : index
    %c0_77 = arith.constant 0 : index
    %c7_78 = arith.constant 7 : index
    %c0_79 = arith.constant 0 : index
    %49 = vector.load %arg0[%c0_76, %c0_77, %c7_78, %c0_79] : memref<2x2x9x64xf32, #tpu.memory_space<vmem>>, vector<2x1x1x64xf32>
    %50 = vector.shape_cast %49 : vector<2x1x1x64xf32> to vector<2x64xf32>
    %c0_80 = arith.constant 0 : index
    %c1_81 = arith.constant 1 : index
    %c7_82 = arith.constant 7 : index
    %c0_83 = arith.constant 0 : index
    %51 = vector.load %arg0[%c0_80, %c1_81, %c7_82, %c0_83] : memref<2x2x9x64xf32, #tpu.memory_space<vmem>>, vector<2x1x1x64xf32>
    %52 = vector.shape_cast %51 : vector<2x1x1x64xf32> to vector<2x64xf32>
    %c0_84 = arith.constant 0 : index
    %c0_85 = arith.constant 0 : index
    %c8 = arith.constant 8 : index
    %c0_86 = arith.constant 0 : index
    %53 = vector.load %arg0[%c0_84, %c0_85, %c8, %c0_86] : memref<2x2x9x64xf32, #tpu.memory_space<vmem>>, vector<2x1x1x64xf32>
    %54 = vector.shape_cast %53 : vector<2x1x1x64xf32> to vector<2x64xf32>
    %55 = tpu.concatenate %50, %52, %54 in 1 : vector<2x64xf32>, vector<2x64xf32>, vector<2x64xf32> -> vector<2x192xf32>
    %56 = tpu.concatenate %6, %13, %20, %27, %34, %41, %48, %55 in 0 : vector<2x192xf32>, vector<2x192xf32>, vector<2x192xf32>, vector<2x192xf32>, vector<2x192xf32>, vector<2x192xf32>, vector<2x192xf32>, vector<2x192xf32> -> vector<16x192xf32>
    %57 = arith.truncf %56 : vector<16x192xf32> to vector<16x192xbf16>
    %c0_87 = arith.constant 0 : index
    %c0_88 = arith.constant 0 : index
    %58 = vector.load %arg1[%c0_87, %c0_88] : memref<192x256xbf16, #tpu.memory_space<vmem>>, vector<192x256xbf16>
    %cst = arith.constant dense<0.000000e+00> : vector<16x256xf32>
    %59 = tpu.matmul %57, %58, %cst {dimension_numbers = #tpu.dot_dimension_numbers<[1], [0], [0], [1], [0, 0, 1, 1], [], []>} : vector<16x192xbf16>, vector<192x256xbf16>, vector<16x256xf32> -> vector<16x256xf32>
    %c0_89 = arith.constant 0 : index
    %c0_90 = arith.constant 0 : index
    %60 = vector.load %arg2[%c0_89, %c0_90] : memref<1x256xf32, #tpu.memory_space<vmem>>, vector<1x256xf32>
    %61 = vector.broadcast %60 : vector<1x256xf32> to vector<16x256xf32>
    %62 = arith.addf %59, %61 : vector<16x256xf32>
    %cst_91 = arith.constant 0.000000e+00 : f32
    %63 = vector.broadcast %cst_91 : f32 to vector<16x256xf32>
    %64 = arith.maximumf %62, %63 : vector<16x256xf32>
    %cst_92 = arith.constant dense<0.000000e+00> : vector<256xf32>
    %65 = vector.multi_reduction <add>, %64, %cst_92 [0] : vector<16x256xf32> to vector<256xf32>
    %66 = vector.shape_cast %65 : vector<256xf32> to vector<1x256xf32>
    %67 = arith.mulf %64, %64 : vector<16x256xf32>
    %cst_93 = arith.constant dense<0.000000e+00> : vector<256xf32>
    %68 = vector.multi_reduction <add>, %67, %cst_93 [0] : vector<16x256xf32> to vector<256xf32>
    %69 = vector.shape_cast %68 : vector<256xf32> to vector<1x256xf32>
    %70 = vector.extract_strided_slice %66 {offsets = [0, 0], sizes = [1, 32], strides = [1, 1]} : vector<1x256xf32> to vector<1x32xf32>
    %71 = vector.extract_strided_slice %69 {offsets = [0, 0], sizes = [1, 32], strides = [1, 1]} : vector<1x256xf32> to vector<1x32xf32>
    %72 = vector.extract_strided_slice %66 {offsets = [0, 32], sizes = [1, 32], strides = [1, 1]} : vector<1x256xf32> to vector<1x32xf32>
    %73 = arith.addf %70, %72 : vector<1x32xf32>
    %74 = vector.extract_strided_slice %69 {offsets = [0, 32], sizes = [1, 32], strides = [1, 1]} : vector<1x256xf32> to vector<1x32xf32>
    %75 = arith.addf %71, %74 : vector<1x32xf32>
    %76 = vector.extract_strided_slice %66 {offsets = [0, 64], sizes = [1, 32], strides = [1, 1]} : vector<1x256xf32> to vector<1x32xf32>
    %77 = arith.addf %73, %76 : vector<1x32xf32>
    %78 = vector.extract_strided_slice %69 {offsets = [0, 64], sizes = [1, 32], strides = [1, 1]} : vector<1x256xf32> to vector<1x32xf32>
    %79 = arith.addf %75, %78 : vector<1x32xf32>
    %80 = vector.extract_strided_slice %66 {offsets = [0, 96], sizes = [1, 32], strides = [1, 1]} : vector<1x256xf32> to vector<1x32xf32>
    %81 = arith.addf %77, %80 : vector<1x32xf32>
    %82 = vector.extract_strided_slice %69 {offsets = [0, 96], sizes = [1, 32], strides = [1, 1]} : vector<1x256xf32> to vector<1x32xf32>
    %83 = arith.addf %79, %82 : vector<1x32xf32>
    %84 = vector.extract_strided_slice %66 {offsets = [0, 128], sizes = [1, 32], strides = [1, 1]} : vector<1x256xf32> to vector<1x32xf32>
    %85 = arith.addf %81, %84 : vector<1x32xf32>
    %86 = vector.extract_strided_slice %69 {offsets = [0, 128], sizes = [1, 32], strides = [1, 1]} : vector<1x256xf32> to vector<1x32xf32>
    %87 = arith.addf %83, %86 : vector<1x32xf32>
    %88 = vector.extract_strided_slice %66 {offsets = [0, 160], sizes = [1, 32], strides = [1, 1]} : vector<1x256xf32> to vector<1x32xf32>
    %89 = arith.addf %85, %88 : vector<1x32xf32>
    %90 = vector.extract_strided_slice %69 {offsets = [0, 160], sizes = [1, 32], strides = [1, 1]} : vector<1x256xf32> to vector<1x32xf32>
    %91 = arith.addf %87, %90 : vector<1x32xf32>
    %92 = vector.extract_strided_slice %66 {offsets = [0, 192], sizes = [1, 32], strides = [1, 1]} : vector<1x256xf32> to vector<1x32xf32>
    %93 = arith.addf %89, %92 : vector<1x32xf32>
    %94 = vector.extract_strided_slice %69 {offsets = [0, 192], sizes = [1, 32], strides = [1, 1]} : vector<1x256xf32> to vector<1x32xf32>
    %95 = arith.addf %91, %94 : vector<1x32xf32>
    %96 = vector.extract_strided_slice %66 {offsets = [0, 224], sizes = [1, 32], strides = [1, 1]} : vector<1x256xf32> to vector<1x32xf32>
    %97 = arith.addf %93, %96 : vector<1x32xf32>
    %98 = vector.extract_strided_slice %69 {offsets = [0, 224], sizes = [1, 32], strides = [1, 1]} : vector<1x256xf32> to vector<1x32xf32>
    %99 = arith.addf %95, %98 : vector<1x32xf32>
    %cst_94 = arith.constant 1.280000e+02 : f32
    %100 = vector.broadcast %cst_94 : f32 to vector<1x32xf32>
    %101 = arith.divf %97, %100 : vector<1x32xf32>
    %cst_95 = arith.constant 1.280000e+02 : f32
    %102 = vector.broadcast %cst_95 : f32 to vector<1x32xf32>
    %103 = arith.divf %99, %102 : vector<1x32xf32>
    %104 = arith.mulf %101, %101 : vector<1x32xf32>
    %105 = arith.subf %103, %104 : vector<1x32xf32>
    %cst_96 = arith.constant 9.99999974E-6 : f32
    %106 = vector.broadcast %cst_96 : f32 to vector<1x32xf32>
    %107 = arith.addf %105, %106 : vector<1x32xf32>
    %108 = math.rsqrt %107 : vector<1x32xf32>
    %c0_97 = arith.constant 0 : index
    %c0_98 = arith.constant 0 : index
    %109 = vector.load %arg3[%c0_97, %c0_98] : memref<1x32xf32, #tpu.memory_space<vmem>>, vector<1x32xf32>
    %110 = arith.mulf %109, %108 : vector<1x32xf32>
    %c0_99 = arith.constant 0 : index
    %c0_100 = arith.constant 0 : index
    %111 = vector.load %arg4[%c0_99, %c0_100] : memref<1x32xf32, #tpu.memory_space<vmem>>, vector<1x32xf32>
    %112 = arith.mulf %101, %110 : vector<1x32xf32>
    %113 = arith.subf %111, %112 : vector<1x32xf32>
    %114 = tpu.concatenate %110, %110, %110, %110, %110, %110, %110, %110 in 1 : vector<1x32xf32>, vector<1x32xf32>, vector<1x32xf32>, vector<1x32xf32>, vector<1x32xf32>, vector<1x32xf32>, vector<1x32xf32>, vector<1x32xf32> -> vector<1x256xf32>
    %115 = tpu.concatenate %113, %113, %113, %113, %113, %113, %113, %113 in 1 : vector<1x32xf32>, vector<1x32xf32>, vector<1x32xf32>, vector<1x32xf32>, vector<1x32xf32>, vector<1x32xf32>, vector<1x32xf32>, vector<1x32xf32> -> vector<1x256xf32>
    %116 = vector.broadcast %114 : vector<1x256xf32> to vector<16x256xf32>
    %117 = arith.mulf %64, %116 : vector<16x256xf32>
    %118 = vector.broadcast %115 : vector<1x256xf32> to vector<16x256xf32>
    %119 = arith.addf %117, %118 : vector<16x256xf32>
    %120 = vector.extract_strided_slice %119 {offsets = [0, 0], sizes = [2, 256], strides = [1, 1]} : vector<16x256xf32> to vector<2x256xf32>
    %c0_101 = arith.constant 0 : index
    %c1_102 = arith.constant 1 : index
    %c0_103 = arith.constant 0 : index
    %c0_104 = arith.constant 0 : index
    %121 = vector.load %arg20[%c0_101, %c1_102, %c0_103, %c0_104] : memref<2x2x5x256xf32, #tpu.memory_space<vmem>>, vector<2x1x1x256xf32>
    %122 = vector.shape_cast %121 : vector<2x1x1x256xf32> to vector<2x256xf32>
    %123 = vector.shape_cast %120 : vector<2x256xf32> to vector<2x1x1x256xf32>
    tpu.vector_store %arg20[%c0_101, %c1_102, %c0_103, %c0_104], %123 {strides = array<i32>} : memref<2x2x5x256xf32, #tpu.memory_space<vmem>>, vector<2x1x1x256xf32>,
    %124 = vector.extract_strided_slice %119 {offsets = [2, 0], sizes = [2, 256], strides = [1, 1]} : vector<16x256xf32> to vector<2x256xf32>
    %c0_105 = arith.constant 0 : index
    %c0_106 = arith.constant 0 : index
    %c1_107 = arith.constant 1 : index
    %c0_108 = arith.constant 0 : index
    %125 = vector.load %arg20[%c0_105, %c0_106, %c1_107, %c0_108] : memref<2x2x5x256xf32, #tpu.memory_space<vmem>>, vector<2x1x1x256xf32>
    %126 = vector.shape_cast %125 : vector<2x1x1x256xf32> to vector<2x256xf32>
    %127 = vector.shape_cast %124 : vector<2x256xf32> to vector<2x1x1x256xf32>
    tpu.vector_store %arg20[%c0_105, %c0_106, %c1_107, %c0_108], %127 {strides = array<i32>} : memref<2x2x5x256xf32, #tpu.memory_space<vmem>>, vector<2x1x1x256xf32>,
    %128 = vector.extract_strided_slice %119 {offsets = [4, 0], sizes = [2, 256], strides = [1, 1]} : vector<16x256xf32> to vector<2x256xf32>
    %c0_109 = arith.constant 0 : index
    %c1_110 = arith.constant 1 : index
    %c1_111 = arith.constant 1 : index
    %c0_112 = arith.constant 0 : index
    %129 = vector.load %arg20[%c0_109, %c1_110, %c1_111, %c0_112] : memref<2x2x5x256xf32, #tpu.memory_space<vmem>>, vector<2x1x1x256xf32>
    %130 = vector.shape_cast %129 : vector<2x1x1x256xf32> to vector<2x256xf32>
    %131 = vector.shape_cast %128 : vector<2x256xf32> to vector<2x1x1x256xf32>
    tpu.vector_store %arg20[%c0_109, %c1_110, %c1_111, %c0_112], %131 {strides = array<i32>} : memref<2x2x5x256xf32, #tpu.memory_space<vmem>>, vector<2x1x1x256xf32>,
    %132 = vector.extract_strided_slice %119 {offsets = [6, 0], sizes = [2, 256], strides = [1, 1]} : vector<16x256xf32> to vector<2x256xf32>
    %c0_113 = arith.constant 0 : index
    %c0_114 = arith.constant 0 : index
    %c2_115 = arith.constant 2 : index
    %c0_116 = arith.constant 0 : index
    %133 = vector.load %arg20[%c0_113, %c0_114, %c2_115, %c0_116] : memref<2x2x5x256xf32, #tpu.memory_space<vmem>>, vector<2x1x1x256xf32>
    %134 = vector.shape_cast %133 : vector<2x1x1x256xf32> to vector<2x256xf32>
    %135 = vector.shape_cast %132 : vector<2x256xf32> to vector<2x1x1x256xf32>
    tpu.vector_store %arg20[%c0_113, %c0_114, %c2_115, %c0_116], %135 {strides = array<i32>} : memref<2x2x5x256xf32, #tpu.memory_space<vmem>>, vector<2x1x1x256xf32>,
    %136 = vector.extract_strided_slice %119 {offsets = [8, 0], sizes = [2, 256], strides = [1, 1]} : vector<16x256xf32> to vector<2x256xf32>
    %c0_117 = arith.constant 0 : index
    %c1_118 = arith.constant 1 : index
    %c2_119 = arith.constant 2 : index
    %c0_120 = arith.constant 0 : index
    %137 = vector.load %arg20[%c0_117, %c1_118, %c2_119, %c0_120] : memref<2x2x5x256xf32, #tpu.memory_space<vmem>>, vector<2x1x1x256xf32>
    %138 = vector.shape_cast %137 : vector<2x1x1x256xf32> to vector<2x256xf32>
    %139 = vector.shape_cast %136 : vector<2x256xf32> to vector<2x1x1x256xf32>
    tpu.vector_store %arg20[%c0_117, %c1_118, %c2_119, %c0_120], %139 {strides = array<i32>} : memref<2x2x5x256xf32, #tpu.memory_space<vmem>>, vector<2x1x1x256xf32>,
    %140 = vector.extract_strided_slice %119 {offsets = [10, 0], sizes = [2, 256], strides = [1, 1]} : vector<16x256xf32> to vector<2x256xf32>
    %c0_121 = arith.constant 0 : index
    %c0_122 = arith.constant 0 : index
    %c3_123 = arith.constant 3 : index
    %c0_124 = arith.constant 0 : index
    %141 = vector.load %arg20[%c0_121, %c0_122, %c3_123, %c0_124] : memref<2x2x5x256xf32, #tpu.memory_space<vmem>>, vector<2x1x1x256xf32>
    %142 = vector.shape_cast %141 : vector<2x1x1x256xf32> to vector<2x256xf32>
    %143 = vector.shape_cast %140 : vector<2x256xf32> to vector<2x1x1x256xf32>
    tpu.vector_store %arg20[%c0_121, %c0_122, %c3_123, %c0_124], %143 {strides = array<i32>} : memref<2x2x5x256xf32, #tpu.memory_space<vmem>>, vector<2x1x1x256xf32>,
    %144 = vector.extract_strided_slice %119 {offsets = [12, 0], sizes = [2, 256], strides = [1, 1]} : vector<16x256xf32> to vector<2x256xf32>
    %c0_125 = arith.constant 0 : index
    %c1_126 = arith.constant 1 : index
    %c3_127 = arith.constant 3 : index
    %c0_128 = arith.constant 0 : index
    %145 = vector.load %arg20[%c0_125, %c1_126, %c3_127, %c0_128] : memref<2x2x5x256xf32, #tpu.memory_space<vmem>>, vector<2x1x1x256xf32>
    %146 = vector.shape_cast %145 : vector<2x1x1x256xf32> to vector<2x256xf32>
    %147 = vector.shape_cast %144 : vector<2x256xf32> to vector<2x1x1x256xf32>
    tpu.vector_store %arg20[%c0_125, %c1_126, %c3_127, %c0_128], %147 {strides = array<i32>} : memref<2x2x5x256xf32, #tpu.memory_space<vmem>>, vector<2x1x1x256xf32>,
    %148 = vector.extract_strided_slice %119 {offsets = [14, 0], sizes = [2, 256], strides = [1, 1]} : vector<16x256xf32> to vector<2x256xf32>
    %c0_129 = arith.constant 0 : index
    %c0_130 = arith.constant 0 : index
    %c4_131 = arith.constant 4 : index
    %c0_132 = arith.constant 0 : index
    %149 = vector.load %arg20[%c0_129, %c0_130, %c4_131, %c0_132] : memref<2x2x5x256xf32, #tpu.memory_space<vmem>>, vector<2x1x1x256xf32>
    %150 = vector.shape_cast %149 : vector<2x1x1x256xf32> to vector<2x256xf32>
    %151 = vector.shape_cast %148 : vector<2x256xf32> to vector<2x1x1x256xf32>
    tpu.vector_store %arg20[%c0_129, %c0_130, %c4_131, %c0_132], %151 {strides = array<i32>} : memref<2x2x5x256xf32, #tpu.memory_space<vmem>>, vector<2x1x1x256xf32>,
    %cst_133 = arith.constant 0.000000e+00 : f32
    %152 = vector.broadcast %cst_133 : f32 to vector<2x256xf32>
    %c0_134 = arith.constant 0 : index
    %c0_135 = arith.constant 0 : index
    %c0_136 = arith.constant 0 : index
    %c0_137 = arith.constant 0 : index
    %153 = vector.load %arg20[%c0_134, %c0_135, %c0_136, %c0_137] : memref<2x2x5x256xf32, #tpu.memory_space<vmem>>, vector<2x1x1x256xf32>
    %154 = vector.shape_cast %153 : vector<2x1x1x256xf32> to vector<2x256xf32>
    %155 = vector.shape_cast %152 : vector<2x256xf32> to vector<2x1x1x256xf32>
    tpu.vector_store %arg20[%c0_134, %c0_135, %c0_136, %c0_137], %155 {strides = array<i32>} : memref<2x2x5x256xf32, #tpu.memory_space<vmem>>, vector<2x1x1x256xf32>,
    %c0_138 = arith.constant 0 : index
    %c1_139 = arith.constant 1 : index
    %c4_140 = arith.constant 4 : index
    %c0_141 = arith.constant 0 : index
    %156 = vector.load %arg20[%c0_138, %c1_139, %c4_140, %c0_141] : memref<2x2x5x256xf32, #tpu.memory_space<vmem>>, vector<2x1x1x256xf32>
    %157 = vector.shape_cast %156 : vector<2x1x1x256xf32> to vector<2x256xf32>
    %158 = vector.shape_cast %152 : vector<2x256xf32> to vector<2x1x1x256xf32>
    tpu.vector_store %arg20[%c0_138, %c1_139, %c4_140, %c0_141], %158 {strides = array<i32>} : memref<2x2x5x256xf32, #tpu.memory_space<vmem>>, vector<2x1x1x256xf32>,
    %c0_142 = arith.constant 0 : index
    %c0_143 = arith.constant 0 : index
    %c0_144 = arith.constant 0 : index
    %c0_145 = arith.constant 0 : index
    %159 = vector.load %arg20[%c0_142, %c0_143, %c0_144, %c0_145] : memref<2x2x5x256xf32, #tpu.memory_space<vmem>>, vector<2x1x1x256xf32>
    %160 = vector.shape_cast %159 : vector<2x1x1x256xf32> to vector<2x256xf32>
    %c0_146 = arith.constant 0 : index
    %c1_147 = arith.constant 1 : index
    %c0_148 = arith.constant 0 : index
    %c0_149 = arith.constant 0 : index
    %161 = vector.load %arg20[%c0_146, %c1_147, %c0_148, %c0_149] : memref<2x2x5x256xf32, #tpu.memory_space<vmem>>, vector<2x1x1x256xf32>
    %162 = vector.shape_cast %161 : vector<2x1x1x256xf32> to vector<2x256xf32>
    %c0_150 = arith.constant 0 : index
    %c0_151 = arith.constant 0 : index
    %c1_152 = arith.constant 1 : index
    %c0_153 = arith.constant 0 : index
    %163 = vector.load %arg20[%c0_150, %c0_151, %c1_152, %c0_153] : memref<2x2x5x256xf32, #tpu.memory_space<vmem>>, vector<2x1x1x256xf32>
    %164 = vector.shape_cast %163 : vector<2x1x1x256xf32> to vector<2x256xf32>
    %165 = tpu.concatenate %160, %162, %164 in 1 : vector<2x256xf32>, vector<2x256xf32>, vector<2x256xf32> -> vector<2x768xf32>
    %c0_154 = arith.constant 0 : index
    %c0_155 = arith.constant 0 : index
    %c1_156 = arith.constant 1 : index
    %c0_157 = arith.constant 0 : index
    %166 = vector.load %arg20[%c0_154, %c0_155, %c1_156, %c0_157] : memref<2x2x5x256xf32, #tpu.memory_space<vmem>>, vector<2x1x1x256xf32>
    %167 = vector.shape_cast %166 : vector<2x1x1x256xf32> to vector<2x256xf32>
    %c0_158 = arith.constant 0 : index
    %c1_159 = arith.constant 1 : index
    %c1_160 = arith.constant 1 : index
    %c0_161 = arith.constant 0 : index
    %168 = vector.load %arg20[%c0_158, %c1_159, %c1_160, %c0_161] : memref<2x2x5x256xf32, #tpu.memory_space<vmem>>, vector<2x1x1x256xf32>
    %169 = vector.shape_cast %168 : vector<2x1x1x256xf32> to vector<2x256xf32>
    %c0_162 = arith.constant 0 : index
    %c0_163 = arith.constant 0 : index
    %c2_164 = arith.constant 2 : index
    %c0_165 = arith.constant 0 : index
    %170 = vector.load %arg20[%c0_162, %c0_163, %c2_164, %c0_165] : memref<2x2x5x256xf32, #tpu.memory_space<vmem>>, vector<2x1x1x256xf32>
    %171 = vector.shape_cast %170 : vector<2x1x1x256xf32> to vector<2x256xf32>
    %172 = tpu.concatenate %167, %169, %171 in 1 : vector<2x256xf32>, vector<2x256xf32>, vector<2x256xf32> -> vector<2x768xf32>
    %c0_166 = arith.constant 0 : index
    %c0_167 = arith.constant 0 : index
    %c2_168 = arith.constant 2 : index
    %c0_169 = arith.constant 0 : index
    %173 = vector.load %arg20[%c0_166, %c0_167, %c2_168, %c0_169] : memref<2x2x5x256xf32, #tpu.memory_space<vmem>>, vector<2x1x1x256xf32>
    %174 = vector.shape_cast %173 : vector<2x1x1x256xf32> to vector<2x256xf32>
    %c0_170 = arith.constant 0 : index
    %c1_171 = arith.constant 1 : index
    %c2_172 = arith.constant 2 : index
    %c0_173 = arith.constant 0 : index
    %175 = vector.load %arg20[%c0_170, %c1_171, %c2_172, %c0_173] : memref<2x2x5x256xf32, #tpu.memory_space<vmem>>, vector<2x1x1x256xf32>
    %176 = vector.shape_cast %175 : vector<2x1x1x256xf32> to vector<2x256xf32>
    %c0_174 = arith.constant 0 : index
    %c0_175 = arith.constant 0 : index
    %c3_176 = arith.constant 3 : index
    %c0_177 = arith.constant 0 : index
    %177 = vector.load %arg20[%c0_174, %c0_175, %c3_176, %c0_177] : memref<2x2x5x256xf32, #tpu.memory_space<vmem>>, vector<2x1x1x256xf32>
    %178 = vector.shape_cast %177 : vector<2x1x1x256xf32> to vector<2x256xf32>
    %179 = tpu.concatenate %174, %176, %178 in 1 : vector<2x256xf32>, vector<2x256xf32>, vector<2x256xf32> -> vector<2x768xf32>
    %c0_178 = arith.constant 0 : index
    %c0_179 = arith.constant 0 : index
    %c3_180 = arith.constant 3 : index
    %c0_181 = arith.constant 0 : index
    %180 = vector.load %arg20[%c0_178, %c0_179, %c3_180, %c0_181] : memref<2x2x5x256xf32, #tpu.memory_space<vmem>>, vector<2x1x1x256xf32>
    %181 = vector.shape_cast %180 : vector<2x1x1x256xf32> to vector<2x256xf32>
    %c0_182 = arith.constant 0 : index
    %c1_183 = arith.constant 1 : index
    %c3_184 = arith.constant 3 : index
    %c0_185 = arith.constant 0 : index
    %182 = vector.load %arg20[%c0_182, %c1_183, %c3_184, %c0_185] : memref<2x2x5x256xf32, #tpu.memory_space<vmem>>, vector<2x1x1x256xf32>
    %183 = vector.shape_cast %182 : vector<2x1x1x256xf32> to vector<2x256xf32>
    %c0_186 = arith.constant 0 : index
    %c0_187 = arith.constant 0 : index
    %c4_188 = arith.constant 4 : index
    %c0_189 = arith.constant 0 : index
    %184 = vector.load %arg20[%c0_186, %c0_187, %c4_188, %c0_189] : memref<2x2x5x256xf32, #tpu.memory_space<vmem>>, vector<2x1x1x256xf32>
    %185 = vector.shape_cast %184 : vector<2x1x1x256xf32> to vector<2x256xf32>
    %186 = tpu.concatenate %181, %183, %185 in 1 : vector<2x256xf32>, vector<2x256xf32>, vector<2x256xf32> -> vector<2x768xf32>
    %187 = tpu.concatenate %165, %172, %179, %186 in 0 : vector<2x768xf32>, vector<2x768xf32>, vector<2x768xf32>, vector<2x768xf32> -> vector<8x768xf32>
    %188 = arith.truncf %187 : vector<8x768xf32> to vector<8x768xbf16>
    %c0_190 = arith.constant 0 : index
    %c0_191 = arith.constant 0 : index
    %189 = vector.load %arg5[%c0_190, %c0_191] : memref<768x256xbf16, #tpu.memory_space<vmem>>, vector<768x256xbf16>
    %cst_192 = arith.constant dense<0.000000e+00> : vector<8x256xf32>
    %190 = tpu.matmul %188, %189, %cst_192 {dimension_numbers = #tpu.dot_dimension_numbers<[1], [0], [0], [1], [0, 0, 1, 1], [], []>} : vector<8x768xbf16>, vector<768x256xbf16>, vector<8x256xf32> -> vector<8x256xf32>
    %c0_193 = arith.constant 0 : index
    %c0_194 = arith.constant 0 : index
    %191 = vector.load %arg6[%c0_193, %c0_194] : memref<1x256xf32, #tpu.memory_space<vmem>>, vector<1x256xf32>
    %192 = vector.broadcast %191 : vector<1x256xf32> to vector<8x256xf32>
    %193 = arith.addf %190, %192 : vector<8x256xf32>
    %cst_195 = arith.constant 0.000000e+00 : f32
    %194 = vector.broadcast %cst_195 : f32 to vector<8x256xf32>
    %195 = arith.maximumf %193, %194 : vector<8x256xf32>
    %cst_196 = arith.constant dense<0.000000e+00> : vector<256xf32>
    %196 = vector.multi_reduction <add>, %195, %cst_196 [0] : vector<8x256xf32> to vector<256xf32>
    %197 = vector.shape_cast %196 : vector<256xf32> to vector<1x256xf32>
    %198 = arith.mulf %195, %195 : vector<8x256xf32>
    %cst_197 = arith.constant dense<0.000000e+00> : vector<256xf32>
    %199 = vector.multi_reduction <add>, %198, %cst_197 [0] : vector<8x256xf32> to vector<256xf32>
    %200 = vector.shape_cast %199 : vector<256xf32> to vector<1x256xf32>
    %201 = vector.extract_strided_slice %197 {offsets = [0, 0], sizes = [1, 64], strides = [1, 1]} : vector<1x256xf32> to vector<1x64xf32>
    %202 = vector.extract_strided_slice %200 {offsets = [0, 0], sizes = [1, 64], strides = [1, 1]} : vector<1x256xf32> to vector<1x64xf32>
    %203 = vector.extract_strided_slice %197 {offsets = [0, 64], sizes = [1, 64], strides = [1, 1]} : vector<1x256xf32> to vector<1x64xf32>
    %204 = arith.addf %201, %203 : vector<1x64xf32>
    %205 = vector.extract_strided_slice %200 {offsets = [0, 64], sizes = [1, 64], strides = [1, 1]} : vector<1x256xf32> to vector<1x64xf32>
    %206 = arith.addf %202, %205 : vector<1x64xf32>
    %207 = vector.extract_strided_slice %197 {offsets = [0, 128], sizes = [1, 64], strides = [1, 1]} : vector<1x256xf32> to vector<1x64xf32>
    %208 = arith.addf %204, %207 : vector<1x64xf32>
    %209 = vector.extract_strided_slice %200 {offsets = [0, 128], sizes = [1, 64], strides = [1, 1]} : vector<1x256xf32> to vector<1x64xf32>
    %210 = arith.addf %206, %209 : vector<1x64xf32>
    %211 = vector.extract_strided_slice %197 {offsets = [0, 192], sizes = [1, 64], strides = [1, 1]} : vector<1x256xf32> to vector<1x64xf32>
    %212 = arith.addf %208, %211 : vector<1x64xf32>
    %213 = vector.extract_strided_slice %200 {offsets = [0, 192], sizes = [1, 64], strides = [1, 1]} : vector<1x256xf32> to vector<1x64xf32>
    %214 = arith.addf %210, %213 : vector<1x64xf32>
    %cst_198 = arith.constant 3.200000e+01 : f32
    %215 = vector.broadcast %cst_198 : f32 to vector<1x64xf32>
    %216 = arith.divf %212, %215 : vector<1x64xf32>
    %cst_199 = arith.constant 3.200000e+01 : f32
    %217 = vector.broadcast %cst_199 : f32 to vector<1x64xf32>
    %218 = arith.divf %214, %217 : vector<1x64xf32>
    %219 = arith.mulf %216, %216 : vector<1x64xf32>
    %220 = arith.subf %218, %219 : vector<1x64xf32>
    %cst_200 = arith.constant 9.99999974E-6 : f32
    %221 = vector.broadcast %cst_200 : f32 to vector<1x64xf32>
    %222 = arith.addf %220, %221 : vector<1x64xf32>
    %223 = math.rsqrt %222 : vector<1x64xf32>
    %c0_201 = arith.constant 0 : index
    %c0_202 = arith.constant 0 : index
    %224 = vector.load %arg7[%c0_201, %c0_202] : memref<1x64xf32, #tpu.memory_space<vmem>>, vector<1x64xf32>
    %225 = arith.mulf %224, %223 : vector<1x64xf32>
    %c0_203 = arith.constant 0 : index
    %c0_204 = arith.constant 0 : index
    %226 = vector.load %arg8[%c0_203, %c0_204] : memref<1x64xf32, #tpu.memory_space<vmem>>, vector<1x64xf32>
    %227 = arith.mulf %216, %225 : vector<1x64xf32>
    %228 = arith.subf %226, %227 : vector<1x64xf32>
    %229 = tpu.concatenate %225, %225, %225, %225 in 1 : vector<1x64xf32>, vector<1x64xf32>, vector<1x64xf32>, vector<1x64xf32> -> vector<1x256xf32>
    %230 = tpu.concatenate %228, %228, %228, %228 in 1 : vector<1x64xf32>, vector<1x64xf32>, vector<1x64xf32>, vector<1x64xf32> -> vector<1x256xf32>
    %231 = vector.broadcast %229 : vector<1x256xf32> to vector<8x256xf32>
    %232 = arith.mulf %195, %231 : vector<8x256xf32>
    %233 = vector.broadcast %230 : vector<1x256xf32> to vector<8x256xf32>
    %234 = arith.addf %232, %233 : vector<8x256xf32>
    %235 = vector.extract_strided_slice %234 {offsets = [0, 0], sizes = [2, 256], strides = [1, 1]} : vector<8x256xf32> to vector<2x256xf32>
    %c0_205 = arith.constant 0 : index
    %c1_206 = arith.constant 1 : index
    %c0_207 = arith.constant 0 : index
    %c0_208 = arith.constant 0 : index
    %236 = vector.load %arg21[%c0_205, %c1_206, %c0_207, %c0_208] : memref<2x2x3x256xf32, #tpu.memory_space<vmem>>, vector<2x1x1x256xf32>
    %237 = vector.shape_cast %236 : vector<2x1x1x256xf32> to vector<2x256xf32>
    %238 = vector.shape_cast %235 : vector<2x256xf32> to vector<2x1x1x256xf32>
    tpu.vector_store %arg21[%c0_205, %c1_206, %c0_207, %c0_208], %238 {strides = array<i32>} : memref<2x2x3x256xf32, #tpu.memory_space<vmem>>, vector<2x1x1x256xf32>,
    %239 = vector.extract_strided_slice %234 {offsets = [2, 0], sizes = [2, 256], strides = [1, 1]} : vector<8x256xf32> to vector<2x256xf32>
    %c0_209 = arith.constant 0 : index
    %c0_210 = arith.constant 0 : index
    %c1_211 = arith.constant 1 : index
    %c0_212 = arith.constant 0 : index
    %240 = vector.load %arg21[%c0_209, %c0_210, %c1_211, %c0_212] : memref<2x2x3x256xf32, #tpu.memory_space<vmem>>, vector<2x1x1x256xf32>
    %241 = vector.shape_cast %240 : vector<2x1x1x256xf32> to vector<2x256xf32>
    %242 = vector.shape_cast %239 : vector<2x256xf32> to vector<2x1x1x256xf32>
    tpu.vector_store %arg21[%c0_209, %c0_210, %c1_211, %c0_212], %242 {strides = array<i32>} : memref<2x2x3x256xf32, #tpu.memory_space<vmem>>, vector<2x1x1x256xf32>,
    %243 = vector.extract_strided_slice %234 {offsets = [4, 0], sizes = [2, 256], strides = [1, 1]} : vector<8x256xf32> to vector<2x256xf32>
    %c0_213 = arith.constant 0 : index
    %c1_214 = arith.constant 1 : index
    %c1_215 = arith.constant 1 : index
    %c0_216 = arith.constant 0 : index
    %244 = vector.load %arg21[%c0_213, %c1_214, %c1_215, %c0_216] : memref<2x2x3x256xf32, #tpu.memory_space<vmem>>, vector<2x1x1x256xf32>
    %245 = vector.shape_cast %244 : vector<2x1x1x256xf32> to vector<2x256xf32>
    %246 = vector.shape_cast %243 : vector<2x256xf32> to vector<2x1x1x256xf32>
    tpu.vector_store %arg21[%c0_213, %c1_214, %c1_215, %c0_216], %246 {strides = array<i32>} : memref<2x2x3x256xf32, #tpu.memory_space<vmem>>, vector<2x1x1x256xf32>,
    %247 = vector.extract_strided_slice %234 {offsets = [6, 0], sizes = [2, 256], strides = [1, 1]} : vector<8x256xf32> to vector<2x256xf32>
    %c0_217 = arith.constant 0 : index
    %c0_218 = arith.constant 0 : index
    %c2_219 = arith.constant 2 : index
    %c0_220 = arith.constant 0 : index
    %248 = vector.load %arg21[%c0_217, %c0_218, %c2_219, %c0_220] : memref<2x2x3x256xf32, #tpu.memory_space<vmem>>, vector<2x1x1x256xf32>
    %249 = vector.shape_cast %248 : vector<2x1x1x256xf32> to vector<2x256xf32>
    %250 = vector.shape_cast %247 : vector<2x256xf32> to vector<2x1x1x256xf32>
    tpu.vector_store %arg21[%c0_217, %c0_218, %c2_219, %c0_220], %250 {strides = array<i32>} : memref<2x2x3x256xf32, #tpu.memory_space<vmem>>, vector<2x1x1x256xf32>,
    %cst_221 = arith.constant 0.000000e+00 : f32
    %251 = vector.broadcast %cst_221 : f32 to vector<2x256xf32>
    %c0_222 = arith.constant 0 : index
    %c0_223 = arith.constant 0 : index
    %c0_224 = arith.constant 0 : index
    %c0_225 = arith.constant 0 : index
    %252 = vector.load %arg21[%c0_222, %c0_223, %c0_224, %c0_225] : memref<2x2x3x256xf32, #tpu.memory_space<vmem>>, vector<2x1x1x256xf32>
    %253 = vector.shape_cast %252 : vector<2x1x1x256xf32> to vector<2x256xf32>
    %254 = vector.shape_cast %251 : vector<2x256xf32> to vector<2x1x1x256xf32>
    tpu.vector_store %arg21[%c0_222, %c0_223, %c0_224, %c0_225], %254 {strides = array<i32>} : memref<2x2x3x256xf32, #tpu.memory_space<vmem>>, vector<2x1x1x256xf32>,
    %c0_226 = arith.constant 0 : index
    %c1_227 = arith.constant 1 : index
    %c2_228 = arith.constant 2 : index
    %c0_229 = arith.constant 0 : index
    %255 = vector.load %arg21[%c0_226, %c1_227, %c2_228, %c0_229] : memref<2x2x3x256xf32, #tpu.memory_space<vmem>>, vector<2x1x1x256xf32>
    %256 = vector.shape_cast %255 : vector<2x1x1x256xf32> to vector<2x256xf32>
    %257 = vector.shape_cast %251 : vector<2x256xf32> to vector<2x1x1x256xf32>
    tpu.vector_store %arg21[%c0_226, %c1_227, %c2_228, %c0_229], %257 {strides = array<i32>} : memref<2x2x3x256xf32, #tpu.memory_space<vmem>>, vector<2x1x1x256xf32>,
    %c0_230 = arith.constant 0 : index
    %c0_231 = arith.constant 0 : index
    %c0_232 = arith.constant 0 : index
    %c0_233 = arith.constant 0 : index
    %258 = vector.load %arg21[%c0_230, %c0_231, %c0_232, %c0_233] : memref<2x2x3x256xf32, #tpu.memory_space<vmem>>, vector<2x1x1x256xf32>
    %259 = vector.shape_cast %258 : vector<2x1x1x256xf32> to vector<2x256xf32>
    %c0_234 = arith.constant 0 : index
    %c1_235 = arith.constant 1 : index
    %c0_236 = arith.constant 0 : index
    %c0_237 = arith.constant 0 : index
    %260 = vector.load %arg21[%c0_234, %c1_235, %c0_236, %c0_237] : memref<2x2x3x256xf32, #tpu.memory_space<vmem>>, vector<2x1x1x256xf32>
    %261 = vector.shape_cast %260 : vector<2x1x1x256xf32> to vector<2x256xf32>
    %c0_238 = arith.constant 0 : index
    %c0_239 = arith.constant 0 : index
    %c1_240 = arith.constant 1 : index
    %c0_241 = arith.constant 0 : index
    %262 = vector.load %arg21[%c0_238, %c0_239, %c1_240, %c0_241] : memref<2x2x3x256xf32, #tpu.memory_space<vmem>>, vector<2x1x1x256xf32>
    %263 = vector.shape_cast %262 : vector<2x1x1x256xf32> to vector<2x256xf32>
    %264 = tpu.concatenate %259, %261, %263 in 1 : vector<2x256xf32>, vector<2x256xf32>, vector<2x256xf32> -> vector<2x768xf32>
    %c0_242 = arith.constant 0 : index
    %c0_243 = arith.constant 0 : index
    %c1_244 = arith.constant 1 : index
    %c0_245 = arith.constant 0 : index
    %265 = vector.load %arg21[%c0_242, %c0_243, %c1_244, %c0_245] : memref<2x2x3x256xf32, #tpu.memory_space<vmem>>, vector<2x1x1x256xf32>
    %266 = vector.shape_cast %265 : vector<2x1x1x256xf32> to vector<2x256xf32>
    %c0_246 = arith.constant 0 : index
    %c1_247 = arith.constant 1 : index
    %c1_248 = arith.constant 1 : index
    %c0_249 = arith.constant 0 : index
    %267 = vector.load %arg21[%c0_246, %c1_247, %c1_248, %c0_249] : memref<2x2x3x256xf32, #tpu.memory_space<vmem>>, vector<2x1x1x256xf32>
    %268 = vector.shape_cast %267 : vector<2x1x1x256xf32> to vector<2x256xf32>
    %c0_250 = arith.constant 0 : index
    %c0_251 = arith.constant 0 : index
    %c2_252 = arith.constant 2 : index
    %c0_253 = arith.constant 0 : index
    %269 = vector.load %arg21[%c0_250, %c0_251, %c2_252, %c0_253] : memref<2x2x3x256xf32, #tpu.memory_space<vmem>>, vector<2x1x1x256xf32>
    %270 = vector.shape_cast %269 : vector<2x1x1x256xf32> to vector<2x256xf32>
    %271 = tpu.concatenate %266, %268, %270 in 1 : vector<2x256xf32>, vector<2x256xf32>, vector<2x256xf32> -> vector<2x768xf32>
    %272 = tpu.concatenate %264, %271 in 0 : vector<2x768xf32>, vector<2x768xf32> -> vector<4x768xf32>
    %273 = arith.truncf %272 : vector<4x768xf32> to vector<4x768xbf16>
    %c0_254 = arith.constant 0 : index
    %c0_255 = arith.constant 0 : index
    %274 = vector.load %arg9[%c0_254, %c0_255] : memref<768x256xbf16, #tpu.memory_space<vmem>>, vector<768x256xbf16>
    %cst_256 = arith.constant dense<0.000000e+00> : vector<4x256xf32>
    %275 = tpu.matmul %273, %274, %cst_256 {dimension_numbers = #tpu.dot_dimension_numbers<[1], [0], [0], [1], [0, 0, 1, 1], [], []>} : vector<4x768xbf16>, vector<768x256xbf16>, vector<4x256xf32> -> vector<4x256xf32>
    %c0_257 = arith.constant 0 : index
    %c0_258 = arith.constant 0 : index
    %276 = vector.load %arg10[%c0_257, %c0_258] : memref<1x256xf32, #tpu.memory_space<vmem>>, vector<1x256xf32>
    %277 = vector.broadcast %276 : vector<1x256xf32> to vector<4x256xf32>
    %278 = arith.addf %275, %277 : vector<4x256xf32>
    %cst_259 = arith.constant 0.000000e+00 : f32
    %279 = vector.broadcast %cst_259 : f32 to vector<4x256xf32>
    %280 = arith.maximumf %278, %279 : vector<4x256xf32>
    %cst_260 = arith.constant dense<0.000000e+00> : vector<256xf32>
    %281 = vector.multi_reduction <add>, %280, %cst_260 [0] : vector<4x256xf32> to vector<256xf32>
    %282 = vector.shape_cast %281 : vector<256xf32> to vector<1x256xf32>
    %283 = arith.mulf %280, %280 : vector<4x256xf32>
    %cst_261 = arith.constant dense<0.000000e+00> : vector<256xf32>
    %284 = vector.multi_reduction <add>, %283, %cst_261 [0] : vector<4x256xf32> to vector<256xf32>
    %285 = vector.shape_cast %284 : vector<256xf32> to vector<1x256xf32>
    %286 = vector.extract_strided_slice %282 {offsets = [0, 0], sizes = [1, 128], strides = [1, 1]} : vector<1x256xf32> to vector<1x128xf32>
    %287 = vector.extract_strided_slice %285 {offsets = [0, 0], sizes = [1, 128], strides = [1, 1]} : vector<1x256xf32> to vector<1x128xf32>
    %288 = vector.extract_strided_slice %282 {offsets = [0, 128], sizes = [1, 128], strides = [1, 1]} : vector<1x256xf32> to vector<1x128xf32>
    %289 = arith.addf %286, %288 : vector<1x128xf32>
    %290 = vector.extract_strided_slice %285 {offsets = [0, 128], sizes = [1, 128], strides = [1, 1]} : vector<1x256xf32> to vector<1x128xf32>
    %291 = arith.addf %287, %290 : vector<1x128xf32>
    %cst_262 = arith.constant 8.000000e+00 : f32
    %292 = vector.broadcast %cst_262 : f32 to vector<1x128xf32>
    %293 = arith.divf %289, %292 : vector<1x128xf32>
    %cst_263 = arith.constant 8.000000e+00 : f32
    %294 = vector.broadcast %cst_263 : f32 to vector<1x128xf32>
    %295 = arith.divf %291, %294 : vector<1x128xf32>
    %296 = arith.mulf %293, %293 : vector<1x128xf32>
    %297 = arith.subf %295, %296 : vector<1x128xf32>
    %cst_264 = arith.constant 9.99999974E-6 : f32
    %298 = vector.broadcast %cst_264 : f32 to vector<1x128xf32>
    %299 = arith.addf %297, %298 : vector<1x128xf32>
    %300 = math.rsqrt %299 : vector<1x128xf32>
    %c0_265 = arith.constant 0 : index
    %c0_266 = arith.constant 0 : index
    %301 = vector.load %arg11[%c0_265, %c0_266] : memref<1x128xf32, #tpu.memory_space<vmem>>, vector<1x128xf32>
    %302 = arith.mulf %301, %300 : vector<1x128xf32>
    %c0_267 = arith.constant 0 : index
    %c0_268 = arith.constant 0 : index
    %303 = vector.load %arg12[%c0_267, %c0_268] : memref<1x128xf32, #tpu.memory_space<vmem>>, vector<1x128xf32>
    %304 = arith.mulf %293, %302 : vector<1x128xf32>
    %305 = arith.subf %303, %304 : vector<1x128xf32>
    %306 = tpu.concatenate %302, %302 in 1 : vector<1x128xf32>, vector<1x128xf32> -> vector<1x256xf32>
    %307 = tpu.concatenate %305, %305 in 1 : vector<1x128xf32>, vector<1x128xf32> -> vector<1x256xf32>
    %308 = vector.broadcast %306 : vector<1x256xf32> to vector<4x256xf32>
    %309 = arith.mulf %280, %308 : vector<4x256xf32>
    %310 = vector.broadcast %307 : vector<1x256xf32> to vector<4x256xf32>
    %311 = arith.addf %309, %310 : vector<4x256xf32>
    %312 = vector.extract_strided_slice %311 {offsets = [0, 0], sizes = [2, 256], strides = [1, 1]} : vector<4x256xf32> to vector<2x256xf32>
    %c0_269 = arith.constant 0 : index
    %c1_270 = arith.constant 1 : index
    %c0_271 = arith.constant 0 : index
    %c0_272 = arith.constant 0 : index
    %313 = vector.load %arg22[%c0_269, %c1_270, %c0_271, %c0_272] : memref<2x2x2x256xf32, #tpu.memory_space<vmem>>, vector<2x1x1x256xf32>
    %314 = vector.shape_cast %313 : vector<2x1x1x256xf32> to vector<2x256xf32>
    %315 = vector.shape_cast %312 : vector<2x256xf32> to vector<2x1x1x256xf32>
    tpu.vector_store %arg22[%c0_269, %c1_270, %c0_271, %c0_272], %315 {strides = array<i32>} : memref<2x2x2x256xf32, #tpu.memory_space<vmem>>, vector<2x1x1x256xf32>,
    %316 = vector.extract_strided_slice %311 {offsets = [2, 0], sizes = [2, 256], strides = [1, 1]} : vector<4x256xf32> to vector<2x256xf32>
    %c0_273 = arith.constant 0 : index
    %c0_274 = arith.constant 0 : index
    %c1_275 = arith.constant 1 : index
    %c0_276 = arith.constant 0 : index
    %317 = vector.load %arg22[%c0_273, %c0_274, %c1_275, %c0_276] : memref<2x2x2x256xf32, #tpu.memory_space<vmem>>, vector<2x1x1x256xf32>
    %318 = vector.shape_cast %317 : vector<2x1x1x256xf32> to vector<2x256xf32>
    %319 = vector.shape_cast %316 : vector<2x256xf32> to vector<2x1x1x256xf32>
    tpu.vector_store %arg22[%c0_273, %c0_274, %c1_275, %c0_276], %319 {strides = array<i32>} : memref<2x2x2x256xf32, #tpu.memory_space<vmem>>, vector<2x1x1x256xf32>,
    %cst_277 = arith.constant 0.000000e+00 : f32
    %320 = vector.broadcast %cst_277 : f32 to vector<2x256xf32>
    %c0_278 = arith.constant 0 : index
    %c0_279 = arith.constant 0 : index
    %c0_280 = arith.constant 0 : index
    %c0_281 = arith.constant 0 : index
    %321 = vector.load %arg22[%c0_278, %c0_279, %c0_280, %c0_281] : memref<2x2x2x256xf32, #tpu.memory_space<vmem>>, vector<2x1x1x256xf32>
    %322 = vector.shape_cast %321 : vector<2x1x1x256xf32> to vector<2x256xf32>
    %323 = vector.shape_cast %320 : vector<2x256xf32> to vector<2x1x1x256xf32>
    tpu.vector_store %arg22[%c0_278, %c0_279, %c0_280, %c0_281], %323 {strides = array<i32>} : memref<2x2x2x256xf32, #tpu.memory_space<vmem>>, vector<2x1x1x256xf32>,
    %c0_282 = arith.constant 0 : index
    %c1_283 = arith.constant 1 : index
    %c1_284 = arith.constant 1 : index
    %c0_285 = arith.constant 0 : index
    %324 = vector.load %arg22[%c0_282, %c1_283, %c1_284, %c0_285] : memref<2x2x2x256xf32, #tpu.memory_space<vmem>>, vector<2x1x1x256xf32>
    %325 = vector.shape_cast %324 : vector<2x1x1x256xf32> to vector<2x256xf32>
    %326 = vector.shape_cast %320 : vector<2x256xf32> to vector<2x1x1x256xf32>
    tpu.vector_store %arg22[%c0_282, %c1_283, %c1_284, %c0_285], %326 {strides = array<i32>} : memref<2x2x2x256xf32, #tpu.memory_space<vmem>>, vector<2x1x1x256xf32>,
    %c0_286 = arith.constant 0 : index
    %c0_287 = arith.constant 0 : index
    %c0_288 = arith.constant 0 : index
    %c0_289 = arith.constant 0 : index
    %327 = vector.load %arg22[%c0_286, %c0_287, %c0_288, %c0_289] : memref<2x2x2x256xf32, #tpu.memory_space<vmem>>, vector<2x1x1x256xf32>
    %328 = vector.shape_cast %327 : vector<2x1x1x256xf32> to vector<2x256xf32>
    %c0_290 = arith.constant 0 : index
    %c1_291 = arith.constant 1 : index
    %c0_292 = arith.constant 0 : index
    %c0_293 = arith.constant 0 : index
    %329 = vector.load %arg22[%c0_290, %c1_291, %c0_292, %c0_293] : memref<2x2x2x256xf32, #tpu.memory_space<vmem>>, vector<2x1x1x256xf32>
    %330 = vector.shape_cast %329 : vector<2x1x1x256xf32> to vector<2x256xf32>
    %c0_294 = arith.constant 0 : index
    %c0_295 = arith.constant 0 : index
    %c1_296 = arith.constant 1 : index
    %c0_297 = arith.constant 0 : index
    %331 = vector.load %arg22[%c0_294, %c0_295, %c1_296, %c0_297] : memref<2x2x2x256xf32, #tpu.memory_space<vmem>>, vector<2x1x1x256xf32>
    %332 = vector.shape_cast %331 : vector<2x1x1x256xf32> to vector<2x256xf32>
    %333 = tpu.concatenate %328, %330, %332 in 1 : vector<2x256xf32>, vector<2x256xf32>, vector<2x256xf32> -> vector<2x768xf32>
    %334 = arith.truncf %333 : vector<2x768xf32> to vector<2x768xbf16>
    %c0_298 = arith.constant 0 : index
    %c0_299 = arith.constant 0 : index
    %335 = vector.load %arg13[%c0_298, %c0_299] : memref<768x256xbf16, #tpu.memory_space<vmem>>, vector<768x256xbf16>
    %cst_300 = arith.constant dense<0.000000e+00> : vector<2x256xf32>
    %336 = tpu.matmul %334, %335, %cst_300 {dimension_numbers = #tpu.dot_dimension_numbers<[1], [0], [0], [1], [0, 0, 1, 1], [], []>} : vector<2x768xbf16>, vector<768x256xbf16>, vector<2x256xf32> -> vector<2x256xf32>
    %c0_301 = arith.constant 0 : index
    %c0_302 = arith.constant 0 : index
    %337 = vector.load %arg14[%c0_301, %c0_302] : memref<1x256xf32, #tpu.memory_space<vmem>>, vector<1x256xf32>
    %338 = vector.broadcast %337 : vector<1x256xf32> to vector<2x256xf32>
    %339 = arith.addf %336, %338 : vector<2x256xf32>
    %cst_303 = arith.constant dense<0.000000e+00> : vector<256xf32>
    %340 = vector.multi_reduction <add>, %339, %cst_303 [0] : vector<2x256xf32> to vector<256xf32>
    %341 = vector.shape_cast %340 : vector<256xf32> to vector<1x256xf32>
    %342 = arith.mulf %339, %339 : vector<2x256xf32>
    %cst_304 = arith.constant dense<0.000000e+00> : vector<256xf32>
    %343 = vector.multi_reduction <add>, %342, %cst_304 [0] : vector<2x256xf32> to vector<256xf32>
    %344 = vector.shape_cast %343 : vector<256xf32> to vector<1x256xf32>
    %cst_305 = arith.constant 2.000000e+00 : f32
    %345 = vector.broadcast %cst_305 : f32 to vector<1x256xf32>
    %346 = arith.divf %341, %345 : vector<1x256xf32>
    %cst_306 = arith.constant 2.000000e+00 : f32
    %347 = vector.broadcast %cst_306 : f32 to vector<1x256xf32>
    %348 = arith.divf %344, %347 : vector<1x256xf32>
    %349 = arith.mulf %346, %346 : vector<1x256xf32>
    %350 = arith.subf %348, %349 : vector<1x256xf32>
    %cst_307 = arith.constant 9.99999974E-6 : f32
    %351 = vector.broadcast %cst_307 : f32 to vector<1x256xf32>
    %352 = arith.addf %350, %351 : vector<1x256xf32>
    %353 = math.rsqrt %352 : vector<1x256xf32>
    %c0_308 = arith.constant 0 : index
    %c0_309 = arith.constant 0 : index
    %354 = vector.load %arg15[%c0_308, %c0_309] : memref<1x256xf32, #tpu.memory_space<vmem>>, vector<1x256xf32>
    %355 = arith.mulf %354, %353 : vector<1x256xf32>
    %c0_310 = arith.constant 0 : index
    %c0_311 = arith.constant 0 : index
    %356 = vector.load %arg16[%c0_310, %c0_311] : memref<1x256xf32, #tpu.memory_space<vmem>>, vector<1x256xf32>
    %357 = arith.mulf %346, %355 : vector<1x256xf32>
    %358 = arith.subf %356, %357 : vector<1x256xf32>
    %359 = vector.broadcast %355 : vector<1x256xf32> to vector<2x256xf32>
    %360 = arith.mulf %339, %359 : vector<2x256xf32>
    %361 = vector.broadcast %358 : vector<1x256xf32> to vector<2x256xf32>
    %362 = arith.addf %360, %361 : vector<2x256xf32>
    %363 = arith.truncf %362 : vector<2x256xf32> to vector<2x256xbf16>
    %c0_312 = arith.constant 0 : index
    %c0_313 = arith.constant 0 : index
    %364 = vector.load %arg17[%c0_312, %c0_313] : memref<256x128xbf16, #tpu.memory_space<vmem>>, vector<256x128xbf16>
    %cst_314 = arith.constant dense<0.000000e+00> : vector<2x128xf32>
    %365 = tpu.matmul %363, %364, %cst_314 {dimension_numbers = #tpu.dot_dimension_numbers<[1], [0], [0], [1], [0, 0, 1, 1], [], []>} : vector<2x256xbf16>, vector<256x128xbf16>, vector<2x128xf32> -> vector<2x128xf32>
    %c0_315 = arith.constant 0 : index
    %c0_316 = arith.constant 0 : index
    %366 = vector.load %arg18[%c0_315, %c0_316] : memref<1x128xf32, #tpu.memory_space<vmem>>, vector<1x128xf32>
    %367 = vector.broadcast %366 : vector<1x128xf32> to vector<2x128xf32>
    %368 = arith.addf %365, %367 : vector<2x128xf32>
    %c0_317 = arith.constant 0 : index
    %c0_318 = arith.constant 0 : index
    %369 = vector.load %arg19[%c0_317, %c0_318] : memref<2x128xf32, #tpu.memory_space<vmem>>, vector<2x128xf32>
    tpu.vector_store %arg19[%c0_317, %c0_318], %368 {strides = array<i32>} : memref<2x128xf32, #tpu.memory_space<vmem>>, vector<2x128xf32>,
    return
  }
}

</mosaic_0001>

<llo_original>
// kernel: tpu_custom_call.1
$region0: #{tpu_custom_call.1}
  #allocation0 [shape = 'u32[]', space=smem, size = 0x4, offset = 0x4, fixed_abs, tag = 'smem constant byte address 0x4 - core index']
  #allocation1 [shape = 'u32[144,128]{1,0:T(1,128)}', space=vmem, size = 0x12000, scoped, tag = 'internal scratch']
  #allocation2 [shape = 'f32[2,2,5,256]{3,2,1,0:T(8,128)}', space=vmem, size = 0x8000, scoped, tag = 'scratch operand']
  #allocation3 [shape = 'f32[2,2,3,256]{3,2,1,0:T(4,128)}', space=vmem, size = 0x4000, scoped, tag = 'scratch operand']
  #allocation4 [shape = 'f32[2,2,2,256]{3,2,1,0:T(2,128)}', space=vmem, size = 0x2000, scoped, tag = 'scratch operand']
  %s0 = inlined_call_operand.vmem [shape: f32[2,2,9,64], index: 0, kind: input, shape index: {}]
  %s1 = inlined_call_operand.hbm [shape: bf16[192,256], index: 1, kind: input, shape index: {}]
  %s2 = inlined_call_operand.vmem [shape: f32[1,256], index: 2, kind: input, shape index: {}]
  %s3 = inlined_call_operand.vmem [shape: f32[1,32], index: 3, kind: input, shape index: {}]
  %s4 = inlined_call_operand.hbm [shape: f32[1,32], index: 4, kind: input, shape index: {}]
  %s5 = inlined_call_operand.hbm [shape: bf16[768,256], index: 5, kind: input, shape index: {}]
  %s6 = inlined_call_operand.hbm [shape: f32[1,256], index: 6, kind: input, shape index: {}]
  %s7 = inlined_call_operand.hbm [shape: f32[1,64], index: 7, kind: input, shape index: {}]
  %s8 = inlined_call_operand.hbm [shape: f32[1,64], index: 8, kind: input, shape index: {}]
  %s9 = inlined_call_operand.hbm [shape: bf16[768,256], index: 9, kind: input, shape index: {}]
  %s10 = inlined_call_operand.hbm [shape: f32[1,256], index: 10, kind: input, shape index: {}]
  %s11 = inlined_call_operand.hbm [shape: f32[1,128], index: 11, kind: input, shape index: {}]
  %s12 = inlined_call_operand.hbm [shape: f32[1,128], index: 12, kind: input, shape index: {}]
  %s13 = inlined_call_operand.hbm [shape: bf16[768,256], index: 13, kind: input, shape index: {}]
  %s14 = inlined_call_operand.hbm [shape: f32[1,256], index: 14, kind: input, shape index: {}]
  %s15 = inlined_call_operand.hbm [shape: f32[1,256], index: 15, kind: input, shape index: {}]
  %s16 = inlined_call_operand.hbm [shape: f32[1,256], index: 16, kind: input, shape index: {}]
  %s17 = inlined_call_operand.vmem [shape: bf16[256,128], index: 17, kind: input, shape index: {}]
  %s18 = inlined_call_operand.vmem [shape: f32[1,128], index: 18, kind: input, shape index: {}]
  %s19 = inlined_call_operand.hbm [shape: f32[2,128], index: 19, kind: output, shape index: {}]
  %s20 = sld [smem:[#allocation0]]
  $region142: #{tpu_custom_call.1} parent=0
    _
  %s22 = ssub.s32 1, %s20
  %s23 = scalar_select 0, %s22, %s20
  $region1: #{tpu_custom_call.1} parent=0
    #allocation5 [shape = 'u8[98304]{0}', space=vmem, size = 0x18000, scoped, tag = 'input window, operand 1, single buffered']
    #allocation6 [shape = 's32[1]{0}', space=sflag, size = 0x4, scoped, tag = 'scoped memory for tpu_custom_call.1']
    #allocation7 [shape = 's32[1]{0}', space=sflag, size = 0x4, scoped, tag = 'scoped memory for tpu_custom_call.1']
    #allocation8 [shape = 'u8[512]{0}', space=vmem, size = 0x400, scoped, tag = 'input window, operand 4, single buffered']
    #allocation9 [shape = 's32[1]{0}', space=sflag, size = 0x4, scoped, tag = 'scoped memory for tpu_custom_call.1']
    #allocation10 [shape = 'u8[393216]{0}', space=vmem, size = 0x60000, scoped, tag = 'input window, operand 5, single buffered']
    #allocation11 [shape = 'u8[1024]{0}', space=vmem, size = 0x400, scoped, tag = 'input window, operand 6, single buffered']
    #allocation12 [shape = 's32[1]{0}', space=sflag, size = 0x4, scoped, tag = 'scoped memory for tpu_custom_call.1']
    #allocation13 [shape = 'u8[512]{0}', space=vmem, size = 0x400, scoped, tag = 'input window, operand 7, single buffered']
    #allocation14 [shape = 'u8[512]{0}', space=vmem, size = 0x400, scoped, tag = 'input window, operand 8, single buffered']
    #allocation15 [shape = 's32[1]{0}', space=sflag, size = 0x4, scoped, tag = 'scoped memory for tpu_custom_call.1']
    #allocation16 [shape = 'u8[393216]{0}', space=vmem, size = 0x60000, scoped, tag = 'input window, operand 9, single buffered']
    #allocation17 [shape = 'u8[1024]{0}', space=vmem, size = 0x400, scoped, tag = 'input window, operand 10, single buffered']
    #allocation18 [shape = 's32[1]{0}', space=sflag, size = 0x4, scoped, tag = 'scoped memory for tpu_custom_call.1']
    #allocation19 [shape = 'u8[512]{0}', space=vmem, size = 0x400, scoped, tag = 'input window, operand 11, single buffered']
    #allocation20 [shape = 'u8[512]{0}', space=vmem, size = 0x400, scoped, tag = 'input window, operand 12, single buffered']
    #allocation21 [shape = 's32[1]{0}', space=sflag, size = 0x4, scoped, tag = 'scoped memory for tpu_custom_call.1']
    #allocation22 [shape = 'u8[393216]{0}', space=vmem, size = 0x60000, scoped, tag = 'input window, operand 13, single buffered']
    #allocation23 [shape = 'u8[1024]{0}', space=vmem, size = 0x400, scoped, tag = 'input window, operand 14, single buffered']
    #allocation24 [shape = 's32[1]{0}', space=sflag, size = 0x4, scoped, tag = 'scoped memory for tpu_custom_call.1']
    #allocation25 [shape = 'u8[1024]{0}', space=vmem, size = 0x400, scoped, tag = 'input window, operand 15, single buffered']
    #allocation26 [shape = 'u8[1024]{0}', space=vmem, size = 0x400, scoped, tag = 'input window, operand 16, single buffered']
    #allocation27 [shape = 's32[1]{0}', space=sflag, size = 0x4, scoped, tag = 'scoped memory for tpu_custom_call.1']
    #allocation28 [shape = 'u8[1024]{0}', space=vmem, size = 0x400, scoped, tag = 'output window, operand 0, single buffered']
    %24 = vsyncpa [#allocation6], 0
    %25 = vsyncpa [#allocation9], 0
    %26 = vsyncpa [#allocation12], 0
    %27 = vsyncpa [#allocation15], 0
    %28 = vsyncpa [#allocation18], 0
    %29 = vsyncpa [#allocation21], 0
    %30 = vsyncpa [#allocation24], 0
    %31 = vsyncpa [#allocation27], 0
    %32 = vsyncpa [#allocation7], 0
    // Predicated region
    $region2: #{tpu_custom_call.1} parent=1 // pred_check
      _
    $region3: #{tpu_custom_call.1} parent=1 // pred_check_branch
      %34 = sbr.rel (0) target = $region5
    $region4: #{tpu_custom_call.1} parent=1 // pred_region
      _
    $region5: #{tpu_custom_call.1} parent=1 // pred_fallthru
      _
    // Predicated region
    $region6: #{tpu_custom_call.1} parent=1 // pred_check
      _
    $region7: #{tpu_custom_call.1} parent=1 // pred_check_branch
      %36 = sbr.rel (0) target = $region9
    $region8: #{tpu_custom_call.1} parent=1 // pred_region
      %s38 = ssub.s32 3072, 3072
      %39 = vsyncadd [#allocation6], %s38
      %s40 = sshll.u32 [#allocation5], 4
      %s41 = int_to_ptr.vmem [resolvable:$true] %s40
      %46 = dma.hbm_to_vmem [thread:$0]  %s1, 3072, %s41, [#allocation6], 128, 128, 8
    $region9: #{tpu_custom_call.1} parent=1 // pred_fallthru
      _
    // Predicated region
    $region10: #{tpu_custom_call.1} parent=1 // pred_check
      _
    $region11: #{tpu_custom_call.1} parent=1 // pred_check_branch
      %48 = sbr.rel (0) target = $region13
    $region12: #{tpu_custom_call.1} parent=1 // pred_region
      _
    $region13: #{tpu_custom_call.1} parent=1 // pred_fallthru
      _
    // Predicated region
    $region14: #{tpu_custom_call.1} parent=1 // pred_check
      _
    $region15: #{tpu_custom_call.1} parent=1 // pred_check_branch
      %50 = sbr.rel (0) target = $region17
    $region16: #{tpu_custom_call.1} parent=1 // pred_region
      _
    $region17: #{tpu_custom_call.1} parent=1 // pred_fallthru
      _
    // Predicated region
    $region18: #{tpu_custom_call.1} parent=1 // pred_check
      _
    $region19: #{tpu_custom_call.1} parent=1 // pred_check_branch
      %52 = sbr.rel (0) target = $region21
    $region20: #{tpu_custom_call.1} parent=1 // pred_region
      %s54 = ssub.s32 16, 16
      %55 = vsyncadd [#allocation9], %s54
      %s57 = sshll.u32 [#allocation8], 4
      %s58 = int_to_ptr.vmem [resolvable:$true] %s57
      %60 = dma.hbm_to_vmem [thread:$0]  %s4, 16, %s58, [#allocation9]
    $region21: #{tpu_custom_call.1} parent=1 // pred_fallthru
      _
    // Predicated region
    $region22: #{tpu_custom_call.1} parent=1 // pred_check
      _
    $region23: #{tpu_custom_call.1} parent=1 // pred_check_branch
      %62 = sbr.rel (0) target = $region25
    $region24: #{tpu_custom_call.1} parent=1 // pred_region
      %s64 = ssub.s32 12288, 12288
      %65 = vsyncadd [#allocation9], %s64
      %s66 = sshll.u32 [#allocation10], 4
      %s67 = int_to_ptr.vmem [resolvable:$true] %s66
      %72 = dma.hbm_to_vmem [thread:$0]  %s5, 12288, %s67, [#allocation9], 128, 128, 8
    $region25: #{tpu_custom_call.1} parent=1 // pred_fallthru
      _
    // Predicated region
    $region26: #{tpu_custom_call.1} parent=1 // pred_check
      _
    $region27: #{tpu_custom_call.1} parent=1 // pred_check_branch
      %74 = sbr.rel (0) target = $region29
    $region28: #{tpu_custom_call.1} parent=1 // pred_region
      %s76 = ssub.s32 32, 32
      %77 = vsyncadd [#allocation12], %s76
      %s79 = sshll.u32 [#allocation11], 4
      %s80 = int_to_ptr.vmem [resolvable:$true] %s79
      %82 = dma.hbm_to_vmem [thread:$0]  %s6, 32, %s80, [#allocation12]
    $region29: #{tpu_custom_call.1} parent=1 // pred_fallthru
      _
    // Predicated region
    $region30: #{tpu_custom_call.1} parent=1 // pred_check
      _
    $region31: #{tpu_custom_call.1} parent=1 // pred_check_branch
      %84 = sbr.rel (0) target = $region33
    $region32: #{tpu_custom_call.1} parent=1 // pred_region
      %s86 = ssub.s32 16, 16
      %87 = vsyncadd [#allocation12], %s86
      %s89 = sshll.u32 [#allocation13], 4
      %s90 = int_to_ptr.vmem [resolvable:$true] %s89
      %92 = dma.hbm_to_vmem [thread:$0]  %s7, 16, %s90, [#allocation12]
    $region33: #{tpu_custom_call.1} parent=1 // pred_fallthru
      _
    // Predicated region
    $region34: #{tpu_custom_call.1} parent=1 // pred_check
      _
    $region35: #{tpu_custom_call.1} parent=1 // pred_check_branch
      %94 = sbr.rel (0) target = $region37
    $region36: #{tpu_custom_call.1} parent=1 // pred_region
      %s96 = ssub.s32 16, 16
      %97 = vsyncadd [#allocation15], %s96
      %s99 = sshll.u32 [#allocation14], 4
      %s100 = int_to_ptr.vmem [resolvable:$true] %s99
      %102 = dma.hbm_to_vmem [thread:$0]  %s8, 16, %s100, [#allocation15]
    $region37: #{tpu_custom_call.1} parent=1 // pred_fallthru
      _
    // Predicated region
    $region38: #{tpu_custom_call.1} parent=1 // pred_check
      _
    $region39: #{tpu_custom_call.1} parent=1 // pred_check_branch
      %104 = sbr.rel (0) target = $region41
    $region40: #{tpu_custom_call.1} parent=1 // pred_region
      %s106 = ssub.s32 12288, 12288
      %107 = vsyncadd [#allocation15], %s106
      %s108 = sshll.u32 [#allocation16], 4
      %s109 = int_to_ptr.vmem [resolvable:$true] %s108
      %114 = dma.hbm_to_vmem [thread:$0]  %s9, 12288, %s109, [#allocation15], 128, 128, 8
    $region41: #{tpu_custom_call.1} parent=1 // pred_fallthru
      _
    // Predicated region
    $region42: #{tpu_custom_call.1} parent=1 // pred_check
      _
    $region43: #{tpu_custom_call.1} parent=1 // pred_check_branch
      %116 = sbr.rel (0) target = $region45
    $region44: #{tpu_custom_call.1} parent=1 // pred_region
      %s118 = ssub.s32 32, 32
      %119 = vsyncadd [#allocation18], %s118
      %s121 = sshll.u32 [#allocation17], 4
      %s122 = int_to_ptr.vmem [resolvable:$true] %s121
      %124 = dma.hbm_to_vmem [thread:$0]  %s10, 32, %s122, [#allocation18]
    $region45: #{tpu_custom_call.1} parent=1 // pred_fallthru
      _
    // Predicated region
    $region46: #{tpu_custom_call.1} parent=1 // pred_check
      _
    $region47: #{tpu_custom_call.1} parent=1 // pred_check_branch
      %126 = sbr.rel (0) target = $region49
    $region48: #{tpu_custom_call.1} parent=1 // pred_region
      %s128 = ssub.s32 16, 16
      %129 = vsyncadd [#allocation18], %s128
      %s131 = sshll.u32 [#allocation19], 4
      %s132 = int_to_ptr.vmem [resolvable:$true] %s131
      %134 = dma.hbm_to_vmem [thread:$0]  %s11, 16, %s132, [#allocation18]
    $region49: #{tpu_custom_call.1} parent=1 // pred_fallthru
      _
    // Predicated region
    $region50: #{tpu_custom_call.1} parent=1 // pred_check
      _
    $region51: #{tpu_custom_call.1} parent=1 // pred_check_branch
      %136 = sbr.rel (0) target = $region53
    $region52: #{tpu_custom_call.1} parent=1 // pred_region
      %s138 = ssub.s32 16, 16
      %139 = vsyncadd [#allocation21], %s138
      %s141 = sshll.u32 [#allocation20], 4
      %s142 = int_to_ptr.vmem [resolvable:$true] %s141
      %144 = dma.hbm_to_vmem [thread:$0]  %s12, 16, %s142, [#allocation21]
    $region53: #{tpu_custom_call.1} parent=1 // pred_fallthru
      _
    // Predicated region
    $region54: #{tpu_custom_call.1} parent=1 // pred_check
      _
    $region55: #{tpu_custom_call.1} parent=1 // pred_check_branch
      %146 = sbr.rel (0) target = $region57
    $region56: #{tpu_custom_call.1} parent=1 // pred_region
      %s148 = ssub.s32 12288, 12288
      %149 = vsyncadd [#allocation21], %s148
      %s150 = sshll.u32 [#allocation22], 4
      %s151 = int_to_ptr.vmem [resolvable:$true] %s150
      %156 = dma.hbm_to_vmem [thread:$0]  %s13, 12288, %s151, [#allocation21], 128, 128, 8
    $region57: #{tpu_custom_call.1} parent=1 // pred_fallthru
      _
    // Predicated region
    $region58: #{tpu_custom_call.1} parent=1 // pred_check
      _
    $region59: #{tpu_custom_call.1} parent=1 // pred_check_branch
      %158 = sbr.rel (0) target = $region61
    $region60: #{tpu_custom_call.1} parent=1 // pred_region
      %s160 = ssub.s32 32, 32
      %161 = vsyncadd [#allocation24], %s160
      %s163 = sshll.u32 [#allocation23], 4
      %s164 = int_to_ptr.vmem [resolvable:$true] %s163
      %166 = dma.hbm_to_vmem [thread:$0]  %s14, 32, %s164, [#allocation24]
    $region61: #{tpu_custom_call.1} parent=1 // pred_fallthru
      _
    // Predicated region
    $region62: #{tpu_custom_call.1} parent=1 // pred_check
      _
    $region63: #{tpu_custom_call.1} parent=1 // pred_check_branch
      %168 = sbr.rel (0) target = $region65
    $region64: #{tpu_custom_call.1} parent=1 // pred_region
      %s170 = ssub.s32 32, 32
      %171 = vsyncadd [#allocation24], %s170
      %s173 = sshll.u32 [#allocation25], 4
      %s174 = int_to_ptr.vmem [resolvable:$true] %s173
      %176 = dma.hbm_to_vmem [thread:$0]  %s15, 32, %s174, [#allocation24]
    $region65: #{tpu_custom_call.1} parent=1 // pred_fallthru
      _
    // Predicated region
    $region66: #{tpu_custom_call.1} parent=1 // pred_check
      _
    $region67: #{tpu_custom_call.1} parent=1 // pred_check_branch
      %178 = sbr.rel (0) target = $region69
    $region68: #{tpu_custom_call.1} parent=1 // pred_region
      %s180 = ssub.s32 32, 32
      %181 = vsyncadd [#allocation27], %s180
      %s183 = sshll.u32 [#allocation26], 4
      %s184 = int_to_ptr.vmem [resolvable:$true] %s183
      %186 = dma.hbm_to_vmem [thread:$0]  %s16, 32, %s184, [#allocation27]
    $region69: #{tpu_custom_call.1} parent=1 // pred_fallthru
      _
    // Predicated region
    $region70: #{tpu_custom_call.1} parent=1 // pred_check
      _
    $region71: #{tpu_custom_call.1} parent=1 // pred_check_branch
      %188 = sbr.rel (0) target = $region73
    $region72: #{tpu_custom_call.1} parent=1 // pred_region
      _
    $region73: #{tpu_custom_call.1} parent=1 // pred_fallthru
      _
    // Predicated region
    $region74: #{tpu_custom_call.1} parent=1 // pred_check
      _
    $region75: #{tpu_custom_call.1} parent=1 // pred_check_branch
      %190 = sbr.rel (0) target = $region77
    $region76: #{tpu_custom_call.1} parent=1 // pred_region
      _
    $region77: #{tpu_custom_call.1} parent=1 // pred_fallthru
      _
    // Predicated region
    $region78: #{tpu_custom_call.1} parent=1 // pred_check
      _
    $region79: #{tpu_custom_call.1} parent=1 // pred_check_branch
      %192 = sbr.rel (0) target = $region81
    $region80: #{tpu_custom_call.1} parent=1 // pred_region
      %193 = dma.done [#allocation6], 3072
    $region81: #{tpu_custom_call.1} parent=1 // pred_fallthru
      _
    // Predicated region
    $region82: #{tpu_custom_call.1} parent=1 // pred_check
      _
    $region83: #{tpu_custom_call.1} parent=1 // pred_check_branch
      %195 = sbr.rel (0) target = $region85
    $region84: #{tpu_custom_call.1} parent=1 // pred_region
      %196 = dma.done [#allocation9], 16
    $region85: #{tpu_custom_call.1} parent=1 // pred_fallthru
      _
    // Predicated region
    $region86: #{tpu_custom_call.1} parent=1 // pred_check
      _
    $region87: #{tpu_custom_call.1} parent=1 // pred_check_branch
      %198 = sbr.rel (0) target = $region89
    $region88: #{tpu_custom_call.1} parent=1 // pred_region
      %199 = dma.done [#allocation9], 12288
    $region89: #{tpu_custom_call.1} parent=1 // pred_fallthru
      _
    // Predicated region
    $region90: #{tpu_custom_call.1} parent=1 // pred_check
      _
    $region91: #{tpu_custom_call.1} parent=1 // pred_check_branch
      %201 = sbr.rel (0) target = $region93
    $region92: #{tpu_custom_call.1} parent=1 // pred_region
      %202 = dma.done [#allocation12], 32
    $region93: #{tpu_custom_call.1} parent=1 // pred_fallthru
      _
    // Predicated region
    $region94: #{tpu_custom_call.1} parent=1 // pred_check
      _
    $region95: #{tpu_custom_call.1} parent=1 // pred_check_branch
      %204 = sbr.rel (0) target = $region97
    $region96: #{tpu_custom_call.1} parent=1 // pred_region
      %205 = dma.done [#allocation12], 16
    $region97: #{tpu_custom_call.1} parent=1 // pred_fallthru
      _
    // Predicated region
    $region98: #{tpu_custom_call.1} parent=1 // pred_check
      _
    $region99: #{tpu_custom_call.1} parent=1 // pred_check_branch
      %207 = sbr.rel (0) target = $region101
    $region100: #{tpu_custom_call.1} parent=1 // pred_region
      %208 = dma.done [#allocation15], 16
    $region101: #{tpu_custom_call.1} parent=1 // pred_fallthru
      _
    // Predicated region
    $region102: #{tpu_custom_call.1} parent=1 // pred_check
      _
    $region103: #{tpu_custom_call.1} parent=1 // pred_check_branch
      %210 = sbr.rel (0) target = $region105
    $region104: #{tpu_custom_call.1} parent=1 // pred_region
      %211 = dma.done [#allocation15], 12288
    $region105: #{tpu_custom_call.1} parent=1 // pred_fallthru
      _
    // Predicated region
    $region106: #{tpu_custom_call.1} parent=1 // pred_check
      _
    $region107: #{tpu_custom_call.1} parent=1 // pred_check_branch
      %213 = sbr.rel (0) target = $region109
    $region108: #{tpu_custom_call.1} parent=1 // pred_region
      %214 = dma.done [#allocation18], 32
    $region109: #{tpu_custom_call.1} parent=1 // pred_fallthru
      _
    // Predicated region
    $region110: #{tpu_custom_call.1} parent=1 // pred_check
      _
    $region111: #{tpu_custom_call.1} parent=1 // pred_check_branch
      %216 = sbr.rel (0) target = $region113
    $region112: #{tpu_custom_call.1} parent=1 // pred_region
      %217 = dma.done [#allocation18], 16
    $region113: #{tpu_custom_call.1} parent=1 // pred_fallthru
      _
    // Predicated region
    $region114: #{tpu_custom_call.1} parent=1 // pred_check
      _
    $region115: #{tpu_custom_call.1} parent=1 // pred_check_branch
      %219 = sbr.rel (0) target = $region117
    $region116: #{tpu_custom_call.1} parent=1 // pred_region
      %220 = dma.done [#allocation21], 16
    $region117: #{tpu_custom_call.1} parent=1 // pred_fallthru
      _
    // Predicated region
    $region118: #{tpu_custom_call.1} parent=1 // pred_check
      _
    $region119: #{tpu_custom_call.1} parent=1 // pred_check_branch
      %222 = sbr.rel (0) target = $region121
    $region120: #{tpu_custom_call.1} parent=1 // pred_region
      %223 = dma.done [#allocation21], 12288
    $region121: #{tpu_custom_call.1} parent=1 // pred_fallthru
      _
    // Predicated region
    $region122: #{tpu_custom_call.1} parent=1 // pred_check
      _
    $region123: #{tpu_custom_call.1} parent=1 // pred_check_branch
      %225 = sbr.rel (0) target = $region125
    $region124: #{tpu_custom_call.1} parent=1 // pred_region
      %226 = dma.done [#allocation24], 32
    $region125: #{tpu_custom_call.1} parent=1 // pred_fallthru
      _
    // Predicated region
    $region126: #{tpu_custom_call.1} parent=1 // pred_check
      _
    $region127: #{tpu_custom_call.1} parent=1 // pred_check_branch
      %228 = sbr.rel (0) target = $region129
    $region128: #{tpu_custom_call.1} parent=1 // pred_region
      %229 = dma.done [#allocation24], 32
    $region129: #{tpu_custom_call.1} parent=1 // pred_fallthru
      _
    // Predicated region
    $region130: #{tpu_custom_call.1} parent=1 // pred_check
      _
    $region131: #{tpu_custom_call.1} parent=1 // pred_check_branch
      %231 = sbr.rel (0) target = $region133
    $region132: #{tpu_custom_call.1} parent=1 // pred_region
      %232 = dma.done [#allocation27], 32
    $region133: #{tpu_custom_call.1} parent=1 // pred_fallthru
      _
    %v234 = vld [vmem:[%s0] sm:$0x1]
    %v235 = vld [vmem:[%s0 + $0x20] sm:$0x1]
    %s236 = scalar_lea.vmem %s0, 16
    %v237 = vld [vmem:[%s236] sm:$0x1]
    %v238 = vld [vmem:[%s236 + $0x20] sm:$0x1]
    %v239 = vld [vmem:[%s0 + $0x1] sm:$0x1]
    %v240 = vld [vmem:[%s0 + $0x21] sm:$0x1]
    %v243 = vrot.slane %v235, 7
    %vm244 = vcmask 1041409
    %v245 = vsel %vm244, %v243, %v234
    %v249 = vrot.slane %v238, 7
    %v250 = vsel %vm244, %v249, %v237
    %251 = vrot.lane.b32.xlu0 %v250, 64
    %v252 = vpop.permute.xlu0 %251
    %v256 = vrot.slane %v240, 7
    %v257 = vsel %vm244, %v256, %v239
    %vm259 = vcmask 523264
    %v260 = vsel %vm259, %v245, %v252
    %v261 = vld [vmem:[%s236 + $0x1] sm:$0x1]
    %v262 = vld [vmem:[%s236 + $0x21] sm:$0x1]
    %v263 = vld [vmem:[%s0 + $0x2] sm:$0x1]
    %v264 = vld [vmem:[%s0 + $0x22] sm:$0x1]
    %v267 = vrot.slane %v262, 7
    %v268 = vsel %vm244, %v267, %v261
    %269 = vrot.lane.b32.xlu0 %v268, 64
    %v270 = vpop.permute.xlu0 %269
    %v274 = vrot.slane %v264, 7
    %v275 = vsel %vm244, %v274, %v263
    %v276 = vsel %vm259, %v257, %v270
    %v277 = vld [vmem:[%s236 + $0x2] sm:$0x1]
    %v278 = vld [vmem:[%s236 + $0x22] sm:$0x1]
    %v279 = vld [vmem:[%s0 + $0x3] sm:$0x1]
    %v280 = vld [vmem:[%s0 + $0x23] sm:$0x1]
    %v284 = vrot.slane %v278, 7
    %v285 = vsel %vm244, %v284, %v277
    %286 = vrot.lane.b32.xlu0 %v285, 64
    %v287 = vpop.permute.xlu0 %286
    %v291 = vrot.slane %v280, 7
    %v292 = vsel %vm244, %v291, %v279
    %v293 = vsel %vm259, %v275, %v287
    %v294 = vld [vmem:[%s236 + $0x3] sm:$0x1]
    %v295 = vld [vmem:[%s236 + $0x23] sm:$0x1]
    %v296 = vld [vmem:[%s0 + $0x4] sm:$0x1]
    %v297 = vld [vmem:[%s0 + $0x24] sm:$0x1]
    %v301 = vrot.slane %v295, 7
    %v302 = vsel %vm244, %v301, %v294
    %303 = vrot.lane.b32.xlu0 %v302, 64
    %v304 = vpop.permute.xlu0 %303
    %v308 = vrot.slane %v297, 7
    %v309 = vsel %vm244, %v308, %v296
    %v310 = vsel %vm259, %v292, %v304
    %v311 = vld [vmem:[%s236 + $0x4] sm:$0x1]
    %v312 = vld [vmem:[%s236 + $0x24] sm:$0x1]
    %v313 = vld [vmem:[%s0 + $0x5] sm:$0x1]
    %v314 = vld [vmem:[%s0 + $0x25] sm:$0x1]
    %v318 = vrot.slane %v312, 7
    %v319 = vsel %vm244, %v318, %v311
    %320 = vrot.lane.b32.xlu0 %v319, 64
    %v321 = vpop.permute.xlu0 %320
    %v325 = vrot.slane %v314, 7
    %v326 = vsel %vm244, %v325, %v313
    %v328 = vsel %vm259, %v309, %v321
    %v329 = vld [vmem:[%s236 + $0x5] sm:$0x1]
    %v330 = vld [vmem:[%s236 + $0x25] sm:$0x1]
    %v331 = vld [vmem:[%s0 + $0x6] sm:$0x1]
    %v332 = vld [vmem:[%s0 + $0x26] sm:$0x1]
    %v335 = vrot.slane %v330, 7
    %v336 = vsel %vm244, %v335, %v329
    %337 = vrot.lane.b32.xlu0 %v336, 64
    %v338 = vpop.permute.xlu0 %337
    %v342 = vrot.slane %v332, 7
    %v343 = vsel %vm244, %v342, %v331
    %v344 = vsel %vm259, %v326, %v338
    %v345 = vld [vmem:[%s236 + $0x6] sm:$0x1]
    %v346 = vld [vmem:[%s236 + $0x26] sm:$0x1]
    %v347 = vld [vmem:[%s0 + $0x7] sm:$0x1]
    %v348 = vld [vmem:[%s0 + $0x27] sm:$0x1]
    %v352 = vrot.slane %v346, 7
    %v353 = vsel %vm244, %v352, %v345
    %354 = vrot.lane.b32.xlu0 %v353, 64
    %v355 = vpop.permute.xlu0 %354
    %v359 = vrot.slane %v348, 7
    %v360 = vsel %vm244, %v359, %v347
    %v361 = vsel %vm259, %v343, %v355
    %v362 = vld [vmem:[%s236 + $0x7] sm:$0x1]
    %v363 = vld [vmem:[%s236 + $0x27] sm:$0x1]
    %v364 = vld [vmem:[%s0 + $0x8] sm:$0x1]
    %v365 = vld [vmem:[%s0 + $0x28] sm:$0x1]
    %v369 = vrot.slane %v363, 7
    %v370 = vsel %vm244, %v369, %v362
    %371 = vrot.lane.b32.xlu0 %v370, 64
    %v372 = vpop.permute.xlu0 %371
    %v376 = vrot.slane %v365, 7
    %v377 = vsel %vm244, %v376, %v364
    %v378 = vsel %vm259, %v360, %v372
    %v380 = vrot.slane %v276, 6
    %v381 = vrot.slane %v275, 6
    %v385 = vrot.slane %v293, 4
    %v386 = vrot.slane %v292, 4
    %v390 = vrot.slane %v310, 2
    %v391 = vrot.slane %v309, 2
    %v395 = vrot.slane %v344, 6
    %v396 = vrot.slane %v343, 6
    %v400 = vrot.slane %v361, 4
    %v401 = vrot.slane %v360, 4
    %v405 = vrot.slane %v378, 2
    %v406 = vrot.slane %v377, 2
    %vm409 = vcmask 1041408
    %v410 = vsel %vm409, %v260, %v380
    %v411 = vsel %vm409, %v257, %v381
    %vm412 = vcmask 1043456
    %v413 = vsel %vm412, %v410, %v385
    %v414 = vsel %vm412, %v411, %v386
    %vm415 = vcmask 1045504
    %v416 = vsel %vm415, %v413, %v390
    %v417 = vsel %vm415, %v414, %v391
    %v418 = vsel %vm409, %v328, %v395
    %v419 = vsel %vm409, %v326, %v396
    %v420 = vsel %vm412, %v418, %v400
    %v421 = vsel %vm412, %v419, %v401
    %v422 = vsel %vm415, %v420, %v405
    %v423 = vsel %vm415, %v421, %v406
    %v424 = vpack.c.bf16 %v422, %v416
    %v425 = vpack.c.bf16 %v423, %v417
    %v426 = vld [vmem:[#allocation5] sm:$0xff]
    %v427 = vld [vmem:[#allocation5 + $0x8] sm:$0xff]
    %v428 = vld [vmem:[#allocation5 + $0x10] sm:$0xff]
    %v429 = vld [vmem:[#allocation5 + $0x18] sm:$0xff]
    %v430 = vld [vmem:[#allocation5 + $0x20] sm:$0xff]
    %v431 = vld [vmem:[#allocation5 + $0x28] sm:$0xff]
    %v432 = vld [vmem:[#allocation5 + $0x30] sm:$0xff]
    %v433 = vld [vmem:[#allocation5 + $0x38] sm:$0xff]
    %v434 = vld [vmem:[#allocation5 + $0x40] sm:$0xff]
    %v435 = vld [vmem:[#allocation5 + $0x48] sm:$0xff]
    %v436 = vld [vmem:[#allocation5 + $0x50] sm:$0xff]
    %v437 = vld [vmem:[#allocation5 + $0x58] sm:$0xff]
    %v438 = vld [vmem:[#allocation5 + $0x60] sm:$0xff]
    %v439 = vld [vmem:[#allocation5 + $0x68] sm:$0xff]
    %v440 = vld [vmem:[#allocation5 + $0x70] sm:$0xff]
    %v441 = vld [vmem:[#allocation5 + $0x78] sm:$0xff]
    %v442 = vld [vmem:[#allocation5 + $0x80] sm:$0xff]
    %v443 = vld [vmem:[#allocation5 + $0x88] sm:$0xff]
    %v444 = vld [vmem:[#allocation5 + $0x90] sm:$0xff]
    %v445 = vld [vmem:[#allocation5 + $0x98] sm:$0xff]
    %v446 = vld [vmem:[#allocation5 + $0xa0] sm:$0xff]
    %v447 = vld [vmem:[#allocation5 + $0xa8] sm:$0xff]
    %v448 = vld [vmem:[#allocation5 + $0xb0] sm:$0xff]
    %v449 = vld [vmem:[#allocation5 + $0xb8] sm:$0xff]
    %v450 = vld [vmem:[%s2] sm:$0x3]
    %v452 = vlaneseq
    %v453 = vshrl.u32 %v452, 7
    %v454 = vsub.s32 0, %v453
    %v455 = vrot.slane %v450, %v454
    %v456 = vlaneseq
    %v457 = vshrl.u32 %v456, 7
    %v458 = vsub.s32 1, %v457
    %v459 = vrot.slane %v450, %v458
    %v486 = vunpack.c.l.b16 %v426
    %v487 = vunpack.c.h.b16 %v426
    %v488 = vunpack.c.l.b16 %v427
    %v489 = vunpack.c.h.b16 %v427
    %v490 = vunpack.c.l.b16 %v428
    %v491 = vunpack.c.h.b16 %v428
    %v492 = vunpack.c.l.b16 %v429
    %v493 = vunpack.c.h.b16 %v429
    %v494 = vunpack.c.l.b16 %v430
    %v495 = vunpack.c.h.b16 %v430
    %v496 = vunpack.c.l.b16 %v431
    %v497 = vunpack.c.h.b16 %v431
    %v498 = vunpack.c.l.b16 %v432
    %v499 = vunpack.c.h.b16 %v432
    %v500 = vunpack.c.l.b16 %v433
    %v501 = vunpack.c.h.b16 %v433
    %v502 = vunpack.c.l.b16 %v434
    %v503 = vunpack.c.h.b16 %v434
    %v504 = vunpack.c.l.b16 %v435
    %v505 = vunpack.c.h.b16 %v435
    %v506 = vunpack.c.l.b16 %v436
    %v507 = vunpack.c.h.b16 %v436
    %v508 = vunpack.c.l.b16 %v437
    %v509 = vunpack.c.h.b16 %v437
    %v510 = vunpack.c.l.b16 %v438
    %v511 = vunpack.c.h.b16 %v438
    %v512 = vunpack.c.l.b16 %v439
    %v513 = vunpack.c.h.b16 %v439
    %v514 = vunpack.c.l.b16 %v440
    %v515 = vunpack.c.h.b16 %v440
    %v516 = vunpack.c.l.b16 %v441
    %v517 = vunpack.c.h.b16 %v441
    %v518 = vunpack.c.l.b16 %v442
    %v519 = vunpack.c.h.b16 %v442
    %v520 = vunpack.c.l.b16 %v443
    %v521 = vunpack.c.h.b16 %v443
    %v522 = vunpack.c.l.b16 %v444
    %v523 = vunpack.c.h.b16 %v444
    %v524 = vunpack.c.l.b16 %v445
    %v525 = vunpack.c.h.b16 %v445
    %v526 = vunpack.c.l.b16 %v446
    %v527 = vunpack.c.h.b16 %v446
    %v528 = vunpack.c.l.b16 %v447
    %v529 = vunpack.c.h.b16 %v447
    %v530 = vunpack.c.l.b16 %v448
    %v531 = vunpack.c.h.b16 %v448
    %v532 = vunpack.c.l.b16 %v449
    %v533 = vunpack.c.h.b16 %v449
    %v534 = vpack.c.b16 %v488, %v486
    %v535 = vpack.c.b16 %v489, %v487
    %v536 = vpack.c.b16 %v492, %v490
    %v537 = vpack.c.b16 %v493, %v491
    %v538 = vpack.c.b16 %v496, %v494
    %v539 = vpack.c.b16 %v497, %v495
    %v540 = vpack.c.b16 %v500, %v498
    %v541 = vpack.c.b16 %v501, %v499
    %v542 = vpack.c.b16 %v504, %v502
    %v543 = vpack.c.b16 %v505, %v503
    %v544 = vpack.c.b16 %v508, %v506
    %v545 = vpack.c.b16 %v509, %v507
    %v546 = vpack.c.b16 %v512, %v510
    %v547 = vpack.c.b16 %v513, %v511
    %v548 = vpack.c.b16 %v516, %v514
    %v549 = vpack.c.b16 %v517, %v515
    %v550 = vpack.c.b16 %v520, %v518
    %v551 = vpack.c.b16 %v521, %v519
    %v552 = vpack.c.b16 %v524, %v522
    %v553 = vpack.c.b16 %v525, %v523
    %v554 = vpack.c.b16 %v528, %v526
    %v555 = vpack.c.b16 %v529, %v527
    %v556 = vpack.c.b16 %v532, %v530
    %v557 = vpack.c.b16 %v533, %v531
    %v583 = vsel %vm259, %v425, 0
    %585 = vmatprep.subr.bf16.mxu0 %v549
    %586 = vmatpush1.bf16.msra.mxu0 %v548
    %587 = vmatprep.subr.bf16.mxu0 %v547
    %588 = vmatpush1.bf16.msra.mxu0 %v546
    %589 = vmatprep.subr.bf16.mxu0 %v545
    %590 = vmatpush1.bf16.msra.mxu0 %v544
    %591 = vmatprep.subr.bf16.mxu0 %v543
    %592 = vmatpush1.bf16.msra.mxu0 %v542
    %593 = vmatprep.subr.bf16.mxu0 %v541
    %594 = vmatpush1.bf16.msra.mxu0 %v540
    %595 = vmatprep.subr.bf16.mxu0 %v539
    %596 = vmatpush1.bf16.msra.mxu0 %v538
    %597 = vmatprep.subr.bf16.mxu0 %v537
    %598 = vmatpush1.bf16.msra.mxu0 %v536
    %599 = vmatprep.subr.bf16.mxu0 %v535
    %600 = vmatpush1.bf16.msra.mxu0 %v534
    %601 = vmatprep.subr.bf16.mxu0 0
    %602 = vmatpush2.bf16.msra.mxu0 0
    %603 = vmatprep.subr.bf16.mxu0 0
    %604 = vmatpush2.bf16.msra.mxu0 0
    %605 = vmatprep.subr.bf16.mxu0 0
    %606 = vmatpush2.bf16.msra.mxu0 0
    %607 = vmatprep.subr.bf16.mxu0 0
    %608 = vmatpush2.bf16.msra.mxu0 0
    %609 = vmatprep.subr.bf16.mxu0 %v557
    %610 = vmatpush2.bf16.msra.mxu0 %v556
    %611 = vmatprep.subr.bf16.mxu0 %v555
    %612 = vmatpush2.bf16.msra.mxu0 %v554
    %613 = vmatprep.subr.bf16.mxu0 %v553
    %614 = vmatpush2.bf16.msra.mxu0 %v552
    %615 = vmatprep.subr.bf16.mxu0 %v551
    %616 = vmatpush2.bf16.msra.mxu0 %v550
    %617 = vmatprep.mubr.bf16.mxu0 %v583
    %618 = vmatmul.mubr.bf16.gmra.mxu0 %v424
    %v619 = vpop.f32.mrf.mxu0
    %v620 = vadd.f32 %v455, %v619
    %v621 = vpop.f32.mrf.mxu0
    %v622 = vadd.f32 %v459, %v621
    %v623 = vpop.f32.mrf.mxu0
    %v624 = vadd.f32 %v455, %v623
    %v625 = vpop.f32.mrf.mxu0
    %v626 = vadd.f32 %v459, %v625
    %627 = vdwg.mxu0
    %v628 = vmax.f32 %v620, 0.0
    %v629 = vmax.f32 %v622, 0.0
    %v630 = vmax.f32 %v624, 0.0
    %v631 = vmax.f32 %v626, 0.0
    %v632 = vadd.f32 %v628, %v630
    %v633 = vrot.slane %v632, 4
    %v634 = vadd.f32 %v632, %v633
    %v635 = vrot.slane %v634, 2
    %v636 = vadd.f32 %v634, %v635
    %v637 = vrot.slane %v636, 1
    %v638 = vadd.f32 %v636, %v637
    %v639 = vadd.f32 %v629, %v631
    %v640 = vrot.slane %v639, 4
    %v641 = vadd.f32 %v639, %v640
    %v642 = vrot.slane %v641, 2
    %v643 = vadd.f32 %v641, %v642
    %v644 = vrot.slane %v643, 1
    %v645 = vadd.f32 %v643, %v644
    %v646 = vmul.f32 %v628, %v628
    %v647 = vmul.f32 %v629, %v629
    %v648 = vmul.f32 %v630, %v630
    %v649 = vmul.f32 %v631, %v631
    %v650 = vadd.f32 %v646, %v648
    %v651 = vrot.slane %v650, 4
    %v652 = vadd.f32 %v650, %v651
    %v653 = vrot.slane %v652, 2
    %v654 = vadd.f32 %v652, %v653
    %v655 = vrot.slane %v654, 1
    %v656 = vadd.f32 %v654, %v655
    %v657 = vadd.f32 %v647, %v649
    %v658 = vrot.slane %v657, 4
    %v659 = vadd.f32 %v657, %v658
    %v660 = vrot.slane %v659, 2
    %v661 = vadd.f32 %v659, %v660
    %v662 = vrot.slane %v661, 1
    %v663 = vadd.f32 %v661, %v662
    %665 = vrot.lane.b32.xlu0 %v638, 96
    %v666 = vpop.permute.xlu0 %665
    %v668 = vadd.f32 %v638, %v666
    %670 = vrot.lane.b32.xlu0 %v656, 96
    %v671 = vpop.permute.xlu0 %670
    %v673 = vadd.f32 %v656, %v671
    %674 = vrot.lane.b32.xlu0 %v638, 64
    %v675 = vpop.permute.xlu0 %674
    %v677 = vadd.f32 %v668, %v675
    %678 = vrot.lane.b32.xlu0 %v656, 64
    %v679 = vpop.permute.xlu0 %678
    %v681 = vadd.f32 %v673, %v679
    %682 = vrot.lane.b32.xlu0 %v638, 32
    %v683 = vpop.permute.xlu0 %682
    %v685 = vadd.f32 %v677, %v683
    %686 = vrot.lane.b32.xlu0 %v656, 32
    %v687 = vpop.permute.xlu0 %686
    %v689 = vadd.f32 %v681, %v687
    %v690 = vadd.f32 %v685, %v645
    %v691 = vadd.f32 %v689, %v663
    %693 = vrot.lane.b32.xlu0 %v645, 96
    %v694 = vpop.permute.xlu0 %693
    %v696 = vadd.f32 %v690, %v694
    %698 = vrot.lane.b32.xlu0 %v663, 96
    %v699 = vpop.permute.xlu0 %698
    %v701 = vadd.f32 %v691, %v699
    %702 = vrot.lane.b32.xlu0 %v645, 64
    %v703 = vpop.permute.xlu0 %702
    %v705 = vadd.f32 %v696, %v703
    %706 = vrot.lane.b32.xlu0 %v663, 64
    %v707 = vpop.permute.xlu0 %706
    %v709 = vadd.f32 %v701, %v707
    %710 = vrot.lane.b32.xlu0 %v645, 32
    %v711 = vpop.permute.xlu0 %710
    %v713 = vadd.f32 %v705, %v711
    %714 = vrot.lane.b32.xlu0 %v663, 32
    %v715 = vpop.permute.xlu0 %714
    %v717 = vadd.f32 %v709, %v715
    %v718 = vrcp.pop 128.0
    %v719 = vmul.f32 %v713, %v718
    %v720 = vmul.f32 %v717, %v718
    %v721 = vmul.f32 %v719, %v719
    %v722 = vsub.f32 %v720, %v721
    %v723 = vadd.f32 %v722, 1e-05
    %v724 = vrsqrt.pop %v723
    %v725 = vld [vmem:[%s3] sm:$0x1]
    %v726 = vmul.f32 %v725, %v724
    %v727 = vld [vmem:[#allocation8] sm:$0x1]
    %v728 = vmul.f32 %v719, %v726
    %v729 = vsub.f32 %v727, %v728
    %v731 = vlaneseq
    %v732 = vshrl.u32 %v731, 7
    %v733 = vsub.s32 0, %v732
    %v734 = vrot.slane %v726, %v733
    %735 = vrot.lane.b32.xlu0 %v734, 32
    %v736 = vpop.permute.xlu0 %735
    %738 = vrot.lane.b32.xlu0 %v734, 64
    %v739 = vpop.permute.xlu0 %738
    %741 = vrot.lane.b32.xlu0 %v734, 96
    %v742 = vpop.permute.xlu0 %741
    %vm744 = vcmask 261120
    %v745 = vsel %vm744, %v726, %v736
    %v746 = vsel %vm259, %v745, %v739
    %vm747 = vcmask 785408
    %v748 = vsel %vm747, %v746, %v742
    %v750 = vlaneseq
    %v751 = vshrl.u32 %v750, 7
    %v752 = vsub.s32 0, %v751
    %v753 = vrot.slane %v729, %v752
    %754 = vrot.lane.b32.xlu0 %v753, 32
    %v755 = vpop.permute.xlu0 %754
    %757 = vrot.lane.b32.xlu0 %v753, 64
    %v758 = vpop.permute.xlu0 %757
    %760 = vrot.lane.b32.xlu0 %v753, 96
    %v761 = vpop.permute.xlu0 %760
    %v763 = vsel %vm744, %v729, %v755
    %v764 = vsel %vm259, %v763, %v758
    %v765 = vsel %vm747, %v764, %v761
    %v766 = vlaneseq
    %v767 = vshrl.u32 %v766, 7
    %v768 = vsub.s32 0, %v767
    %v769 = vrot.slane %v748, %v768
    %v770 = vmul.f32 %v628, %v769
    %v771 = vmul.f32 %v629, %v769
    %v772 = vmul.f32 %v630, %v769
    %v773 = vmul.f32 %v631, %v769
    %v774 = vlaneseq
    %v775 = vshrl.u32 %v774, 7
    %v776 = vsub.s32 0, %v775
    %v777 = vrot.slane %v765, %v776
    %v778 = vadd.f32 %v770, %v777
    %v779 = vadd.f32 %v771, %v777
    %v780 = vadd.f32 %v772, %v777
    %v781 = vadd.f32 %v773, %v777
    %v784 = vcombine.low %v778, %v779
    %v786 = vunpack.c.l.s4 1966171168
    %v787 = vunpack.c.0.s8 %v786
    %v788 = vlaneseq
    %v789 = vshrl.u32 %v788, 7
    %v790 = vsub.s32 %v787, %v789
    %v791 = vrot.slane %v784, %v790
    %v792 = vcombine.high %v791, %v791
    %v794 = vunpack.c.l.s4 1966171168
    %v795 = vunpack.c.0.s8 %v794
    %v796 = vlaneseq
    %v797 = vshrl.u32 %v796, 7
    %v798 = vsub.s32 %v795, %v797
    %v799 = vrot.slane %v791, %v798
    %v801 = vunpack.c.l.s4 1966171168
    %v802 = vunpack.c.0.s8 %v801
    %v803 = vlaneseq
    %v804 = vshrl.u32 %v803, 7
    %v805 = vsub.s32 %v802, %v804
    %v806 = vrot.slane %v792, %v805
    %s809 = scalar_lea.vmem [#allocation2], 16
    %v810 = vlaneseq
    %vm811 = vcmp.ge.s32.totalorder %v810, 0
    %vm812 = vcmp.lt.s32.totalorder %v810, 256
    %vm813 = vmand %vm811, %vm812
    %814 = vst.msk [vmem:[%s809] ss:$8 sm:$0x3] %vm813, %v799
    %815 = vst.msk [vmem:[%s809] ss:$8 sm:$0x0] %vm813, %v799
    %s816 = scalar_lea.vmem %s809, 32 [#allocation2]
    %817 = vst.msk [vmem:[%s816] ss:$8 sm:$0x3] %vm813, %v806
    %818 = vst.msk [vmem:[%s816] ss:$8 sm:$0x0] %vm813, %v806
    %v819 = vcombine.high %v799, %v799
    %v820 = vcombine.high %v806, %v806
    %s823 = scalar_lea.vmem [#allocation2], 1
    %824 = vst.msk [vmem:[%s823] ss:$8 sm:$0x3] %vm813, %v819
    %825 = vst.msk [vmem:[%s823] ss:$8 sm:$0x0] %vm813, %v819
    %s826 = scalar_lea.vmem [#allocation2], 33
    %827 = vst.msk [vmem:[%s826] ss:$8 sm:$0x3] %vm813, %v820
    %828 = vst.msk [vmem:[%s826] ss:$8 sm:$0x0] %vm813, %v820
    %v829 = vcombine.high %v778, %v779
    %v831 = vunpack.c.l.s4 1966171168
    %v832 = vunpack.c.0.s8 %v831
    %v833 = vlaneseq
    %v834 = vshrl.u32 %v833, 7
    %v835 = vsub.s32 %v832, %v834
    %v836 = vrot.slane %v829, %v835
    %v837 = vcombine.high %v836, %v836
    %v839 = vunpack.c.l.s4 1966171168
    %v840 = vunpack.c.0.s8 %v839
    %v841 = vlaneseq
    %v842 = vshrl.u32 %v841, 7
    %v843 = vsub.s32 %v840, %v842
    %v844 = vrot.slane %v836, %v843
    %v846 = vunpack.c.l.s4 1966171168
    %v847 = vunpack.c.0.s8 %v846
    %v848 = vlaneseq
    %v849 = vshrl.u32 %v848, 7
    %v850 = vsub.s32 %v847, %v849
    %v851 = vrot.slane %v837, %v850
    %s854 = scalar_lea.vmem %s809, 1 [#allocation2]
    %855 = vst.msk [vmem:[%s854] ss:$8 sm:$0x3] %vm813, %v844
    %856 = vst.msk [vmem:[%s854] ss:$8 sm:$0x0] %vm813, %v844
    %s857 = scalar_lea.vmem %s809, 33 [#allocation2]
    %858 = vst.msk [vmem:[%s857] ss:$8 sm:$0x3] %vm813, %v851
    %859 = vst.msk [vmem:[%s857] ss:$8 sm:$0x0] %vm813, %v851
    %v860 = vcombine.high %v844, %v844
    %v861 = vcombine.high %v851, %v851
    %s864 = scalar_lea.vmem [#allocation2], 2
    %865 = vst.msk [vmem:[%s864] ss:$8 sm:$0x3] %vm813, %v860
    %866 = vst.msk [vmem:[%s864] ss:$8 sm:$0x0] %vm813, %v860
    %s867 = scalar_lea.vmem [#allocation2], 34
    %868 = vst.msk [vmem:[%s867] ss:$8 sm:$0x3] %vm813, %v861
    %869 = vst.msk [vmem:[%s867] ss:$8 sm:$0x0] %vm813, %v861
    %v872 = vcombine.low %v780, %v781
    %v874 = vunpack.c.l.s4 1966171168
    %v875 = vunpack.c.0.s8 %v874
    %v876 = vlaneseq
    %v877 = vshrl.u32 %v876, 7
    %v878 = vsub.s32 %v875, %v877
    %v879 = vrot.slane %v872, %v878
    %v880 = vcombine.high %v879, %v879
    %v882 = vunpack.c.l.s4 1966171168
    %v883 = vunpack.c.0.s8 %v882
    %v884 = vlaneseq
    %v885 = vshrl.u32 %v884, 7
    %v886 = vsub.s32 %v883, %v885
    %v887 = vrot.slane %v879, %v886
    %v889 = vunpack.c.l.s4 1966171168
    %v890 = vunpack.c.0.s8 %v889
    %v891 = vlaneseq
    %v892 = vshrl.u32 %v891, 7
    %v893 = vsub.s32 %v890, %v892
    %v894 = vrot.slane %v880, %v893
    %s897 = scalar_lea.vmem %s809, 2 [#allocation2]
    %898 = vst.msk [vmem:[%s897] ss:$8 sm:$0x3] %vm813, %v887
    %899 = vst.msk [vmem:[%s897] ss:$8 sm:$0x0] %vm813, %v887
    %s900 = scalar_lea.vmem %s809, 34 [#allocation2]
    %901 = vst.msk [vmem:[%s900] ss:$8 sm:$0x3] %vm813, %v894
    %902 = vst.msk [vmem:[%s900] ss:$8 sm:$0x0] %vm813, %v894
    %v903 = vcombine.high %v887, %v887
    %v904 = vcombine.high %v894, %v894
    %s907 = scalar_lea.vmem [#allocation2], 3
    %908 = vst.msk [vmem:[%s907] ss:$8 sm:$0x3] %vm813, %v903
    %909 = vst.msk [vmem:[%s907] ss:$8 sm:$0x0] %vm813, %v903
    %s910 = scalar_lea.vmem [#allocation2], 35
    %911 = vst.msk [vmem:[%s910] ss:$8 sm:$0x3] %vm813, %v904
    %912 = vst.msk [vmem:[%s910] ss:$8 sm:$0x0] %vm813, %v904
    %v913 = vcombine.high %v780, %v781
    %v915 = vunpack.c.l.s4 1966171168
    %v916 = vunpack.c.0.s8 %v915
    %v917 = vlaneseq
    %v918 = vshrl.u32 %v917, 7
    %v919 = vsub.s32 %v916, %v918
    %v920 = vrot.slane %v913, %v919
    %v921 = vcombine.high %v920, %v920
    %v923 = vunpack.c.l.s4 1966171168
    %v924 = vunpack.c.0.s8 %v923
    %v925 = vlaneseq
    %v926 = vshrl.u32 %v925, 7
    %v927 = vsub.s32 %v924, %v926
    %v928 = vrot.slane %v920, %v927
    %v930 = vunpack.c.l.s4 1966171168
    %v931 = vunpack.c.0.s8 %v930
    %v932 = vlaneseq
    %v933 = vshrl.u32 %v932, 7
    %v934 = vsub.s32 %v931, %v933
    %v935 = vrot.slane %v921, %v934
    %s938 = scalar_lea.vmem %s809, 3 [#allocation2]
    %939 = vst.msk [vmem:[%s938] ss:$8 sm:$0x3] %vm813, %v928
    %940 = vst.msk [vmem:[%s938] ss:$8 sm:$0x0] %vm813, %v928
    %s941 = scalar_lea.vmem %s809, 35 [#allocation2]
    %942 = vst.msk [vmem:[%s941] ss:$8 sm:$0x3] %vm813, %v935
    %943 = vst.msk [vmem:[%s941] ss:$8 sm:$0x0] %vm813, %v935
    %v944 = vcombine.high %v928, %v928
    %v945 = vcombine.high %v935, %v935
    %s948 = scalar_lea.vmem [#allocation2], 4
    %949 = vst.msk [vmem:[%s948] ss:$8 sm:$0x3] %vm813, %v944
    %950 = vst.msk [vmem:[%s948] ss:$8 sm:$0x0] %vm813, %v944
    %s951 = scalar_lea.vmem [#allocation2], 36
    %952 = vst.msk [vmem:[%s951] ss:$8 sm:$0x3] %vm813, %v945
    %953 = vst.msk [vmem:[%s951] ss:$8 sm:$0x0] %vm813, %v945
    %954 = vst.msk [vmem:[#allocation2] ss:$8 sm:$0x3] %vm813, 0.0
    %955 = vst.msk [vmem:[#allocation2] ss:$8 sm:$0x0] %vm813, 0.0
    %s956 = scalar_lea.vmem [#allocation2], 32
    %957 = vst.msk [vmem:[%s956] ss:$8 sm:$0x3] %vm813, 0.0
    %958 = vst.msk [vmem:[%s956] ss:$8 sm:$0x0] %vm813, 0.0
    %s959 = scalar_lea.vmem %s809, 4 [#allocation2]
    %960 = vst.msk [vmem:[%s959] ss:$8 sm:$0x3] %vm813, 0.0
    %961 = vst.msk [vmem:[%s959] ss:$8 sm:$0x0] %vm813, 0.0
    %s962 = scalar_lea.vmem %s809, 36 [#allocation2]
    %963 = vst.msk [vmem:[%s962] ss:$8 sm:$0x3] %vm813, 0.0
    %964 = vst.msk [vmem:[%s962] ss:$8 sm:$0x0] %vm813, 0.0
    %v965 = vld [vmem:[#allocation2] ss:$8 sm:$0x3]
    %v966 = vld [vmem:[%s956] ss:$8 sm:$0x3]
    %v967 = vld [vmem:[%s809] ss:$8 sm:$0x3]
    %v968 = vld [vmem:[%s816] ss:$8 sm:$0x3]
    %v969 = vld [vmem:[%s823] ss:$8 sm:$0x3]
    %v970 = vld [vmem:[%s826] ss:$8 sm:$0x3]
    %v973 = vcombine.low %v965, %v966
    %v975 = vunpack.c.l.s4 1966171168
    %v976 = vunpack.c.0.s8 %v975
    %v977 = vlaneseq
    %v978 = vshrl.u32 %v977, 7
    %v979 = vsub.s32 %v976, %v978
    %v980 = vrot.slane %v973, %v979
    %v981 = vcombine.high %v980, %v980
    %v983 = vunpack.c.l.s4 1966171168
    %v984 = vunpack.c.0.s8 %v983
    %v985 = vlaneseq
    %v986 = vshrl.u32 %v985, 7
    %v987 = vsub.s32 %v984, %v986
    %v988 = vrot.slane %v980, %v987
    %v990 = vunpack.c.l.s4 1966171168
    %v991 = vunpack.c.0.s8 %v990
    %v992 = vlaneseq
    %v993 = vshrl.u32 %v992, 7
    %v994 = vsub.s32 %v991, %v993
    %v995 = vrot.slane %v981, %v994
    %v1000 = vcombine.low %v967, %v968
    %v1002 = vunpack.c.l.s4 1966171168
    %v1003 = vunpack.c.0.s8 %v1002
    %v1004 = vlaneseq
    %v1005 = vshrl.u32 %v1004, 7
    %v1006 = vsub.s32 %v1003, %v1005
    %v1007 = vrot.slane %v1000, %v1006
    %v1008 = vcombine.high %v1007, %v1007
    %v1010 = vunpack.c.l.s4 1966171168
    %v1011 = vunpack.c.0.s8 %v1010
    %v1012 = vlaneseq
    %v1013 = vshrl.u32 %v1012, 7
    %v1014 = vsub.s32 %v1011, %v1013
    %v1015 = vrot.slane %v1007, %v1014
    %v1017 = vunpack.c.l.s4 1966171168
    %v1018 = vunpack.c.0.s8 %v1017
    %v1019 = vlaneseq
    %v1020 = vshrl.u32 %v1019, 7
    %v1021 = vsub.s32 %v1018, %v1020
    %v1022 = vrot.slane %v1008, %v1021
    %v1027 = vcombine.low %v969, %v970
    %v1029 = vunpack.c.l.s4 1966171168
    %v1030 = vunpack.c.0.s8 %v1029
    %v1031 = vlaneseq
    %v1032 = vshrl.u32 %v1031, 7
    %v1033 = vsub.s32 %v1030, %v1032
    %v1034 = vrot.slane %v1027, %v1033
    %v1035 = vcombine.high %v1034, %v1034
    %v1037 = vunpack.c.l.s4 1966171168
    %v1038 = vunpack.c.0.s8 %v1037
    %v1039 = vlaneseq
    %v1040 = vshrl.u32 %v1039, 7
    %v1041 = vsub.s32 %v1038, %v1040
    %v1042 = vrot.slane %v1034, %v1041
    %v1044 = vunpack.c.l.s4 1966171168
    %v1045 = vunpack.c.0.s8 %v1044
    %v1046 = vlaneseq
    %v1047 = vshrl.u32 %v1046, 7
    %v1048 = vsub.s32 %v1045, %v1047
    %v1049 = vrot.slane %v1035, %v1048
    %v1052 = vld [vmem:[%s854] ss:$8 sm:$0x3]
    %v1053 = vld [vmem:[%s857] ss:$8 sm:$0x3]
    %v1054 = vld [vmem:[%s864] ss:$8 sm:$0x3]
    %v1055 = vld [vmem:[%s867] ss:$8 sm:$0x3]
    %v1058 = vcombine.low %v1052, %v1053
    %v1060 = vunpack.c.l.s4 1966171168
    %v1061 = vunpack.c.0.s8 %v1060
    %v1062 = vlaneseq
    %v1063 = vshrl.u32 %v1062, 7
    %v1064 = vsub.s32 %v1061, %v1063
    %v1065 = vrot.slane %v1058, %v1064
    %v1066 = vcombine.high %v1065, %v1065
    %v1068 = vunpack.c.l.s4 1966171168
    %v1069 = vunpack.c.0.s8 %v1068
    %v1070 = vlaneseq
    %v1071 = vshrl.u32 %v1070, 7
    %v1072 = vsub.s32 %v1069, %v1071
    %v1073 = vrot.slane %v1065, %v1072
    %v1075 = vunpack.c.l.s4 1966171168
    %v1076 = vunpack.c.0.s8 %v1075
    %v1077 = vlaneseq
    %v1078 = vshrl.u32 %v1077, 7
    %v1079 = vsub.s32 %v1076, %v1078
    %v1080 = vrot.slane %v1066, %v1079
    %v1083 = vcombine.low %v1054, %v1055
    %v1085 = vunpack.c.l.s4 1966171168
    %v1086 = vunpack.c.0.s8 %v1085
    %v1087 = vlaneseq
    %v1088 = vshrl.u32 %v1087, 7
    %v1089 = vsub.s32 %v1086, %v1088
    %v1090 = vrot.slane %v1083, %v1089
    %v1091 = vcombine.high %v1090, %v1090
    %v1093 = vunpack.c.l.s4 1966171168
    %v1094 = vunpack.c.0.s8 %v1093
    %v1095 = vlaneseq
    %v1096 = vshrl.u32 %v1095, 7
    %v1097 = vsub.s32 %v1094, %v1096
    %v1098 = vrot.slane %v1090, %v1097
    %v1100 = vunpack.c.l.s4 1966171168
    %v1101 = vunpack.c.0.s8 %v1100
    %v1102 = vlaneseq
    %v1103 = vshrl.u32 %v1102, 7
    %v1104 = vsub.s32 %v1101, %v1103
    %v1105 = vrot.slane %v1091, %v1104
    %v1106 = vld [vmem:[%s897] ss:$8 sm:$0x3]
    %v1107 = vld [vmem:[%s900] ss:$8 sm:$0x3]
    %v1108 = vld [vmem:[%s907] ss:$8 sm:$0x3]
    %v1109 = vld [vmem:[%s910] ss:$8 sm:$0x3]
    %v1112 = vcombine.low %v1106, %v1107
    %v1114 = vunpack.c.l.s4 1966171168
    %v1115 = vunpack.c.0.s8 %v1114
    %v1116 = vlaneseq
    %v1117 = vshrl.u32 %v1116, 7
    %v1118 = vsub.s32 %v1115, %v1117
    %v1119 = vrot.slane %v1112, %v1118
    %v1120 = vcombine.high %v1119, %v1119
    %v1122 = vunpack.c.l.s4 1966171168
    %v1123 = vunpack.c.0.s8 %v1122
    %v1124 = vlaneseq
    %v1125 = vshrl.u32 %v1124, 7
    %v1126 = vsub.s32 %v1123, %v1125
    %v1127 = vrot.slane %v1119, %v1126
    %v1129 = vunpack.c.l.s4 1966171168
    %v1130 = vunpack.c.0.s8 %v1129
    %v1131 = vlaneseq
    %v1132 = vshrl.u32 %v1131, 7
    %v1133 = vsub.s32 %v1130, %v1132
    %v1134 = vrot.slane %v1120, %v1133
    %v1137 = vcombine.low %v1108, %v1109
    %v1139 = vunpack.c.l.s4 1966171168
    %v1140 = vunpack.c.0.s8 %v1139
    %v1141 = vlaneseq
    %v1142 = vshrl.u32 %v1141, 7
    %v1143 = vsub.s32 %v1140, %v1142
    %v1144 = vrot.slane %v1137, %v1143
    %v1145 = vcombine.high %v1144, %v1144
    %v1147 = vunpack.c.l.s4 1966171168
    %v1148 = vunpack.c.0.s8 %v1147
    %v1149 = vlaneseq
    %v1150 = vshrl.u32 %v1149, 7
    %v1151 = vsub.s32 %v1148, %v1150
    %v1152 = vrot.slane %v1144, %v1151
    %v1154 = vunpack.c.l.s4 1966171168
    %v1155 = vunpack.c.0.s8 %v1154
    %v1156 = vlaneseq
    %v1157 = vshrl.u32 %v1156, 7
    %v1158 = vsub.s32 %v1155, %v1157
    %v1159 = vrot.slane %v1145, %v1158
    %v1160 = vld [vmem:[%s938] ss:$8 sm:$0x3]
    %v1161 = vld [vmem:[%s941] ss:$8 sm:$0x3]
    %v1162 = vld [vmem:[%s948] ss:$8 sm:$0x3]
    %v1163 = vld [vmem:[%s951] ss:$8 sm:$0x3]
    %v1166 = vcombine.low %v1160, %v1161
    %v1168 = vunpack.c.l.s4 1966171168
    %v1169 = vunpack.c.0.s8 %v1168
    %v1170 = vlaneseq
    %v1171 = vshrl.u32 %v1170, 7
    %v1172 = vsub.s32 %v1169, %v1171
    %v1173 = vrot.slane %v1166, %v1172
    %v1174 = vcombine.high %v1173, %v1173
    %v1176 = vunpack.c.l.s4 1966171168
    %v1177 = vunpack.c.0.s8 %v1176
    %v1178 = vlaneseq
    %v1179 = vshrl.u32 %v1178, 7
    %v1180 = vsub.s32 %v1177, %v1179
    %v1181 = vrot.slane %v1173, %v1180
    %v1183 = vunpack.c.l.s4 1966171168
    %v1184 = vunpack.c.0.s8 %v1183
    %v1185 = vlaneseq
    %v1186 = vshrl.u32 %v1185, 7
    %v1187 = vsub.s32 %v1184, %v1186
    %v1188 = vrot.slane %v1174, %v1187
    %v1191 = vcombine.low %v1162, %v1163
    %v1193 = vunpack.c.l.s4 1966171168
    %v1194 = vunpack.c.0.s8 %v1193
    %v1195 = vlaneseq
    %v1196 = vshrl.u32 %v1195, 7
    %v1197 = vsub.s32 %v1194, %v1196
    %v1198 = vrot.slane %v1191, %v1197
    %v1199 = vcombine.high %v1198, %v1198
    %v1201 = vunpack.c.l.s4 1966171168
    %v1202 = vunpack.c.0.s8 %v1201
    %v1203 = vlaneseq
    %v1204 = vshrl.u32 %v1203, 7
    %v1205 = vsub.s32 %v1202, %v1204
    %v1206 = vrot.slane %v1198, %v1205
    %v1208 = vunpack.c.l.s4 1966171168
    %v1209 = vunpack.c.0.s8 %v1208
    %v1210 = vlaneseq
    %v1211 = vshrl.u32 %v1210, 7
    %v1212 = vsub.s32 %v1209, %v1211
    %v1213 = vrot.slane %v1199, %v1212
    %v1214 = vrot.slane %v1042, 6
    %v1215 = vrot.slane %v1049, 6
    %v1216 = vrot.slane %v1073, 6
    %v1217 = vrot.slane %v1080, 6
    %v1218 = vrot.slane %v1098, 6
    %v1219 = vrot.slane %v1105, 6
    %v1226 = vrot.slane %v1098, 4
    %v1227 = vrot.slane %v1105, 4
    %v1228 = vrot.slane %v1127, 4
    %v1229 = vrot.slane %v1134, 4
    %v1230 = vrot.slane %v1152, 4
    %v1231 = vrot.slane %v1159, 4
    %v1238 = vrot.slane %v1152, 2
    %v1239 = vrot.slane %v1159, 2
    %v1240 = vrot.slane %v1181, 2
    %v1241 = vrot.slane %v1188, 2
    %v1242 = vrot.slane %v1206, 2
    %v1243 = vrot.slane %v1213, 2
    %v1250 = vsel %vm409, %v988, %v1214
    %v1251 = vsel %vm409, %v995, %v1215
    %v1252 = vsel %vm409, %v1015, %v1216
    %v1253 = vsel %vm409, %v1022, %v1217
    %v1254 = vsel %vm409, %v1042, %v1218
    %v1255 = vsel %vm409, %v1049, %v1219
    %v1256 = vsel %vm412, %v1250, %v1226
    %v1257 = vsel %vm412, %v1251, %v1227
    %v1258 = vsel %vm412, %v1252, %v1228
    %v1259 = vsel %vm412, %v1253, %v1229
    %v1260 = vsel %vm412, %v1254, %v1230
    %v1261 = vsel %vm412, %v1255, %v1231
    %v1262 = vsel %vm415, %v1256, %v1238
    %v1263 = vsel %vm415, %v1257, %v1239
    %v1264 = vsel %vm415, %v1258, %v1240
    %v1265 = vsel %vm415, %v1259, %v1241
    %v1266 = vsel %vm415, %v1260, %v1242
    %v1267 = vsel %vm415, %v1261, %v1243
    %v1268 = vpack.c.bf16 %v1262, %v1262
    %v1269 = vpack.c.bf16 %v1263, %v1263
    %v1270 = vpack.c.bf16 %v1264, %v1264
    %v1271 = vpack.c.bf16 %v1265, %v1265
    %v1272 = vpack.c.bf16 %v1266, %v1266
    %v1273 = vpack.c.bf16 %v1267, %v1267
    %v1274 = vld [vmem:[#allocation10] sm:$0xff]
    %v1275 = vld [vmem:[#allocation10 + $0x8] sm:$0xff]
    %v1276 = vld [vmem:[#allocation10 + $0x10] sm:$0xff]
    %v1277 = vld [vmem:[#allocation10 + $0x18] sm:$0xff]
    %v1278 = vld [vmem:[#allocation10 + $0x20] sm:$0xff]
    %v1279 = vld [vmem:[#allocation10 + $0x28] sm:$0xff]
    %v1280 = vld [vmem:[#allocation10 + $0x30] sm:$0xff]
    %v1281 = vld [vmem:[#allocation10 + $0x38] sm:$0xff]
    %v1282 = vld [vmem:[#allocation10 + $0x40] sm:$0xff]
    %v1283 = vld [vmem:[#allocation10 + $0x48] sm:$0xff]
    %v1284 = vld [vmem:[#allocation10 + $0x50] sm:$0xff]
    %v1285 = vld [vmem:[#allocation10 + $0x58] sm:$0xff]
    %v1286 = vld [vmem:[#allocation10 + $0x60] sm:$0xff]
    %v1287 = vld [vmem:[#allocation10 + $0x68] sm:$0xff]
    %v1288 = vld [vmem:[#allocation10 + $0x70] sm:$0xff]
    %v1289 = vld [vmem:[#allocation10 + $0x78] sm:$0xff]
    %v1290 = vld [vmem:[#allocation10 + $0x80] sm:$0xff]
    %v1291 = vld [vmem:[#allocation10 + $0x88] sm:$0xff]
    %v1292 = vld [vmem:[#allocation10 + $0x90] sm:$0xff]
    %v1293 = vld [vmem:[#allocation10 + $0x98] sm:$0xff]
    %v1294 = vld [vmem:[#allocation10 + $0xa0] sm:$0xff]
    %v1295 = vld [vmem:[#allocation10 + $0xa8] sm:$0xff]
    %v1296 = vld [vmem:[#allocation10 + $0xb0] sm:$0xff]
    %v1297 = vld [vmem:[#allocation10 + $0xb8] sm:$0xff]
    %v1298 = vld [vmem:[#allocation10 + $0xc0] sm:$0xff]
    %v1299 = vld [vmem:[#allocation10 + $0xc8] sm:$0xff]
    %v1300 = vld [vmem:[#allocation10 + $0xd0] sm:$0xff]
    %v1301 = vld [vmem:[#allocation10 + $0xd8] sm:$0xff]
    %v1302 = vld [vmem:[#allocation10 + $0xe0] sm:$0xff]
    %v1303 = vld [vmem:[#allocation10 + $0xe8] sm:$0xff]
    %v1304 = vld [vmem:[#allocation10 + $0xf0] sm:$0xff]
    %v1305 = vld [vmem:[#allocation10 + $0xf8] sm:$0xff]
    %v1306 = vld [vmem:[#allocation10 + $0x100] sm:$0xff]
    %v1307 = vld [vmem:[#allocation10 + $0x108] sm:$0xff]
    %v1308 = vld [vmem:[#allocation10 + $0x110] sm:$0xff]
    %v1309 = vld [vmem:[#allocation10 + $0x118] sm:$0xff]
    %v1310 = vld [vmem:[#allocation10 + $0x120] sm:$0xff]
    %v1311 = vld [vmem:[#allocation10 + $0x128] sm:$0xff]
    %v1312 = vld [vmem:[#allocation10 + $0x130] sm:$0xff]
    %v1313 = vld [vmem:[#allocation10 + $0x138] sm:$0xff]
    %v1314 = vld [vmem:[#allocation10 + $0x140] sm:$0xff]
    %v1315 = vld [vmem:[#allocation10 + $0x148] sm:$0xff]
    %v1316 = vld [vmem:[#allocation10 + $0x150] sm:$0xff]
    %v1317 = vld [vmem:[#allocation10 + $0x158] sm:$0xff]
    %v1318 = vld [vmem:[#allocation10 + $0x160] sm:$0xff]
    %v1319 = vld [vmem:[#allocation10 + $0x168] sm:$0xff]
    %v1320 = vld [vmem:[#allocation10 + $0x170] sm:$0xff]
    %v1321 = vld [vmem:[#allocation10 + $0x178] sm:$0xff]
    %v1322 = vld [vmem:[#allocation10 + $0x180] sm:$0xff]
    %v1323 = vld [vmem:[#allocation10 + $0x188] sm:$0xff]
    %v1324 = vld [vmem:[#allocation10 + $0x190] sm:$0xff]
    %v1325 = vld [vmem:[#allocation10 + $0x198] sm:$0xff]
    %v1326 = vld [vmem:[#allocation10 + $0x1a0] sm:$0xff]
    %v1327 = vld [vmem:[#allocation10 + $0x1a8] sm:$0xff]
    %v1328 = vld [vmem:[#allocation10 + $0x1b0] sm:$0xff]
    %v1329 = vld [vmem:[#allocation10 + $0x1b8] sm:$0xff]
    %v1330 = vld [vmem:[#allocation10 + $0x1c0] sm:$0xff]
    %v1331 = vld [vmem:[#allocation10 + $0x1c8] sm:$0xff]
    %v1332 = vld [vmem:[#allocation10 + $0x1d0] sm:$0xff]
    %v1333 = vld [vmem:[#allocation10 + $0x1d8] sm:$0xff]
    %v1334 = vld [vmem:[#allocation10 + $0x1e0] sm:$0xff]
    %v1335 = vld [vmem:[#allocation10 + $0x1e8] sm:$0xff]
    %v1336 = vld [vmem:[#allocation10 + $0x1f0] sm:$0xff]
    %v1337 = vld [vmem:[#allocation10 + $0x1f8] sm:$0xff]
    %v1338 = vld [vmem:[#allocation10 + $0x200] sm:$0xff]
    %v1339 = vld [vmem:[#allocation10 + $0x208] sm:$0xff]
    %v1340 = vld [vmem:[#allocation10 + $0x210] sm:$0xff]
    %v1341 = vld [vmem:[#allocation10 + $0x218] sm:$0xff]
    %v1342 = vld [vmem:[#allocation10 + $0x220] sm:$0xff]
    %v1343 = vld [vmem:[#allocation10 + $0x228] sm:$0xff]
    %v1344 = vld [vmem:[#allocation10 + $0x230] sm:$0xff]
    %v1345 = vld [vmem:[#allocation10 + $0x238] sm:$0xff]
    %v1346 = vld [vmem:[#allocation10 + $0x240] sm:$0xff]
    %v1347 = vld [vmem:[#allocation10 + $0x248] sm:$0xff]
    %v1348 = vld [vmem:[#allocation10 + $0x250] sm:$0xff]
    %v1349 = vld [vmem:[#allocation10 + $0x258] sm:$0xff]
    %v1350 = vld [vmem:[#allocation10 + $0x260] sm:$0xff]
    %v1351 = vld [vmem:[#allocation10 + $0x268] sm:$0xff]
    %v1352 = vld [vmem:[#allocation10 + $0x270] sm:$0xff]
    %v1353 = vld [vmem:[#allocation10 + $0x278] sm:$0xff]
    %v1354 = vld [vmem:[#allocation10 + $0x280] sm:$0xff]
    %v1355 = vld [vmem:[#allocation10 + $0x288] sm:$0xff]
    %v1356 = vld [vmem:[#allocation10 + $0x290] sm:$0xff]
    %v1357 = vld [vmem:[#allocation10 + $0x298] sm:$0xff]
    %v1358 = vld [vmem:[#allocation10 + $0x2a0] sm:$0xff]
    %v1359 = vld [vmem:[#allocation10 + $0x2a8] sm:$0xff]
    %v1360 = vld [vmem:[#allocation10 + $0x2b0] sm:$0xff]
    %v1361 = vld [vmem:[#allocation10 + $0x2b8] sm:$0xff]
    %v1362 = vld [vmem:[#allocation10 + $0x2c0] sm:$0xff]
    %v1363 = vld [vmem:[#allocation10 + $0x2c8] sm:$0xff]
    %v1364 = vld [vmem:[#allocation10 + $0x2d0] sm:$0xff]
    %v1365 = vld [vmem:[#allocation10 + $0x2d8] sm:$0xff]
    %v1366 = vld [vmem:[#allocation10 + $0x2e0] sm:$0xff]
    %v1367 = vld [vmem:[#allocation10 + $0x2e8] sm:$0xff]
    %v1368 = vld [vmem:[#allocation10 + $0x2f0] sm:$0xff]
    %v1369 = vld [vmem:[#allocation10 + $0x2f8] sm:$0xff]
    %v1370 = vld [vmem:[#allocation11] sm:$0x3]
    %v1372 = vlaneseq
    %v1373 = vshrl.u32 %v1372, 7
    %v1374 = vsub.s32 0, %v1373
    %v1375 = vrot.slane %v1370, %v1374
    %v1376 = vlaneseq
    %v1377 = vshrl.u32 %v1376, 7
    %v1378 = vsub.s32 1, %v1377
    %v1379 = vrot.slane %v1370, %v1378
    %v1478 = vunpack.c.l.b16 %v1274
    %v1479 = vunpack.c.h.b16 %v1274
    %v1480 = vunpack.c.l.b16 %v1275
    %v1481 = vunpack.c.h.b16 %v1275
    %v1482 = vunpack.c.l.b16 %v1276
    %v1483 = vunpack.c.h.b16 %v1276
    %v1484 = vunpack.c.l.b16 %v1277
    %v1485 = vunpack.c.h.b16 %v1277
    %v1486 = vunpack.c.l.b16 %v1278
    %v1487 = vunpack.c.h.b16 %v1278
    %v1488 = vunpack.c.l.b16 %v1279
    %v1489 = vunpack.c.h.b16 %v1279
    %v1490 = vunpack.c.l.b16 %v1280
    %v1491 = vunpack.c.h.b16 %v1280
    %v1492 = vunpack.c.l.b16 %v1281
    %v1493 = vunpack.c.h.b16 %v1281
    %v1494 = vunpack.c.l.b16 %v1282
    %v1495 = vunpack.c.h.b16 %v1282
    %v1496 = vunpack.c.l.b16 %v1283
    %v1497 = vunpack.c.h.b16 %v1283
    %v1498 = vunpack.c.l.b16 %v1284
    %v1499 = vunpack.c.h.b16 %v1284
    %v1500 = vunpack.c.l.b16 %v1285
    %v1501 = vunpack.c.h.b16 %v1285
    %v1502 = vunpack.c.l.b16 %v1286
    %v1503 = vunpack.c.h.b16 %v1286
    %v1504 = vunpack.c.l.b16 %v1287
    %v1505 = vunpack.c.h.b16 %v1287
    %v1506 = vunpack.c.l.b16 %v1288
    %v1507 = vunpack.c.h.b16 %v1288
    %v1508 = vunpack.c.l.b16 %v1289
    %v1509 = vunpack.c.h.b16 %v1289
    %v1510 = vunpack.c.l.b16 %v1290
    %v1511 = vunpack.c.h.b16 %v1290
    %v1512 = vunpack.c.l.b16 %v1291
    %v1513 = vunpack.c.h.b16 %v1291
    %v1514 = vunpack.c.l.b16 %v1292
    %v1515 = vunpack.c.h.b16 %v1292
    %v1516 = vunpack.c.l.b16 %v1293
    %v1517 = vunpack.c.h.b16 %v1293
    %v1518 = vunpack.c.l.b16 %v1294
    %v1519 = vunpack.c.h.b16 %v1294
    %v1520 = vunpack.c.l.b16 %v1295
    %v1521 = vunpack.c.h.b16 %v1295
    %v1522 = vunpack.c.l.b16 %v1296
    %v1523 = vunpack.c.h.b16 %v1296
    %v1524 = vunpack.c.l.b16 %v1297
    %v1525 = vunpack.c.h.b16 %v1297
    %v1526 = vunpack.c.l.b16 %v1298
    %v1527 = vunpack.c.h.b16 %v1298
    %v1528 = vunpack.c.l.b16 %v1299
    %v1529 = vunpack.c.h.b16 %v1299
    %v1530 = vunpack.c.l.b16 %v1300
    %v1531 = vunpack.c.h.b16 %v1300
    %v1532 = vunpack.c.l.b16 %v1301
    %v1533 = vunpack.c.h.b16 %v1301
    %v1534 = vunpack.c.l.b16 %v1302
    %v1535 = vunpack.c.h.b16 %v1302
    %v1536 = vunpack.c.l.b16 %v1303
    %v1537 = vunpack.c.h.b16 %v1303
    %v1538 = vunpack.c.l.b16 %v1304
    %v1539 = vunpack.c.h.b16 %v1304
    %v1540 = vunpack.c.l.b16 %v1305
    %v1541 = vunpack.c.h.b16 %v1305
    %v1542 = vunpack.c.l.b16 %v1306
    %v1543 = vunpack.c.h.b16 %v1306
    %v1544 = vunpack.c.l.b16 %v1307
    %v1545 = vunpack.c.h.b16 %v1307
    %v1546 = vunpack.c.l.b16 %v1308
    %v1547 = vunpack.c.h.b16 %v1308
    %v1548 = vunpack.c.l.b16 %v1309
    %v1549 = vunpack.c.h.b16 %v1309
    %v1550 = vunpack.c.l.b16 %v1310
    %v1551 = vunpack.c.h.b16 %v1310
    %v1552 = vunpack.c.l.b16 %v1311
    %v1553 = vunpack.c.h.b16 %v1311
    %v1554 = vunpack.c.l.b16 %v1312
    %v1555 = vunpack.c.h.b16 %v1312
    %v1556 = vunpack.c.l.b16 %v1313
    %v1557 = vunpack.c.h.b16 %v1313
    %v1558 = vunpack.c.l.b16 %v1314
    %v1559 = vunpack.c.h.b16 %v1314
    %v1560 = vunpack.c.l.b16 %v1315
    %v1561 = vunpack.c.h.b16 %v1315
    %v1562 = vunpack.c.l.b16 %v1316
    %v1563 = vunpack.c.h.b16 %v1316
    %v1564 = vunpack.c.l.b16 %v1317
    %v1565 = vunpack.c.h.b16 %v1317
    %v1566 = vunpack.c.l.b16 %v1318
    %v1567 = vunpack.c.h.b16 %v1318
    %v1568 = vunpack.c.l.b16 %v1319
    %v1569 = vunpack.c.h.b16 %v1319
    %v1570 = vunpack.c.l.b16 %v1320
    %v1571 = vunpack.c.h.b16 %v1320
    %v1572 = vunpack.c.l.b16 %v1321
    %v1573 = vunpack.c.h.b16 %v1321
    %v1574 = vunpack.c.l.b16 %v1322
    %v1575 = vunpack.c.h.b16 %v1322
    %v1576 = vunpack.c.l.b16 %v1323
    %v1577 = vunpack.c.h.b16 %v1323
    %v1578 = vunpack.c.l.b16 %v1324
    %v1579 = vunpack.c.h.b16 %v1324
    %v1580 = vunpack.c.l.b16 %v1325
    %v1581 = vunpack.c.h.b16 %v1325
    %v1582 = vunpack.c.l.b16 %v1326
    %v1583 = vunpack.c.h.b16 %v1326
    %v1584 = vunpack.c.l.b16 %v1327
    %v1585 = vunpack.c.h.b16 %v1327
    %v1586 = vunpack.c.l.b16 %v1328
    %v1587 = vunpack.c.h.b16 %v1328
    %v1588 = vunpack.c.l.b16 %v1329
    %v1589 = vunpack.c.h.b16 %v1329
    %v1590 = vunpack.c.l.b16 %v1330
    %v1591 = vunpack.c.h.b16 %v1330
    %v1592 = vunpack.c.l.b16 %v1331
    %v1593 = vunpack.c.h.b16 %v1331
    %v1594 = vunpack.c.l.b16 %v1332
    %v1595 = vunpack.c.h.b16 %v1332
    %v1596 = vunpack.c.l.b16 %v1333
    %v1597 = vunpack.c.h.b16 %v1333
    %v1598 = vunpack.c.l.b16 %v1334
    %v1599 = vunpack.c.h.b16 %v1334
    %v1600 = vunpack.c.l.b16 %v1335
    %v1601 = vunpack.c.h.b16 %v1335
    %v1602 = vunpack.c.l.b16 %v1336
    %v1603 = vunpack.c.h.b16 %v1336
    %v1604 = vunpack.c.l.b16 %v1337
    %v1605 = vunpack.c.h.b16 %v1337
    %v1606 = vunpack.c.l.b16 %v1338
    %v1607 = vunpack.c.h.b16 %v1338
    %v1608 = vunpack.c.l.b16 %v1339
    %v1609 = vunpack.c.h.b16 %v1339
    %v1610 = vunpack.c.l.b16 %v1340
    %v1611 = vunpack.c.h.b16 %v1340
    %v1612 = vunpack.c.l.b16 %v1341
    %v1613 = vunpack.c.h.b16 %v1341
    %v1614 = vunpack.c.l.b16 %v1342
    %v1615 = vunpack.c.h.b16 %v1342
    %v1616 = vunpack.c.l.b16 %v1343
    %v1617 = vunpack.c.h.b16 %v1343
    %v1618 = vunpack.c.l.b16 %v1344
    %v1619 = vunpack.c.h.b16 %v1344
    %v1620 = vunpack.c.l.b16 %v1345
    %v1621 = vunpack.c.h.b16 %v1345
    %v1622 = vunpack.c.l.b16 %v1346
    %v1623 = vunpack.c.h.b16 %v1346
    %v1624 = vunpack.c.l.b16 %v1347
    %v1625 = vunpack.c.h.b16 %v1347
    %v1626 = vunpack.c.l.b16 %v1348
    %v1627 = vunpack.c.h.b16 %v1348
    %v1628 = vunpack.c.l.b16 %v1349
    %v1629 = vunpack.c.h.b16 %v1349
    %v1630 = vunpack.c.l.b16 %v1350
    %v1631 = vunpack.c.h.b16 %v1350
    %v1632 = vunpack.c.l.b16 %v1351
    %v1633 = vunpack.c.h.b16 %v1351
    %v1634 = vunpack.c.l.b16 %v1352
    %v1635 = vunpack.c.h.b16 %v1352
    %v1636 = vunpack.c.l.b16 %v1353
    %v1637 = vunpack.c.h.b16 %v1353
    %v1638 = vunpack.c.l.b16 %v1354
    %v1639 = vunpack.c.h.b16 %v1354
    %v1640 = vunpack.c.l.b16 %v1355
    %v1641 = vunpack.c.h.b16 %v1355
    %v1642 = vunpack.c.l.b16 %v1356
    %v1643 = vunpack.c.h.b16 %v1356
    %v1644 = vunpack.c.l.b16 %v1357
    %v1645 = vunpack.c.h.b16 %v1357
    %v1646 = vunpack.c.l.b16 %v1358
    %v1647 = vunpack.c.h.b16 %v1358
    %v1648 = vunpack.c.l.b16 %v1359
    %v1649 = vunpack.c.h.b16 %v1359
    %v1650 = vunpack.c.l.b16 %v1360
    %v1651 = vunpack.c.h.b16 %v1360
    %v1652 = vunpack.c.l.b16 %v1361
    %v1653 = vunpack.c.h.b16 %v1361
    %v1654 = vunpack.c.l.b16 %v1362
    %v1655 = vunpack.c.h.b16 %v1362
    %v1656 = vunpack.c.l.b16 %v1363
    %v1657 = vunpack.c.h.b16 %v1363
    %v1658 = vunpack.c.l.b16 %v1364
    %v1659 = vunpack.c.h.b16 %v1364
    %v1660 = vunpack.c.l.b16 %v1365
    %v1661 = vunpack.c.h.b16 %v1365
    %v1662 = vunpack.c.l.b16 %v1366
    %v1663 = vunpack.c.h.b16 %v1366
    %v1664 = vunpack.c.l.b16 %v1367
    %v1665 = vunpack.c.h.b16 %v1367
    %v1666 = vunpack.c.l.b16 %v1368
    %v1667 = vunpack.c.h.b16 %v1368
    %v1668 = vunpack.c.l.b16 %v1369
    %v1669 = vunpack.c.h.b16 %v1369
    %v1670 = vpack.c.b16 %v1480, %v1478
    %v1671 = vpack.c.b16 %v1481, %v1479
    %v1672 = vpack.c.b16 %v1484, %v1482
    %v1673 = vpack.c.b16 %v1485, %v1483
    %v1674 = vpack.c.b16 %v1488, %v1486
    %v1675 = vpack.c.b16 %v1489, %v1487
    %v1676 = vpack.c.b16 %v1492, %v1490
    %v1677 = vpack.c.b16 %v1493, %v1491
    %v1678 = vpack.c.b16 %v1496, %v1494
    %v1679 = vpack.c.b16 %v1497, %v1495
    %v1680 = vpack.c.b16 %v1500, %v1498
    %v1681 = vpack.c.b16 %v1501, %v1499
    %v1682 = vpack.c.b16 %v1504, %v1502
    %v1683 = vpack.c.b16 %v1505, %v1503
    %v1684 = vpack.c.b16 %v1508, %v1506
    %v1685 = vpack.c.b16 %v1509, %v1507
    %v1686 = vpack.c.b16 %v1512, %v1510
    %v1687 = vpack.c.b16 %v1513, %v1511
    %v1688 = vpack.c.b16 %v1516, %v1514
    %v1689 = vpack.c.b16 %v1517, %v1515
    %v1690 = vpack.c.b16 %v1520, %v1518
    %v1691 = vpack.c.b16 %v1521, %v1519
    %v1692 = vpack.c.b16 %v1524, %v1522
    %v1693 = vpack.c.b16 %v1525, %v1523
    %v1694 = vpack.c.b16 %v1528, %v1526
    %v1695 = vpack.c.b16 %v1529, %v1527
    %v1696 = vpack.c.b16 %v1532, %v1530
    %v1697 = vpack.c.b16 %v1533, %v1531
    %v1698 = vpack.c.b16 %v1536, %v1534
    %v1699 = vpack.c.b16 %v1537, %v1535
    %v1700 = vpack.c.b16 %v1540, %v1538
    %v1701 = vpack.c.b16 %v1541, %v1539
    %v1702 = vpack.c.b16 %v1544, %v1542
    %v1703 = vpack.c.b16 %v1545, %v1543
    %v1704 = vpack.c.b16 %v1548, %v1546
    %v1705 = vpack.c.b16 %v1549, %v1547
    %v1706 = vpack.c.b16 %v1552, %v1550
    %v1707 = vpack.c.b16 %v1553, %v1551
    %v1708 = vpack.c.b16 %v1556, %v1554
    %v1709 = vpack.c.b16 %v1557, %v1555
    %v1710 = vpack.c.b16 %v1560, %v1558
    %v1711 = vpack.c.b16 %v1561, %v1559
    %v1712 = vpack.c.b16 %v1564, %v1562
    %v1713 = vpack.c.b16 %v1565, %v1563
    %v1714 = vpack.c.b16 %v1568, %v1566
    %v1715 = vpack.c.b16 %v1569, %v1567
    %v1716 = vpack.c.b16 %v1572, %v1570
    %v1717 = vpack.c.b16 %v1573, %v1571
    %v1718 = vpack.c.b16 %v1576, %v1574
    %v1719 = vpack.c.b16 %v1577, %v1575
    %v1720 = vpack.c.b16 %v1580, %v1578
    %v1721 = vpack.c.b16 %v1581, %v1579
    %v1722 = vpack.c.b16 %v1584, %v1582
    %v1723 = vpack.c.b16 %v1585, %v1583
    %v1724 = vpack.c.b16 %v1588, %v1586
    %v1725 = vpack.c.b16 %v1589, %v1587
    %v1726 = vpack.c.b16 %v1592, %v1590
    %v1727 = vpack.c.b16 %v1593, %v1591
    %v1728 = vpack.c.b16 %v1596, %v1594
    %v1729 = vpack.c.b16 %v1597, %v1595
    %v1730 = vpack.c.b16 %v1600, %v1598
    %v1731 = vpack.c.b16 %v1601, %v1599
    %v1732 = vpack.c.b16 %v1604, %v1602
    %v1733 = vpack.c.b16 %v1605, %v1603
    %v1734 = vpack.c.b16 %v1608, %v1606
    %v1735 = vpack.c.b16 %v1609, %v1607
    %v1736 = vpack.c.b16 %v1612, %v1610
    %v1737 = vpack.c.b16 %v1613, %v1611
    %v1738 = vpack.c.b16 %v1616, %v1614
    %v1739 = vpack.c.b16 %v1617, %v1615
    %v1740 = vpack.c.b16 %v1620, %v1618
    %v1741 = vpack.c.b16 %v1621, %v1619
    %v1742 = vpack.c.b16 %v1624, %v1622
    %v1743 = vpack.c.b16 %v1625, %v1623
    %v1744 = vpack.c.b16 %v1628, %v1626
    %v1745 = vpack.c.b16 %v1629, %v1627
    %v1746 = vpack.c.b16 %v1632, %v1630
    %v1747 = vpack.c.b16 %v1633, %v1631
    %v1748 = vpack.c.b16 %v1636, %v1634
    %v1749 = vpack.c.b16 %v1637, %v1635
    %v1750 = vpack.c.b16 %v1640, %v1638
    %v1751 = vpack.c.b16 %v1641, %v1639
    %v1752 = vpack.c.b16 %v1644, %v1642
    %v1753 = vpack.c.b16 %v1645, %v1643
    %v1754 = vpack.c.b16 %v1648, %v1646
    %v1755 = vpack.c.b16 %v1649, %v1647
    %v1756 = vpack.c.b16 %v1652, %v1650
    %v1757 = vpack.c.b16 %v1653, %v1651
    %v1758 = vpack.c.b16 %v1656, %v1654
    %v1759 = vpack.c.b16 %v1657, %v1655
    %v1760 = vpack.c.b16 %v1660, %v1658
    %v1761 = vpack.c.b16 %v1661, %v1659
    %v1762 = vpack.c.b16 %v1664, %v1662
    %v1763 = vpack.c.b16 %v1665, %v1663
    %v1764 = vpack.c.b16 %v1668, %v1666
    %v1765 = vpack.c.b16 %v1669, %v1667
    %1862 = vmatprep.subr.bf16.mxu0 %v1685
    %1863 = vmatpush1.bf16.msra.mxu0 %v1684
    %1864 = vmatprep.subr.bf16.mxu0 %v1683
    %1865 = vmatpush1.bf16.msra.mxu0 %v1682
    %1866 = vmatprep.subr.bf16.mxu0 %v1681
    %1867 = vmatpush1.bf16.msra.mxu0 %v1680
    %1868 = vmatprep.subr.bf16.mxu0 %v1679
    %1869 = vmatpush1.bf16.msra.mxu0 %v1678
    %1870 = vmatprep.subr.bf16.mxu0 %v1677
    %1871 = vmatpush1.bf16.msra.mxu0 %v1676
    %1872 = vmatprep.subr.bf16.mxu0 %v1675
    %1873 = vmatpush1.bf16.msra.mxu0 %v1674
    %1874 = vmatprep.subr.bf16.mxu0 %v1673
    %1875 = vmatpush1.bf16.msra.mxu0 %v1672
    %1876 = vmatprep.subr.bf16.mxu0 %v1671
    %1877 = vmatpush1.bf16.msra.mxu0 %v1670
    %1878 = vmatprep.subr.bf16.mxu0 %v1701
    %1879 = vmatpush2.bf16.msra.mxu0 %v1700
    %1880 = vmatprep.subr.bf16.mxu0 %v1699
    %1881 = vmatpush2.bf16.msra.mxu0 %v1698
    %1882 = vmatprep.subr.bf16.mxu0 %v1697
    %1883 = vmatpush2.bf16.msra.mxu0 %v1696
    %1884 = vmatprep.subr.bf16.mxu0 %v1695
    %1885 = vmatpush2.bf16.msra.mxu0 %v1694
    %1886 = vmatprep.subr.bf16.mxu0 %v1693
    %1887 = vmatpush2.bf16.msra.mxu0 %v1692
    %1888 = vmatprep.subr.bf16.mxu0 %v1691
    %1889 = vmatpush2.bf16.msra.mxu0 %v1690
    %1890 = vmatprep.subr.bf16.mxu0 %v1689
    %1891 = vmatpush2.bf16.msra.mxu0 %v1688
    %1892 = vmatprep.subr.bf16.mxu0 %v1687
    %1893 = vmatpush2.bf16.msra.mxu0 %v1686
    %1894 = vmatprep.mubr.bf16.mxu0 %v1269
    %1895 = vmatmul.mubr.bf16.gmra.mxu0 %v1268
    %v1896 = vpop.f32.mrf.mxu0
    %v1897 = vadd.f32 %v1375, %v1896
    %v1898 = vpop.f32.mrf.mxu0
    %v1899 = vadd.f32 %v1379, %v1898
    %v1900 = vpop.f32.mrf.mxu0
    %v1901 = vpop.f32.mrf.mxu0
    %1902 = vdwg.mxu0
    %1903 = vmatprep.subr.bf16.mxu0 %v1717
    %1904 = vmatpush1.bf16.msra.mxu0 %v1716
    %1905 = vmatprep.subr.bf16.mxu0 %v1715
    %1906 = vmatpush1.bf16.msra.mxu0 %v1714
    %1907 = vmatprep.subr.bf16.mxu0 %v1713
    %1908 = vmatpush1.bf16.msra.mxu0 %v1712
    %1909 = vmatprep.subr.bf16.mxu0 %v1711
    %1910 = vmatpush1.bf16.msra.mxu0 %v1710
    %1911 = vmatprep.subr.bf16.mxu0 %v1709
    %1912 = vmatpush1.bf16.msra.mxu0 %v1708
    %1913 = vmatprep.subr.bf16.mxu0 %v1707
    %1914 = vmatpush1.bf16.msra.mxu0 %v1706
    %1915 = vmatprep.subr.bf16.mxu0 %v1705
    %1916 = vmatpush1.bf16.msra.mxu0 %v1704
    %1917 = vmatprep.subr.bf16.mxu0 %v1703
    %1918 = vmatpush1.bf16.msra.mxu0 %v1702
    %1919 = vmatprep.subr.bf16.mxu0 %v1733
    %1920 = vmatpush2.bf16.msra.mxu0 %v1732
    %1921 = vmatprep.subr.bf16.mxu0 %v1731
    %1922 = vmatpush2.bf16.msra.mxu0 %v1730
    %1923 = vmatprep.subr.bf16.mxu0 %v1729
    %1924 = vmatpush2.bf16.msra.mxu0 %v1728
    %1925 = vmatprep.subr.bf16.mxu0 %v1727
    %1926 = vmatpush2.bf16.msra.mxu0 %v1726
    %1927 = vmatprep.subr.bf16.mxu0 %v1725
    %1928 = vmatpush2.bf16.msra.mxu0 %v1724
    %1929 = vmatprep.subr.bf16.mxu0 %v1723
    %1930 = vmatpush2.bf16.msra.mxu0 %v1722
    %1931 = vmatprep.subr.bf16.mxu0 %v1721
    %1932 = vmatpush2.bf16.msra.mxu0 %v1720
    %1933 = vmatprep.subr.bf16.mxu0 %v1719
    %1934 = vmatpush2.bf16.msra.mxu0 %v1718
    %1935 = vmatprep.mubr.bf16.mxu0 %v1271
    %1936 = vmatmul.mubr.bf16.gmra.mxu0 %v1270
    %v1937 = vpop.f32.mrf.mxu0
    %v1938 = vadd.f32 %v1897, %v1937
    %v1939 = vpop.f32.mrf.mxu0
    %v1940 = vadd.f32 %v1899, %v1939
    %v1941 = vpop.f32.mrf.mxu0
    %v1942 = vpop.f32.mrf.mxu0
    %1943 = vdwg.mxu0
    %1944 = vmatprep.subr.bf16.mxu0 %v1749
    %1945 = vmatpush1.bf16.msra.mxu0 %v1748
    %1946 = vmatprep.subr.bf16.mxu0 %v1747
    %1947 = vmatpush1.bf16.msra.mxu0 %v1746
    %1948 = vmatprep.subr.bf16.mxu0 %v1745
    %1949 = vmatpush1.bf16.msra.mxu0 %v1744
    %1950 = vmatprep.subr.bf16.mxu0 %v1743
    %1951 = vmatpush1.bf16.msra.mxu0 %v1742
    %1952 = vmatprep.subr.bf16.mxu0 %v1741
    %1953 = vmatpush1.bf16.msra.mxu0 %v1740
    %1954 = vmatprep.subr.bf16.mxu0 %v1739
    %1955 = vmatpush1.bf16.msra.mxu0 %v1738
    %1956 = vmatprep.subr.bf16.mxu0 %v1737
    %1957 = vmatpush1.bf16.msra.mxu0 %v1736
    %1958 = vmatprep.subr.bf16.mxu0 %v1735
    %1959 = vmatpush1.bf16.msra.mxu0 %v1734
    %1960 = vmatprep.subr.bf16.mxu0 %v1765
    %1961 = vmatpush2.bf16.msra.mxu0 %v1764
    %1962 = vmatprep.subr.bf16.mxu0 %v1763
    %1963 = vmatpush2.bf16.msra.mxu0 %v1762
    %1964 = vmatprep.subr.bf16.mxu0 %v1761
    %1965 = vmatpush2.bf16.msra.mxu0 %v1760
    %1966 = vmatprep.subr.bf16.mxu0 %v1759
    %1967 = vmatpush2.bf16.msra.mxu0 %v1758
    %1968 = vmatprep.subr.bf16.mxu0 %v1757
    %1969 = vmatpush2.bf16.msra.mxu0 %v1756
    %1970 = vmatprep.subr.bf16.mxu0 %v1755
    %1971 = vmatpush2.bf16.msra.mxu0 %v1754
    %1972 = vmatprep.subr.bf16.mxu0 %v1753
    %1973 = vmatpush2.bf16.msra.mxu0 %v1752
    %1974 = vmatprep.subr.bf16.mxu0 %v1751
    %1975 = vmatpush2.bf16.msra.mxu0 %v1750
    %1976 = vmatprep.mubr.bf16.mxu0 %v1273
    %1977 = vmatmul.mubr.bf16.gmra.mxu0 %v1272
    %v1978 = vpop.f32.mrf.mxu0
    %v1979 = vadd.f32 %v1938, %v1978
    %v1980 = vpop.f32.mrf.mxu0
    %v1981 = vadd.f32 %v1940, %v1980
    %v1982 = vpop.f32.mrf.mxu0
    %v1983 = vpop.f32.mrf.mxu0
    %1984 = vdwg.mxu0
    %v1985 = vmax.f32 %v1979, 0.0
    %v1986 = vmax.f32 %v1981, 0.0
    %v1987 = vrot.slane %v1985, 4
    %v1988 = vadd.f32 %v1985, %v1987
    %v1989 = vrot.slane %v1988, 2
    %v1990 = vadd.f32 %v1988, %v1989
    %v1991 = vrot.slane %v1990, 1
    %v1992 = vadd.f32 %v1990, %v1991
    %v1993 = vrot.slane %v1986, 4
    %v1994 = vadd.f32 %v1986, %v1993
    %v1995 = vrot.slane %v1994, 2
    %v1996 = vadd.f32 %v1994, %v1995
    %v1997 = vrot.slane %v1996, 1
    %v1998 = vadd.f32 %v1996, %v1997
    %v1999 = vmul.f32 %v1985, %v1985
    %v2000 = vmul.f32 %v1986, %v1986
    %v2001 = vrot.slane %v1999, 4
    %v2002 = vadd.f32 %v1999, %v2001
    %v2003 = vrot.slane %v2002, 2
    %v2004 = vadd.f32 %v2002, %v2003
    %v2005 = vrot.slane %v2004, 1
    %v2006 = vadd.f32 %v2004, %v2005
    %v2007 = vrot.slane %v2000, 4
    %v2008 = vadd.f32 %v2000, %v2007
    %v2009 = vrot.slane %v2008, 2
    %v2010 = vadd.f32 %v2008, %v2009
    %v2011 = vrot.slane %v2010, 1
    %v2012 = vadd.f32 %v2010, %v2011
    %2014 = vrot.lane.b32.xlu0 %v1992, 64
    %v2015 = vpop.permute.xlu0 %2014
    %v2017 = vadd.f32 %v1992, %v2015
    %2019 = vrot.lane.b32.xlu0 %v2006, 64
    %v2020 = vpop.permute.xlu0 %2019
    %v2022 = vadd.f32 %v2006, %v2020
    %v2023 = vadd.f32 %v2017, %v1998
    %v2024 = vadd.f32 %v2022, %v2012
    %2026 = vrot.lane.b32.xlu0 %v1998, 64
    %v2027 = vpop.permute.xlu0 %2026
    %v2029 = vadd.f32 %v2023, %v2027
    %2031 = vrot.lane.b32.xlu0 %v2012, 64
    %v2032 = vpop.permute.xlu0 %2031
    %v2034 = vadd.f32 %v2024, %v2032
    %v2035 = vrcp.pop 32.0
    %v2036 = vmul.f32 %v2029, %v2035
    %v2037 = vmul.f32 %v2034, %v2035
    %v2038 = vmul.f32 %v2036, %v2036
    %v2039 = vsub.f32 %v2037, %v2038
    %v2040 = vadd.f32 %v2039, 1e-05
    %v2041 = vrsqrt.pop %v2040
    %v2042 = vld [vmem:[#allocation13] sm:$0x1]
    %v2043 = vmul.f32 %v2042, %v2041
    %v2044 = vld [vmem:[#allocation14] sm:$0x1]
    %v2045 = vmul.f32 %v2036, %v2043
    %v2046 = vsub.f32 %v2044, %v2045
    %v2048 = vlaneseq
    %v2049 = vshrl.u32 %v2048, 7
    %v2050 = vsub.s32 0, %v2049
    %v2051 = vrot.slane %v2043, %v2050
    %2052 = vrot.lane.b32.xlu0 %v2051, 64
    %v2053 = vpop.permute.xlu0 %2052
    %v2055 = vsel %vm259, %v2043, %v2053
    %v2057 = vlaneseq
    %v2058 = vshrl.u32 %v2057, 7
    %v2059 = vsub.s32 0, %v2058
    %v2060 = vrot.slane %v2046, %v2059
    %2061 = vrot.lane.b32.xlu0 %v2060, 64
    %v2062 = vpop.permute.xlu0 %2061
    %v2064 = vsel %vm259, %v2046, %v2062
    %v2065 = vlaneseq
    %v2066 = vshrl.u32 %v2065, 7
    %v2067 = vsub.s32 0, %v2066
    %v2068 = vrot.slane %v2055, %v2067
    %v2069 = vmul.f32 %v1985, %v2068
    %v2070 = vmul.f32 %v1986, %v2068
    %v2071 = vlaneseq
    %v2072 = vshrl.u32 %v2071, 7
    %v2073 = vsub.s32 0, %v2072
    %v2074 = vrot.slane %v2064, %v2073
    %v2075 = vadd.f32 %v2069, %v2074
    %v2076 = vadd.f32 %v2070, %v2074
    %v2079 = vcombine.low %v2075, %v2076
    %v2081 = vunpack.c.l.s4 1966171168
    %v2082 = vunpack.c.0.s8 %v2081
    %v2083 = vlaneseq
    %v2084 = vshrl.u32 %v2083, 7
    %v2085 = vsub.s32 %v2082, %v2084
    %v2086 = vrot.slane %v2079, %v2085
    %v2087 = vcombine.high %v2086, %v2086
    %v2089 = vunpack.c.l.s4 1966171168
    %v2090 = vunpack.c.0.s8 %v2089
    %v2091 = vlaneseq
    %v2092 = vshrl.u32 %v2091, 7
    %v2093 = vsub.s32 %v2090, %v2092
    %v2094 = vrot.slane %v2086, %v2093
    %v2096 = vunpack.c.l.s4 1966171168
    %v2097 = vunpack.c.0.s8 %v2096
    %v2098 = vlaneseq
    %v2099 = vshrl.u32 %v2098, 7
    %v2100 = vsub.s32 %v2097, %v2099
    %v2101 = vrot.slane %v2087, %v2100
    %s2104 = scalar_lea.vmem [#allocation3], 8
    %2105 = vst.msk [vmem:[%s2104] ss:$4 sm:$0x3] %vm813, %v2094
    %s2106 = scalar_lea.vmem %s2104, 16 [#allocation3]
    %2107 = vst.msk [vmem:[%s2106] ss:$4 sm:$0x3] %vm813, %v2101
    %v2108 = vcombine.high %v2094, %v2094
    %v2109 = vcombine.high %v2101, %v2101
    %s2112 = scalar_lea.vmem [#allocation3], 1
    %2113 = vst.msk [vmem:[%s2112] ss:$4 sm:$0x3] %vm813, %v2108
    %s2114 = scalar_lea.vmem [#allocation3], 17
    %2115 = vst.msk [vmem:[%s2114] ss:$4 sm:$0x3] %vm813, %v2109
    %v2116 = vcombine.high %v2075, %v2076
    %v2118 = vunpack.c.l.s4 1966171168
    %v2119 = vunpack.c.0.s8 %v2118
    %v2120 = vlaneseq
    %v2121 = vshrl.u32 %v2120, 7
    %v2122 = vsub.s32 %v2119, %v2121
    %v2123 = vrot.slane %v2116, %v2122
    %v2124 = vcombine.high %v2123, %v2123
    %v2126 = vunpack.c.l.s4 1966171168
    %v2127 = vunpack.c.0.s8 %v2126
    %v2128 = vlaneseq
    %v2129 = vshrl.u32 %v2128, 7
    %v2130 = vsub.s32 %v2127, %v2129
    %v2131 = vrot.slane %v2123, %v2130
    %v2133 = vunpack.c.l.s4 1966171168
    %v2134 = vunpack.c.0.s8 %v2133
    %v2135 = vlaneseq
    %v2136 = vshrl.u32 %v2135, 7
    %v2137 = vsub.s32 %v2134, %v2136
    %v2138 = vrot.slane %v2124, %v2137
    %s2141 = scalar_lea.vmem %s2104, 1 [#allocation3]
    %2142 = vst.msk [vmem:[%s2141] ss:$4 sm:$0x3] %vm813, %v2131
    %s2143 = scalar_lea.vmem %s2104, 17 [#allocation3]
    %2144 = vst.msk [vmem:[%s2143] ss:$4 sm:$0x3] %vm813, %v2138
    %v2145 = vcombine.high %v2131, %v2131
    %v2146 = vcombine.high %v2138, %v2138
    %s2149 = scalar_lea.vmem [#allocation3], 2
    %2150 = vst.msk [vmem:[%s2149] ss:$4 sm:$0x3] %vm813, %v2145
    %s2151 = scalar_lea.vmem [#allocation3], 18
    %2152 = vst.msk [vmem:[%s2151] ss:$4 sm:$0x3] %vm813, %v2146
    %2153 = vst.msk [vmem:[#allocation3] ss:$4 sm:$0x3] %vm813, 0.0
    %s2154 = scalar_lea.vmem [#allocation3], 16
    %2155 = vst.msk [vmem:[%s2154] ss:$4 sm:$0x3] %vm813, 0.0
    %s2156 = scalar_lea.vmem %s2104, 2 [#allocation3]
    %2157 = vst.msk [vmem:[%s2156] ss:$4 sm:$0x3] %vm813, 0.0
    %s2158 = scalar_lea.vmem %s2104, 18 [#allocation3]
    %2159 = vst.msk [vmem:[%s2158] ss:$4 sm:$0x3] %vm813, 0.0
    %v2160 = vld [vmem:[#allocation3] ss:$4 sm:$0x3]
    %v2161 = vld [vmem:[%s2154] ss:$4 sm:$0x3]
    %v2162 = vld [vmem:[%s2104] ss:$4 sm:$0x3]
    %v2163 = vld [vmem:[%s2106] ss:$4 sm:$0x3]
    %v2164 = vld [vmem:[%s2112] ss:$4 sm:$0x3]
    %v2165 = vld [vmem:[%s2114] ss:$4 sm:$0x3]
    %v2168 = vcombine.low %v2160, %v2161
    %v2170 = vunpack.c.l.s4 1966171168
    %v2171 = vunpack.c.0.s8 %v2170
    %v2172 = vlaneseq
    %v2173 = vshrl.u32 %v2172, 7
    %v2174 = vsub.s32 %v2171, %v2173
    %v2175 = vrot.slane %v2168, %v2174
    %v2176 = vcombine.high %v2175, %v2175
    %v2178 = vunpack.c.l.s4 1966171168
    %v2179 = vunpack.c.0.s8 %v2178
    %v2180 = vlaneseq
    %v2181 = vshrl.u32 %v2180, 7
    %v2182 = vsub.s32 %v2179, %v2181
    %v2183 = vrot.slane %v2175, %v2182
    %v2185 = vunpack.c.l.s4 1966171168
    %v2186 = vunpack.c.0.s8 %v2185
    %v2187 = vlaneseq
    %v2188 = vshrl.u32 %v2187, 7
    %v2189 = vsub.s32 %v2186, %v2188
    %v2190 = vrot.slane %v2176, %v2189
    %v2195 = vcombine.low %v2162, %v2163
    %v2197 = vunpack.c.l.s4 1966171168
    %v2198 = vunpack.c.0.s8 %v2197
    %v2199 = vlaneseq
    %v2200 = vshrl.u32 %v2199, 7
    %v2201 = vsub.s32 %v2198, %v2200
    %v2202 = vrot.slane %v2195, %v2201
    %v2203 = vcombine.high %v2202, %v2202
    %v2205 = vunpack.c.l.s4 1966171168
    %v2206 = vunpack.c.0.s8 %v2205
    %v2207 = vlaneseq
    %v2208 = vshrl.u32 %v2207, 7
    %v2209 = vsub.s32 %v2206, %v2208
    %v2210 = vrot.slane %v2202, %v2209
    %v2212 = vunpack.c.l.s4 1966171168
    %v2213 = vunpack.c.0.s8 %v2212
    %v2214 = vlaneseq
    %v2215 = vshrl.u32 %v2214, 7
    %v2216 = vsub.s32 %v2213, %v2215
    %v2217 = vrot.slane %v2203, %v2216
    %v2222 = vcombine.low %v2164, %v2165
    %v2224 = vunpack.c.l.s4 1966171168
    %v2225 = vunpack.c.0.s8 %v2224
    %v2226 = vlaneseq
    %v2227 = vshrl.u32 %v2226, 7
    %v2228 = vsub.s32 %v2225, %v2227
    %v2229 = vrot.slane %v2222, %v2228
    %v2230 = vcombine.high %v2229, %v2229
    %v2232 = vunpack.c.l.s4 1966171168
    %v2233 = vunpack.c.0.s8 %v2232
    %v2234 = vlaneseq
    %v2235 = vshrl.u32 %v2234, 7
    %v2236 = vsub.s32 %v2233, %v2235
    %v2237 = vrot.slane %v2229, %v2236
    %v2239 = vunpack.c.l.s4 1966171168
    %v2240 = vunpack.c.0.s8 %v2239
    %v2241 = vlaneseq
    %v2242 = vshrl.u32 %v2241, 7
    %v2243 = vsub.s32 %v2240, %v2242
    %v2244 = vrot.slane %v2230, %v2243
    %v2247 = vld [vmem:[%s2141] ss:$4 sm:$0x3]
    %v2248 = vld [vmem:[%s2143] ss:$4 sm:$0x3]
    %v2249 = vld [vmem:[%s2149] ss:$4 sm:$0x3]
    %v2250 = vld [vmem:[%s2151] ss:$4 sm:$0x3]
    %v2253 = vcombine.low %v2247, %v2248
    %v2255 = vunpack.c.l.s4 1966171168
    %v2256 = vunpack.c.0.s8 %v2255
    %v2257 = vlaneseq
    %v2258 = vshrl.u32 %v2257, 7
    %v2259 = vsub.s32 %v2256, %v2258
    %v2260 = vrot.slane %v2253, %v2259
    %v2261 = vcombine.high %v2260, %v2260
    %v2263 = vunpack.c.l.s4 1966171168
    %v2264 = vunpack.c.0.s8 %v2263
    %v2265 = vlaneseq
    %v2266 = vshrl.u32 %v2265, 7
    %v2267 = vsub.s32 %v2264, %v2266
    %v2268 = vrot.slane %v2260, %v2267
    %v2270 = vunpack.c.l.s4 1966171168
    %v2271 = vunpack.c.0.s8 %v2270
    %v2272 = vlaneseq
    %v2273 = vshrl.u32 %v2272, 7
    %v2274 = vsub.s32 %v2271, %v2273
    %v2275 = vrot.slane %v2261, %v2274
    %v2278 = vcombine.low %v2249, %v2250
    %v2280 = vunpack.c.l.s4 1966171168
    %v2281 = vunpack.c.0.s8 %v2280
    %v2282 = vlaneseq
    %v2283 = vshrl.u32 %v2282, 7
    %v2284 = vsub.s32 %v2281, %v2283
    %v2285 = vrot.slane %v2278, %v2284
    %v2286 = vcombine.high %v2285, %v2285
    %v2288 = vunpack.c.l.s4 1966171168
    %v2289 = vunpack.c.0.s8 %v2288
    %v2290 = vlaneseq
    %v2291 = vshrl.u32 %v2290, 7
    %v2292 = vsub.s32 %v2289, %v2291
    %v2293 = vrot.slane %v2285, %v2292
    %v2295 = vunpack.c.l.s4 1966171168
    %v2296 = vunpack.c.0.s8 %v2295
    %v2297 = vlaneseq
    %v2298 = vshrl.u32 %v2297, 7
    %v2299 = vsub.s32 %v2296, %v2298
    %v2300 = vrot.slane %v2286, %v2299
    %v2301 = vrot.slane %v2237, 6
    %v2302 = vrot.slane %v2244, 6
    %v2303 = vrot.slane %v2268, 6
    %v2304 = vrot.slane %v2275, 6
    %v2305 = vrot.slane %v2293, 6
    %v2306 = vrot.slane %v2300, 6
    %v2313 = vsel %vm409, %v2183, %v2301
    %v2314 = vsel %vm409, %v2190, %v2302
    %v2315 = vsel %vm409, %v2210, %v2303
    %v2316 = vsel %vm409, %v2217, %v2304
    %v2317 = vsel %vm409, %v2237, %v2305
    %v2318 = vsel %vm409, %v2244, %v2306
    %v2319 = vpack.c.bf16 %v2313, %v2313
    %v2320 = vpack.c.bf16 %v2314, %v2314
    %v2321 = vpack.c.bf16 %v2315, %v2315
    %v2322 = vpack.c.bf16 %v2316, %v2316
    %v2323 = vpack.c.bf16 %v2317, %v2317
    %v2324 = vpack.c.bf16 %v2318, %v2318
    %v2325 = vld [vmem:[#allocation16] sm:$0xff]
    %v2326 = vld [vmem:[#allocation16 + $0x8] sm:$0xff]
    %v2327 = vld [vmem:[#allocation16 + $0x10] sm:$0xff]
    %v2328 = vld [vmem:[#allocation16 + $0x18] sm:$0xff]
    %v2329 = vld [vmem:[#allocation16 + $0x20] sm:$0xff]
    %v2330 = vld [vmem:[#allocation16 + $0x28] sm:$0xff]
    %v2331 = vld [vmem:[#allocation16 + $0x30] sm:$0xff]
    %v2332 = vld [vmem:[#allocation16 + $0x38] sm:$0xff]
    %v2333 = vld [vmem:[#allocation16 + $0x40] sm:$0xff]
    %v2334 = vld [vmem:[#allocation16 + $0x48] sm:$0xff]
    %v2335 = vld [vmem:[#allocation16 + $0x50] sm:$0xff]
    %v2336 = vld [vmem:[#allocation16 + $0x58] sm:$0xff]
    %v2337 = vld [vmem:[#allocation16 + $0x60] sm:$0xff]
    %v2338 = vld [vmem:[#allocation16 + $0x68] sm:$0xff]
    %v2339 = vld [vmem:[#allocation16 + $0x70] sm:$0xff]
    %v2340 = vld [vmem:[#allocation16 + $0x78] sm:$0xff]
    %v2341 = vld [vmem:[#allocation16 + $0x80] sm:$0xff]
    %v2342 = vld [vmem:[#allocation16 + $0x88] sm:$0xff]
    %v2343 = vld [vmem:[#allocation16 + $0x90] sm:$0xff]
    %v2344 = vld [vmem:[#allocation16 + $0x98] sm:$0xff]
    %v2345 = vld [vmem:[#allocation16 + $0xa0] sm:$0xff]
    %v2346 = vld [vmem:[#allocation16 + $0xa8] sm:$0xff]
    %v2347 = vld [vmem:[#allocation16 + $0xb0] sm:$0xff]
    %v2348 = vld [vmem:[#allocation16 + $0xb8] sm:$0xff]
    %v2349 = vld [vmem:[#allocation16 + $0xc0] sm:$0xff]
    %v2350 = vld [vmem:[#allocation16 + $0xc8] sm:$0xff]
    %v2351 = vld [vmem:[#allocation16 + $0xd0] sm:$0xff]
    %v2352 = vld [vmem:[#allocation16 + $0xd8] sm:$0xff]
    %v2353 = vld [vmem:[#allocation16 + $0xe0] sm:$0xff]
    %v2354 = vld [vmem:[#allocation16 + $0xe8] sm:$0xff]
    %v2355 = vld [vmem:[#allocation16 + $0xf0] sm:$0xff]
    %v2356 = vld [vmem:[#allocation16 + $0xf8] sm:$0xff]
    %v2357 = vld [vmem:[#allocation16 + $0x100] sm:$0xff]
    %v2358 = vld [vmem:[#allocation16 + $0x108] sm:$0xff]
    %v2359 = vld [vmem:[#allocation16 + $0x110] sm:$0xff]
    %v2360 = vld [vmem:[#allocation16 + $0x118] sm:$0xff]
    %v2361 = vld [vmem:[#allocation16 + $0x120] sm:$0xff]
    %v2362 = vld [vmem:[#allocation16 + $0x128] sm:$0xff]
    %v2363 = vld [vmem:[#allocation16 + $0x130] sm:$0xff]
    %v2364 = vld [vmem:[#allocation16 + $0x138] sm:$0xff]
    %v2365 = vld [vmem:[#allocation16 + $0x140] sm:$0xff]
    %v2366 = vld [vmem:[#allocation16 + $0x148] sm:$0xff]
    %v2367 = vld [vmem:[#allocation16 + $0x150] sm:$0xff]
    %v2368 = vld [vmem:[#allocation16 + $0x158] sm:$0xff]
    %v2369 = vld [vmem:[#allocation16 + $0x160] sm:$0xff]
    %v2370 = vld [vmem:[#allocation16 + $0x168] sm:$0xff]
    %v2371 = vld [vmem:[#allocation16 + $0x170] sm:$0xff]
    %v2372 = vld [vmem:[#allocation16 + $0x178] sm:$0xff]
    %v2373 = vld [vmem:[#allocation16 + $0x180] sm:$0xff]
    %v2374 = vld [vmem:[#allocation16 + $0x188] sm:$0xff]
    %v2375 = vld [vmem:[#allocation16 + $0x190] sm:$0xff]
    %v2376 = vld [vmem:[#allocation16 + $0x198] sm:$0xff]
    %v2377 = vld [vmem:[#allocation16 + $0x1a0] sm:$0xff]
    %v2378 = vld [vmem:[#allocation16 + $0x1a8] sm:$0xff]
    %v2379 = vld [vmem:[#allocation16 + $0x1b0] sm:$0xff]
    %v2380 = vld [vmem:[#allocation16 + $0x1b8] sm:$0xff]
    %v2381 = vld [vmem:[#allocation16 + $0x1c0] sm:$0xff]
    %v2382 = vld [vmem:[#allocation16 + $0x1c8] sm:$0xff]
    %v2383 = vld [vmem:[#allocation16 + $0x1d0] sm:$0xff]
    %v2384 = vld [vmem:[#allocation16 + $0x1d8] sm:$0xff]
    %v2385 = vld [vmem:[#allocation16 + $0x1e0] sm:$0xff]
    %v2386 = vld [vmem:[#allocation16 + $0x1e8] sm:$0xff]
    %v2387 = vld [vmem:[#allocation16 + $0x1f0] sm:$0xff]
    %v2388 = vld [vmem:[#allocation16 + $0x1f8] sm:$0xff]
    %v2389 = vld [vmem:[#allocation16 + $0x200] sm:$0xff]
    %v2390 = vld [vmem:[#allocation16 + $0x208] sm:$0xff]
    %v2391 = vld [vmem:[#allocation16 + $0x210] sm:$0xff]
    %v2392 = vld [vmem:[#allocation16 + $0x218] sm:$0xff]
    %v2393 = vld [vmem:[#allocation16 + $0x220] sm:$0xff]
    %v2394 = vld [vmem:[#allocation16 + $0x228] sm:$0xff]
    %v2395 = vld [vmem:[#allocation16 + $0x230] sm:$0xff]
    %v2396 = vld [vmem:[#allocation16 + $0x238] sm:$0xff]
    %v2397 = vld [vmem:[#allocation16 + $0x240] sm:$0xff]
    %v2398 = vld [vmem:[#allocation16 + $0x248] sm:$0xff]
    %v2399 = vld [vmem:[#allocation16 + $0x250] sm:$0xff]
    %v2400 = vld [vmem:[#allocation16 + $0x258] sm:$0xff]
    %v2401 = vld [vmem:[#allocation16 + $0x260] sm:$0xff]
    %v2402 = vld [vmem:[#allocation16 + $0x268] sm:$0xff]
    %v2403 = vld [vmem:[#allocation16 + $0x270] sm:$0xff]
    %v2404 = vld [vmem:[#allocation16 + $0x278] sm:$0xff]
    %v2405 = vld [vmem:[#allocation16 + $0x280] sm:$0xff]
    %v2406 = vld [vmem:[#allocation16 + $0x288] sm:$0xff]
    %v2407 = vld [vmem:[#allocation16 + $0x290] sm:$0xff]
    %v2408 = vld [vmem:[#allocation16 + $0x298] sm:$0xff]
    %v2409 = vld [vmem:[#allocation16 + $0x2a0] sm:$0xff]
    %v2410 = vld [vmem:[#allocation16 + $0x2a8] sm:$0xff]
    %v2411 = vld [vmem:[#allocation16 + $0x2b0] sm:$0xff]
    %v2412 = vld [vmem:[#allocation16 + $0x2b8] sm:$0xff]
    %v2413 = vld [vmem:[#allocation16 + $0x2c0] sm:$0xff]
    %v2414 = vld [vmem:[#allocation16 + $0x2c8] sm:$0xff]
    %v2415 = vld [vmem:[#allocation16 + $0x2d0] sm:$0xff]
    %v2416 = vld [vmem:[#allocation16 + $0x2d8] sm:$0xff]
    %v2417 = vld [vmem:[#allocation16 + $0x2e0] sm:$0xff]
    %v2418 = vld [vmem:[#allocation16 + $0x2e8] sm:$0xff]
    %v2419 = vld [vmem:[#allocation16 + $0x2f0] sm:$0xff]
    %v2420 = vld [vmem:[#allocation16 + $0x2f8] sm:$0xff]
    %v2421 = vld [vmem:[#allocation17] sm:$0x3]
    %v2423 = vlaneseq
    %v2424 = vshrl.u32 %v2423, 7
    %v2425 = vsub.s32 0, %v2424
    %v2426 = vrot.slane %v2421, %v2425
    %v2427 = vlaneseq
    %v2428 = vshrl.u32 %v2427, 7
    %v2429 = vsub.s32 1, %v2428
    %v2430 = vrot.slane %v2421, %v2429
    %v2529 = vunpack.c.l.b16 %v2325
    %v2530 = vunpack.c.h.b16 %v2325
    %v2531 = vunpack.c.l.b16 %v2326
    %v2532 = vunpack.c.h.b16 %v2326
    %v2533 = vunpack.c.l.b16 %v2327
    %v2534 = vunpack.c.h.b16 %v2327
    %v2535 = vunpack.c.l.b16 %v2328
    %v2536 = vunpack.c.h.b16 %v2328
    %v2537 = vunpack.c.l.b16 %v2329
    %v2538 = vunpack.c.h.b16 %v2329
    %v2539 = vunpack.c.l.b16 %v2330
    %v2540 = vunpack.c.h.b16 %v2330
    %v2541 = vunpack.c.l.b16 %v2331
    %v2542 = vunpack.c.h.b16 %v2331
    %v2543 = vunpack.c.l.b16 %v2332
    %v2544 = vunpack.c.h.b16 %v2332
    %v2545 = vunpack.c.l.b16 %v2333
    %v2546 = vunpack.c.h.b16 %v2333
    %v2547 = vunpack.c.l.b16 %v2334
    %v2548 = vunpack.c.h.b16 %v2334
    %v2549 = vunpack.c.l.b16 %v2335
    %v2550 = vunpack.c.h.b16 %v2335
    %v2551 = vunpack.c.l.b16 %v2336
    %v2552 = vunpack.c.h.b16 %v2336
    %v2553 = vunpack.c.l.b16 %v2337
    %v2554 = vunpack.c.h.b16 %v2337
    %v2555 = vunpack.c.l.b16 %v2338
    %v2556 = vunpack.c.h.b16 %v2338
    %v2557 = vunpack.c.l.b16 %v2339
    %v2558 = vunpack.c.h.b16 %v2339
    %v2559 = vunpack.c.l.b16 %v2340
    %v2560 = vunpack.c.h.b16 %v2340
    %v2561 = vunpack.c.l.b16 %v2341
    %v2562 = vunpack.c.h.b16 %v2341
    %v2563 = vunpack.c.l.b16 %v2342
    %v2564 = vunpack.c.h.b16 %v2342
    %v2565 = vunpack.c.l.b16 %v2343
    %v2566 = vunpack.c.h.b16 %v2343
    %v2567 = vunpack.c.l.b16 %v2344
    %v2568 = vunpack.c.h.b16 %v2344
    %v2569 = vunpack.c.l.b16 %v2345
    %v2570 = vunpack.c.h.b16 %v2345
    %v2571 = vunpack.c.l.b16 %v2346
    %v2572 = vunpack.c.h.b16 %v2346
    %v2573 = vunpack.c.l.b16 %v2347
    %v2574 = vunpack.c.h.b16 %v2347
    %v2575 = vunpack.c.l.b16 %v2348
    %v2576 = vunpack.c.h.b16 %v2348
    %v2577 = vunpack.c.l.b16 %v2349
    %v2578 = vunpack.c.h.b16 %v2349
    %v2579 = vunpack.c.l.b16 %v2350
    %v2580 = vunpack.c.h.b16 %v2350
    %v2581 = vunpack.c.l.b16 %v2351
    %v2582 = vunpack.c.h.b16 %v2351
    %v2583 = vunpack.c.l.b16 %v2352
    %v2584 = vunpack.c.h.b16 %v2352
    %v2585 = vunpack.c.l.b16 %v2353
    %v2586 = vunpack.c.h.b16 %v2353
    %v2587 = vunpack.c.l.b16 %v2354
    %v2588 = vunpack.c.h.b16 %v2354
    %v2589 = vunpack.c.l.b16 %v2355
    %v2590 = vunpack.c.h.b16 %v2355
    %v2591 = vunpack.c.l.b16 %v2356
    %v2592 = vunpack.c.h.b16 %v2356
    %v2593 = vunpack.c.l.b16 %v2357
    %v2594 = vunpack.c.h.b16 %v2357
    %v2595 = vunpack.c.l.b16 %v2358
    %v2596 = vunpack.c.h.b16 %v2358
    %v2597 = vunpack.c.l.b16 %v2359
    %v2598 = vunpack.c.h.b16 %v2359
    %v2599 = vunpack.c.l.b16 %v2360
    %v2600 = vunpack.c.h.b16 %v2360
    %v2601 = vunpack.c.l.b16 %v2361
    %v2602 = vunpack.c.h.b16 %v2361
    %v2603 = vunpack.c.l.b16 %v2362
    %v2604 = vunpack.c.h.b16 %v2362
    %v2605 = vunpack.c.l.b16 %v2363
    %v2606 = vunpack.c.h.b16 %v2363
    %v2607 = vunpack.c.l.b16 %v2364
    %v2608 = vunpack.c.h.b16 %v2364
    %v2609 = vunpack.c.l.b16 %v2365
    %v2610 = vunpack.c.h.b16 %v2365
    %v2611 = vunpack.c.l.b16 %v2366
    %v2612 = vunpack.c.h.b16 %v2366
    %v2613 = vunpack.c.l.b16 %v2367
    %v2614 = vunpack.c.h.b16 %v2367
    %v2615 = vunpack.c.l.b16 %v2368
    %v2616 = vunpack.c.h.b16 %v2368
    %v2617 = vunpack.c.l.b16 %v2369
    %v2618 = vunpack.c.h.b16 %v2369
    %v2619 = vunpack.c.l.b16 %v2370
    %v2620 = vunpack.c.h.b16 %v2370
    %v2621 = vunpack.c.l.b16 %v2371
    %v2622 = vunpack.c.h.b16 %v2371
    %v2623 = vunpack.c.l.b16 %v2372
    %v2624 = vunpack.c.h.b16 %v2372
    %v2625 = vunpack.c.l.b16 %v2373
    %v2626 = vunpack.c.h.b16 %v2373
    %v2627 = vunpack.c.l.b16 %v2374
    %v2628 = vunpack.c.h.b16 %v2374
    %v2629 = vunpack.c.l.b16 %v2375
    %v2630 = vunpack.c.h.b16 %v2375
    %v2631 = vunpack.c.l.b16 %v2376
    %v2632 = vunpack.c.h.b16 %v2376
    %v2633 = vunpack.c.l.b16 %v2377
    %v2634 = vunpack.c.h.b16 %v2377
    %v2635 = vunpack.c.l.b16 %v2378
    %v2636 = vunpack.c.h.b16 %v2378
    %v2637 = vunpack.c.l.b16 %v2379
    %v2638 = vunpack.c.h.b16 %v2379
    %v2639 = vunpack.c.l.b16 %v2380
    %v2640 = vunpack.c.h.b16 %v2380
    %v2641 = vunpack.c.l.b16 %v2381
    %v2642 = vunpack.c.h.b16 %v2381
    %v2643 = vunpack.c.l.b16 %v2382
    %v2644 = vunpack.c.h.b16 %v2382
    %v2645 = vunpack.c.l.b16 %v2383
    %v2646 = vunpack.c.h.b16 %v2383
    %v2647 = vunpack.c.l.b16 %v2384
    %v2648 = vunpack.c.h.b16 %v2384
    %v2649 = vunpack.c.l.b16 %v2385
    %v2650 = vunpack.c.h.b16 %v2385
    %v2651 = vunpack.c.l.b16 %v2386
    %v2652 = vunpack.c.h.b16 %v2386
    %v2653 = vunpack.c.l.b16 %v2387
    %v2654 = vunpack.c.h.b16 %v2387
    %v2655 = vunpack.c.l.b16 %v2388
    %v2656 = vunpack.c.h.b16 %v2388
    %v2657 = vunpack.c.l.b16 %v2389
    %v2658 = vunpack.c.h.b16 %v2389
    %v2659 = vunpack.c.l.b16 %v2390
    %v2660 = vunpack.c.h.b16 %v2390
    %v2661 = vunpack.c.l.b16 %v2391
    %v2662 = vunpack.c.h.b16 %v2391
    %v2663 = vunpack.c.l.b16 %v2392
    %v2664 = vunpack.c.h.b16 %v2392
    %v2665 = vunpack.c.l.b16 %v2393
    %v2666 = vunpack.c.h.b16 %v2393
    %v2667 = vunpack.c.l.b16 %v2394
    %v2668 = vunpack.c.h.b16 %v2394
    %v2669 = vunpack.c.l.b16 %v2395
    %v2670 = vunpack.c.h.b16 %v2395
    %v2671 = vunpack.c.l.b16 %v2396
    %v2672 = vunpack.c.h.b16 %v2396
    %v2673 = vunpack.c.l.b16 %v2397
    %v2674 = vunpack.c.h.b16 %v2397
    %v2675 = vunpack.c.l.b16 %v2398
    %v2676 = vunpack.c.h.b16 %v2398
    %v2677 = vunpack.c.l.b16 %v2399
    %v2678 = vunpack.c.h.b16 %v2399
    %v2679 = vunpack.c.l.b16 %v2400
    %v2680 = vunpack.c.h.b16 %v2400
    %v2681 = vunpack.c.l.b16 %v2401
    %v2682 = vunpack.c.h.b16 %v2401
    %v2683 = vunpack.c.l.b16 %v2402
    %v2684 = vunpack.c.h.b16 %v2402
    %v2685 = vunpack.c.l.b16 %v2403
    %v2686 = vunpack.c.h.b16 %v2403
    %v2687 = vunpack.c.l.b16 %v2404
    %v2688 = vunpack.c.h.b16 %v2404
    %v2689 = vunpack.c.l.b16 %v2405
    %v2690 = vunpack.c.h.b16 %v2405
    %v2691 = vunpack.c.l.b16 %v2406
    %v2692 = vunpack.c.h.b16 %v2406
    %v2693 = vunpack.c.l.b16 %v2407
    %v2694 = vunpack.c.h.b16 %v2407
    %v2695 = vunpack.c.l.b16 %v2408
    %v2696 = vunpack.c.h.b16 %v2408
    %v2697 = vunpack.c.l.b16 %v2409
    %v2698 = vunpack.c.h.b16 %v2409
    %v2699 = vunpack.c.l.b16 %v2410
    %v2700 = vunpack.c.h.b16 %v2410
    %v2701 = vunpack.c.l.b16 %v2411
    %v2702 = vunpack.c.h.b16 %v2411
    %v2703 = vunpack.c.l.b16 %v2412
    %v2704 = vunpack.c.h.b16 %v2412
    %v2705 = vunpack.c.l.b16 %v2413
    %v2706 = vunpack.c.h.b16 %v2413
    %v2707 = vunpack.c.l.b16 %v2414
    %v2708 = vunpack.c.h.b16 %v2414
    %v2709 = vunpack.c.l.b16 %v2415
    %v2710 = vunpack.c.h.b16 %v2415
    %v2711 = vunpack.c.l.b16 %v2416
    %v2712 = vunpack.c.h.b16 %v2416
    %v2713 = vunpack.c.l.b16 %v2417
    %v2714 = vunpack.c.h.b16 %v2417
    %v2715 = vunpack.c.l.b16 %v2418
    %v2716 = vunpack.c.h.b16 %v2418
    %v2717 = vunpack.c.l.b16 %v2419
    %v2718 = vunpack.c.h.b16 %v2419
    %v2719 = vunpack.c.l.b16 %v2420
    %v2720 = vunpack.c.h.b16 %v2420
    %v2721 = vpack.c.b16 %v2531, %v2529
    %v2722 = vpack.c.b16 %v2532, %v2530
    %v2723 = vpack.c.b16 %v2535, %v2533
    %v2724 = vpack.c.b16 %v2536, %v2534
    %v2725 = vpack.c.b16 %v2539, %v2537
    %v2726 = vpack.c.b16 %v2540, %v2538
    %v2727 = vpack.c.b16 %v2543, %v2541
    %v2728 = vpack.c.b16 %v2544, %v2542
    %v2729 = vpack.c.b16 %v2547, %v2545
    %v2730 = vpack.c.b16 %v2548, %v2546
    %v2731 = vpack.c.b16 %v2551, %v2549
    %v2732 = vpack.c.b16 %v2552, %v2550
    %v2733 = vpack.c.b16 %v2555, %v2553
    %v2734 = vpack.c.b16 %v2556, %v2554
    %v2735 = vpack.c.b16 %v2559, %v2557
    %v2736 = vpack.c.b16 %v2560, %v2558
    %v2737 = vpack.c.b16 %v2563, %v2561
    %v2738 = vpack.c.b16 %v2564, %v2562
    %v2739 = vpack.c.b16 %v2567, %v2565
    %v2740 = vpack.c.b16 %v2568, %v2566
    %v2741 = vpack.c.b16 %v2571, %v2569
    %v2742 = vpack.c.b16 %v2572, %v2570
    %v2743 = vpack.c.b16 %v2575, %v2573
    %v2744 = vpack.c.b16 %v2576, %v2574
    %v2745 = vpack.c.b16 %v2579, %v2577
    %v2746 = vpack.c.b16 %v2580, %v2578
    %v2747 = vpack.c.b16 %v2583, %v2581
    %v2748 = vpack.c.b16 %v2584, %v2582
    %v2749 = vpack.c.b16 %v2587, %v2585
    %v2750 = vpack.c.b16 %v2588, %v2586
    %v2751 = vpack.c.b16 %v2591, %v2589
    %v2752 = vpack.c.b16 %v2592, %v2590
    %v2753 = vpack.c.b16 %v2595, %v2593
    %v2754 = vpack.c.b16 %v2596, %v2594
    %v2755 = vpack.c.b16 %v2599, %v2597
    %v2756 = vpack.c.b16 %v2600, %v2598
    %v2757 = vpack.c.b16 %v2603, %v2601
    %v2758 = vpack.c.b16 %v2604, %v2602
    %v2759 = vpack.c.b16 %v2607, %v2605
    %v2760 = vpack.c.b16 %v2608, %v2606
    %v2761 = vpack.c.b16 %v2611, %v2609
    %v2762 = vpack.c.b16 %v2612, %v2610
    %v2763 = vpack.c.b16 %v2615, %v2613
    %v2764 = vpack.c.b16 %v2616, %v2614
    %v2765 = vpack.c.b16 %v2619, %v2617
    %v2766 = vpack.c.b16 %v2620, %v2618
    %v2767 = vpack.c.b16 %v2623, %v2621
    %v2768 = vpack.c.b16 %v2624, %v2622
    %v2769 = vpack.c.b16 %v2627, %v2625
    %v2770 = vpack.c.b16 %v2628, %v2626
    %v2771 = vpack.c.b16 %v2631, %v2629
    %v2772 = vpack.c.b16 %v2632, %v2630
    %v2773 = vpack.c.b16 %v2635, %v2633
    %v2774 = vpack.c.b16 %v2636, %v2634
    %v2775 = vpack.c.b16 %v2639, %v2637
    %v2776 = vpack.c.b16 %v2640, %v2638
    %v2777 = vpack.c.b16 %v2643, %v2641
    %v2778 = vpack.c.b16 %v2644, %v2642
    %v2779 = vpack.c.b16 %v2647, %v2645
    %v2780 = vpack.c.b16 %v2648, %v2646
    %v2781 = vpack.c.b16 %v2651, %v2649
    %v2782 = vpack.c.b16 %v2652, %v2650
    %v2783 = vpack.c.b16 %v2655, %v2653
    %v2784 = vpack.c.b16 %v2656, %v2654
    %v2785 = vpack.c.b16 %v2659, %v2657
    %v2786 = vpack.c.b16 %v2660, %v2658
    %v2787 = vpack.c.b16 %v2663, %v2661
    %v2788 = vpack.c.b16 %v2664, %v2662
    %v2789 = vpack.c.b16 %v2667, %v2665
    %v2790 = vpack.c.b16 %v2668, %v2666
    %v2791 = vpack.c.b16 %v2671, %v2669
    %v2792 = vpack.c.b16 %v2672, %v2670
    %v2793 = vpack.c.b16 %v2675, %v2673
    %v2794 = vpack.c.b16 %v2676, %v2674
    %v2795 = vpack.c.b16 %v2679, %v2677
    %v2796 = vpack.c.b16 %v2680, %v2678
    %v2797 = vpack.c.b16 %v2683, %v2681
    %v2798 = vpack.c.b16 %v2684, %v2682
    %v2799 = vpack.c.b16 %v2687, %v2685
    %v2800 = vpack.c.b16 %v2688, %v2686
    %v2801 = vpack.c.b16 %v2691, %v2689
    %v2802 = vpack.c.b16 %v2692, %v2690
    %v2803 = vpack.c.b16 %v2695, %v2693
    %v2804 = vpack.c.b16 %v2696, %v2694
    %v2805 = vpack.c.b16 %v2699, %v2697
    %v2806 = vpack.c.b16 %v2700, %v2698
    %v2807 = vpack.c.b16 %v2703, %v2701
    %v2808 = vpack.c.b16 %v2704, %v2702
    %v2809 = vpack.c.b16 %v2707, %v2705
    %v2810 = vpack.c.b16 %v2708, %v2706
    %v2811 = vpack.c.b16 %v2711, %v2709
    %v2812 = vpack.c.b16 %v2712, %v2710
    %v2813 = vpack.c.b16 %v2715, %v2713
    %v2814 = vpack.c.b16 %v2716, %v2714
    %v2815 = vpack.c.b16 %v2719, %v2717
    %v2816 = vpack.c.b16 %v2720, %v2718
    %2913 = vmatprep.subr.bf16.mxu0 %v2736
    %2914 = vmatpush1.bf16.msra.mxu0 %v2735
    %2915 = vmatprep.subr.bf16.mxu0 %v2734
    %2916 = vmatpush1.bf16.msra.mxu0 %v2733
    %2917 = vmatprep.subr.bf16.mxu0 %v2732
    %2918 = vmatpush1.bf16.msra.mxu0 %v2731
    %2919 = vmatprep.subr.bf16.mxu0 %v2730
    %2920 = vmatpush1.bf16.msra.mxu0 %v2729
    %2921 = vmatprep.subr.bf16.mxu0 %v2728
    %2922 = vmatpush1.bf16.msra.mxu0 %v2727
    %2923 = vmatprep.subr.bf16.mxu0 %v2726
    %2924 = vmatpush1.bf16.msra.mxu0 %v2725
    %2925 = vmatprep.subr.bf16.mxu0 %v2724
    %2926 = vmatpush1.bf16.msra.mxu0 %v2723
    %2927 = vmatprep.subr.bf16.mxu0 %v2722
    %2928 = vmatpush1.bf16.msra.mxu0 %v2721
    %2929 = vmatprep.subr.bf16.mxu0 %v2752
    %2930 = vmatpush2.bf16.msra.mxu0 %v2751
    %2931 = vmatprep.subr.bf16.mxu0 %v2750
    %2932 = vmatpush2.bf16.msra.mxu0 %v2749
    %2933 = vmatprep.subr.bf16.mxu0 %v2748
    %2934 = vmatpush2.bf16.msra.mxu0 %v2747
    %2935 = vmatprep.subr.bf16.mxu0 %v2746
    %2936 = vmatpush2.bf16.msra.mxu0 %v2745
    %2937 = vmatprep.subr.bf16.mxu0 %v2744
    %2938 = vmatpush2.bf16.msra.mxu0 %v2743
    %2939 = vmatprep.subr.bf16.mxu0 %v2742
    %2940 = vmatpush2.bf16.msra.mxu0 %v2741
    %2941 = vmatprep.subr.bf16.mxu0 %v2740
    %2942 = vmatpush2.bf16.msra.mxu0 %v2739
    %2943 = vmatprep.subr.bf16.mxu0 %v2738
    %2944 = vmatpush2.bf16.msra.mxu0 %v2737
    %2945 = vmatprep.mubr.bf16.mxu0 %v2320
    %2946 = vmatmul.mubr.bf16.gmra.mxu0 %v2319
    %v2947 = vpop.f32.mrf.mxu0
    %v2948 = vadd.f32 %v2426, %v2947
    %v2949 = vpop.f32.mrf.mxu0
    %v2950 = vadd.f32 %v2430, %v2949
    %v2951 = vpop.f32.mrf.mxu0
    %v2952 = vpop.f32.mrf.mxu0
    %2953 = vdwg.mxu0
    %2954 = vmatprep.subr.bf16.mxu0 %v2768
    %2955 = vmatpush1.bf16.msra.mxu0 %v2767
    %2956 = vmatprep.subr.bf16.mxu0 %v2766
    %2957 = vmatpush1.bf16.msra.mxu0 %v2765
    %2958 = vmatprep.subr.bf16.mxu0 %v2764
    %2959 = vmatpush1.bf16.msra.mxu0 %v2763
    %2960 = vmatprep.subr.bf16.mxu0 %v2762
    %2961 = vmatpush1.bf16.msra.mxu0 %v2761
    %2962 = vmatprep.subr.bf16.mxu0 %v2760
    %2963 = vmatpush1.bf16.msra.mxu0 %v2759
    %2964 = vmatprep.subr.bf16.mxu0 %v2758
    %2965 = vmatpush1.bf16.msra.mxu0 %v2757
    %2966 = vmatprep.subr.bf16.mxu0 %v2756
    %2967 = vmatpush1.bf16.msra.mxu0 %v2755
    %2968 = vmatprep.subr.bf16.mxu0 %v2754
    %2969 = vmatpush1.bf16.msra.mxu0 %v2753
    %2970 = vmatprep.subr.bf16.mxu0 %v2784
    %2971 = vmatpush2.bf16.msra.mxu0 %v2783
    %2972 = vmatprep.subr.bf16.mxu0 %v2782
    %2973 = vmatpush2.bf16.msra.mxu0 %v2781
    %2974 = vmatprep.subr.bf16.mxu0 %v2780
    %2975 = vmatpush2.bf16.msra.mxu0 %v2779
    %2976 = vmatprep.subr.bf16.mxu0 %v2778
    %2977 = vmatpush2.bf16.msra.mxu0 %v2777
    %2978 = vmatprep.subr.bf16.mxu0 %v2776
    %2979 = vmatpush2.bf16.msra.mxu0 %v2775
    %2980 = vmatprep.subr.bf16.mxu0 %v2774
    %2981 = vmatpush2.bf16.msra.mxu0 %v2773
    %2982 = vmatprep.subr.bf16.mxu0 %v2772
    %2983 = vmatpush2.bf16.msra.mxu0 %v2771
    %2984 = vmatprep.subr.bf16.mxu0 %v2770
    %2985 = vmatpush2.bf16.msra.mxu0 %v2769
    %2986 = vmatprep.mubr.bf16.mxu0 %v2322
    %2987 = vmatmul.mubr.bf16.gmra.mxu0 %v2321
    %v2988 = vpop.f32.mrf.mxu0
    %v2989 = vadd.f32 %v2948, %v2988
    %v2990 = vpop.f32.mrf.mxu0
    %v2991 = vadd.f32 %v2950, %v2990
    %v2992 = vpop.f32.mrf.mxu0
    %v2993 = vpop.f32.mrf.mxu0
    %2994 = vdwg.mxu0
    %2995 = vmatprep.subr.bf16.mxu0 %v2800
    %2996 = vmatpush1.bf16.msra.mxu0 %v2799
    %2997 = vmatprep.subr.bf16.mxu0 %v2798
    %2998 = vmatpush1.bf16.msra.mxu0 %v2797
    %2999 = vmatprep.subr.bf16.mxu0 %v2796
    %3000 = vmatpush1.bf16.msra.mxu0 %v2795
    %3001 = vmatprep.subr.bf16.mxu0 %v2794
    %3002 = vmatpush1.bf16.msra.mxu0 %v2793
    %3003 = vmatprep.subr.bf16.mxu0 %v2792
    %3004 = vmatpush1.bf16.msra.mxu0 %v2791
    %3005 = vmatprep.subr.bf16.mxu0 %v2790
    %3006 = vmatpush1.bf16.msra.mxu0 %v2789
    %3007 = vmatprep.subr.bf16.mxu0 %v2788
    %3008 = vmatpush1.bf16.msra.mxu0 %v2787
    %3009 = vmatprep.subr.bf16.mxu0 %v2786
    %3010 = vmatpush1.bf16.msra.mxu0 %v2785
    %3011 = vmatprep.subr.bf16.mxu0 %v2816
    %3012 = vmatpush2.bf16.msra.mxu0 %v2815
    %3013 = vmatprep.subr.bf16.mxu0 %v2814
    %3014 = vmatpush2.bf16.msra.mxu0 %v2813
    %3015 = vmatprep.subr.bf16.mxu0 %v2812
    %3016 = vmatpush2.bf16.msra.mxu0 %v2811
    %3017 = vmatprep.subr.bf16.mxu0 %v2810
    %3018 = vmatpush2.bf16.msra.mxu0 %v2809
    %3019 = vmatprep.subr.bf16.mxu0 %v2808
    %3020 = vmatpush2.bf16.msra.mxu0 %v2807
    %3021 = vmatprep.subr.bf16.mxu0 %v2806
    %3022 = vmatpush2.bf16.msra.mxu0 %v2805
    %3023 = vmatprep.subr.bf16.mxu0 %v2804
    %3024 = vmatpush2.bf16.msra.mxu0 %v2803
    %3025 = vmatprep.subr.bf16.mxu0 %v2802
    %3026 = vmatpush2.bf16.msra.mxu0 %v2801
    %3027 = vmatprep.mubr.bf16.mxu0 %v2324
    %3028 = vmatmul.mubr.bf16.gmra.mxu0 %v2323
    %v3029 = vpop.f32.mrf.mxu0
    %v3030 = vadd.f32 %v2989, %v3029
    %v3031 = vpop.f32.mrf.mxu0
    %v3032 = vadd.f32 %v2991, %v3031
    %v3033 = vpop.f32.mrf.mxu0
    %v3034 = vpop.f32.mrf.mxu0
    %3035 = vdwg.mxu0
    %v3036 = vmax.f32 %v3030, 0.0
    %v3037 = vmax.f32 %v3032, 0.0
    %v3038 = vsel %vm412, %v3036, 0.0
    %v3039 = vrot.slane %v3038, 4
    %v3040 = vadd.f32 %v3038, %v3039
    %v3041 = vrot.slane %v3040, 2
    %v3042 = vadd.f32 %v3040, %v3041
    %v3043 = vrot.slane %v3042, 1
    %v3044 = vadd.f32 %v3042, %v3043
    %v3045 = vsel %vm412, %v3037, 0.0
    %v3046 = vrot.slane %v3045, 4
    %v3047 = vadd.f32 %v3045, %v3046
    %v3048 = vrot.slane %v3047, 2
    %v3049 = vadd.f32 %v3047, %v3048
    %v3050 = vrot.slane %v3049, 1
    %v3051 = vadd.f32 %v3049, %v3050
    %v3052 = vmul.f32 %v3036, %v3036
    %v3053 = vmul.f32 %v3037, %v3037
    %v3054 = vsel %vm412, %v3052, 0.0
    %v3055 = vrot.slane %v3054, 4
    %v3056 = vadd.f32 %v3054, %v3055
    %v3057 = vrot.slane %v3056, 2
    %v3058 = vadd.f32 %v3056, %v3057
    %v3059 = vrot.slane %v3058, 1
    %v3060 = vadd.f32 %v3058, %v3059
    %v3061 = vsel %vm412, %v3053, 0.0
    %v3062 = vrot.slane %v3061, 4
    %v3063 = vadd.f32 %v3061, %v3062
    %v3064 = vrot.slane %v3063, 2
    %v3065 = vadd.f32 %v3063, %v3064
    %v3066 = vrot.slane %v3065, 1
    %v3067 = vadd.f32 %v3065, %v3066
    %v3068 = vadd.f32 %v3044, %v3051
    %v3069 = vadd.f32 %v3060, %v3067
    %v3070 = vrcp.pop 8.0
    %v3071 = vmul.f32 %v3068, %v3070
    %v3072 = vmul.f32 %v3069, %v3070
    %v3073 = vmul.f32 %v3071, %v3071
    %v3074 = vsub.f32 %v3072, %v3073
    %v3075 = vadd.f32 %v3074, 1e-05
    %v3076 = vrsqrt.pop %v3075
    %v3077 = vld [vmem:[#allocation19] sm:$0x1]
    %v3078 = vmul.f32 %v3077, %v3076
    %v3079 = vld [vmem:[#allocation20] sm:$0x1]
    %v3080 = vmul.f32 %v3071, %v3078
    %v3081 = vsub.f32 %v3079, %v3080
    %v3082 = vlaneseq
    %v3083 = vshrl.u32 %v3082, 7
    %v3084 = vsub.s32 0, %v3083
    %v3085 = vrot.slane %v3078, %v3084
    %v3086 = vmul.f32 %v3036, %v3085
    %v3087 = vmul.f32 %v3037, %v3085
    %v3088 = vlaneseq
    %v3089 = vshrl.u32 %v3088, 7
    %v3090 = vsub.s32 0, %v3089
    %v3091 = vrot.slane %v3081, %v3090
    %v3092 = vadd.f32 %v3086, %v3091
    %v3093 = vadd.f32 %v3087, %v3091
    %v3096 = vcombine.low %v3092, %v3093
    %v3098 = vunpack.c.l.s4 1966171168
    %v3099 = vunpack.c.0.s8 %v3098
    %v3100 = vlaneseq
    %v3101 = vshrl.u32 %v3100, 7
    %v3102 = vsub.s32 %v3099, %v3101
    %v3103 = vrot.slane %v3096, %v3102
    %v3104 = vcombine.high %v3103, %v3103
    %v3106 = vunpack.c.l.s4 1966171168
    %v3107 = vunpack.c.0.s8 %v3106
    %v3108 = vlaneseq
    %v3109 = vshrl.u32 %v3108, 7
    %v3110 = vsub.s32 %v3107, %v3109
    %v3111 = vrot.slane %v3103, %v3110
    %v3113 = vunpack.c.l.s4 1966171168
    %v3114 = vunpack.c.0.s8 %v3113
    %v3115 = vlaneseq
    %v3116 = vshrl.u32 %v3115, 7
    %v3117 = vsub.s32 %v3114, %v3116
    %v3118 = vrot.slane %v3104, %v3117
    %s3121 = scalar_lea.vmem [#allocation4], 4
    %3122 = vst.msk [vmem:[%s3121] ss:$2 sm:$0x3] %vm813, %v3111
    %s3123 = scalar_lea.vmem %s3121, 8 [#allocation4]
    %3124 = vst.msk [vmem:[%s3123] ss:$2 sm:$0x3] %vm813, %v3118
    %v3125 = vcombine.high %v3111, %v3111
    %v3126 = vcombine.high %v3118, %v3118
    %s3129 = scalar_lea.vmem [#allocation4], 1
    %3130 = vst.msk [vmem:[%s3129] ss:$2 sm:$0x3] %vm813, %v3125
    %s3131 = scalar_lea.vmem [#allocation4], 9
    %3132 = vst.msk [vmem:[%s3131] ss:$2 sm:$0x3] %vm813, %v3126
    %3133 = vst.msk [vmem:[#allocation4] ss:$2 sm:$0x3] %vm813, 0.0
    %s3134 = scalar_lea.vmem [#allocation4], 8
    %3135 = vst.msk [vmem:[%s3134] ss:$2 sm:$0x3] %vm813, 0.0
    %s3136 = scalar_lea.vmem %s3121, 1 [#allocation4]
    %3137 = vst.msk [vmem:[%s3136] ss:$2 sm:$0x3] %vm813, 0.0
    %s3138 = scalar_lea.vmem %s3121, 9 [#allocation4]
    %3139 = vst.msk [vmem:[%s3138] ss:$2 sm:$0x3] %vm813, 0.0
    %v3140 = vld [vmem:[#allocation4] ss:$2 sm:$0x3]
    %v3141 = vld [vmem:[%s3134] ss:$2 sm:$0x3]
    %v3142 = vld [vmem:[%s3121] ss:$2 sm:$0x3]
    %v3143 = vld [vmem:[%s3123] ss:$2 sm:$0x3]
    %v3144 = vld [vmem:[%s3129] ss:$2 sm:$0x3]
    %v3145 = vld [vmem:[%s3131] ss:$2 sm:$0x3]
    %v3148 = vcombine.low %v3140, %v3141
    %v3150 = vunpack.c.l.s4 1966171168
    %v3151 = vunpack.c.0.s8 %v3150
    %v3152 = vlaneseq
    %v3153 = vshrl.u32 %v3152, 7
    %v3154 = vsub.s32 %v3151, %v3153
    %v3155 = vrot.slane %v3148, %v3154
    %v3156 = vcombine.high %v3155, %v3155
    %v3158 = vunpack.c.l.s4 1966171168
    %v3159 = vunpack.c.0.s8 %v3158
    %v3160 = vlaneseq
    %v3161 = vshrl.u32 %v3160, 7
    %v3162 = vsub.s32 %v3159, %v3161
    %v3163 = vrot.slane %v3155, %v3162
    %v3165 = vunpack.c.l.s4 1966171168
    %v3166 = vunpack.c.0.s8 %v3165
    %v3167 = vlaneseq
    %v3168 = vshrl.u32 %v3167, 7
    %v3169 = vsub.s32 %v3166, %v3168
    %v3170 = vrot.slane %v3156, %v3169
    %v3175 = vcombine.low %v3142, %v3143
    %v3177 = vunpack.c.l.s4 1966171168
    %v3178 = vunpack.c.0.s8 %v3177
    %v3179 = vlaneseq
    %v3180 = vshrl.u32 %v3179, 7
    %v3181 = vsub.s32 %v3178, %v3180
    %v3182 = vrot.slane %v3175, %v3181
    %v3183 = vcombine.high %v3182, %v3182
    %v3185 = vunpack.c.l.s4 1966171168
    %v3186 = vunpack.c.0.s8 %v3185
    %v3187 = vlaneseq
    %v3188 = vshrl.u32 %v3187, 7
    %v3189 = vsub.s32 %v3186, %v3188
    %v3190 = vrot.slane %v3182, %v3189
    %v3192 = vunpack.c.l.s4 1966171168
    %v3193 = vunpack.c.0.s8 %v3192
    %v3194 = vlaneseq
    %v3195 = vshrl.u32 %v3194, 7
    %v3196 = vsub.s32 %v3193, %v3195
    %v3197 = vrot.slane %v3183, %v3196
    %v3202 = vcombine.low %v3144, %v3145
    %v3204 = vunpack.c.l.s4 1966171168
    %v3205 = vunpack.c.0.s8 %v3204
    %v3206 = vlaneseq
    %v3207 = vshrl.u32 %v3206, 7
    %v3208 = vsub.s32 %v3205, %v3207
    %v3209 = vrot.slane %v3202, %v3208
    %v3210 = vcombine.high %v3209, %v3209
    %v3212 = vunpack.c.l.s4 1966171168
    %v3213 = vunpack.c.0.s8 %v3212
    %v3214 = vlaneseq
    %v3215 = vshrl.u32 %v3214, 7
    %v3216 = vsub.s32 %v3213, %v3215
    %v3217 = vrot.slane %v3209, %v3216
    %v3219 = vunpack.c.l.s4 1966171168
    %v3220 = vunpack.c.0.s8 %v3219
    %v3221 = vlaneseq
    %v3222 = vshrl.u32 %v3221, 7
    %v3223 = vsub.s32 %v3220, %v3222
    %v3224 = vrot.slane %v3210, %v3223
    %v3227 = vpack.c.bf16 %v3163, %v3163
    %v3228 = vpack.c.bf16 %v3170, %v3170
    %v3229 = vpack.c.bf16 %v3190, %v3190
    %v3230 = vpack.c.bf16 %v3197, %v3197
    %v3231 = vpack.c.bf16 %v3217, %v3217
    %v3232 = vpack.c.bf16 %v3224, %v3224
    %v3233 = vld [vmem:[#allocation22] sm:$0xff]
    %v3234 = vld [vmem:[#allocation22 + $0x8] sm:$0xff]
    %v3235 = vld [vmem:[#allocation22 + $0x10] sm:$0xff]
    %v3236 = vld [vmem:[#allocation22 + $0x18] sm:$0xff]
    %v3237 = vld [vmem:[#allocation22 + $0x20] sm:$0xff]
    %v3238 = vld [vmem:[#allocation22 + $0x28] sm:$0xff]
    %v3239 = vld [vmem:[#allocation22 + $0x30] sm:$0xff]
    %v3240 = vld [vmem:[#allocation22 + $0x38] sm:$0xff]
    %v3241 = vld [vmem:[#allocation22 + $0x40] sm:$0xff]
    %v3242 = vld [vmem:[#allocation22 + $0x48] sm:$0xff]
    %v3243 = vld [vmem:[#allocation22 + $0x50] sm:$0xff]
    %v3244 = vld [vmem:[#allocation22 + $0x58] sm:$0xff]
    %v3245 = vld [vmem:[#allocation22 + $0x60] sm:$0xff]
    %v3246 = vld [vmem:[#allocation22 + $0x68] sm:$0xff]
    %v3247 = vld [vmem:[#allocation22 + $0x70] sm:$0xff]
    %v3248 = vld [vmem:[#allocation22 + $0x78] sm:$0xff]
    %v3249 = vld [vmem:[#allocation22 + $0x80] sm:$0xff]
    %v3250 = vld [vmem:[#allocation22 + $0x88] sm:$0xff]
    %v3251 = vld [vmem:[#allocation22 + $0x90] sm:$0xff]
    %v3252 = vld [vmem:[#allocation22 + $0x98] sm:$0xff]
    %v3253 = vld [vmem:[#allocation22 + $0xa0] sm:$0xff]
    %v3254 = vld [vmem:[#allocation22 + $0xa8] sm:$0xff]
    %v3255 = vld [vmem:[#allocation22 + $0xb0] sm:$0xff]
    %v3256 = vld [vmem:[#allocation22 + $0xb8] sm:$0xff]
    %v3257 = vld [vmem:[#allocation22 + $0xc0] sm:$0xff]
    %v3258 = vld [vmem:[#allocation22 + $0xc8] sm:$0xff]
    %v3259 = vld [vmem:[#allocation22 + $0xd0] sm:$0xff]
    %v3260 = vld [vmem:[#allocation22 + $0xd8] sm:$0xff]
    %v3261 = vld [vmem:[#allocation22 + $0xe0] sm:$0xff]
    %v3262 = vld [vmem:[#allocation22 + $0xe8] sm:$0xff]
    %v3263 = vld [vmem:[#allocation22 + $0xf0] sm:$0xff]
    %v3264 = vld [vmem:[#allocation22 + $0xf8] sm:$0xff]
    %v3265 = vld [vmem:[#allocation22 + $0x100] sm:$0xff]
    %v3266 = vld [vmem:[#allocation22 + $0x108] sm:$0xff]
    %v3267 = vld [vmem:[#allocation22 + $0x110] sm:$0xff]
    %v3268 = vld [vmem:[#allocation22 + $0x118] sm:$0xff]
    %v3269 = vld [vmem:[#allocation22 + $0x120] sm:$0xff]
    %v3270 = vld [vmem:[#allocation22 + $0x128] sm:$0xff]
    %v3271 = vld [vmem:[#allocation22 + $0x130] sm:$0xff]
    %v3272 = vld [vmem:[#allocation22 + $0x138] sm:$0xff]
    %v3273 = vld [vmem:[#allocation22 + $0x140] sm:$0xff]
    %v3274 = vld [vmem:[#allocation22 + $0x148] sm:$0xff]
    %v3275 = vld [vmem:[#allocation22 + $0x150] sm:$0xff]
    %v3276 = vld [vmem:[#allocation22 + $0x158] sm:$0xff]
    %v3277 = vld [vmem:[#allocation22 + $0x160] sm:$0xff]
    %v3278 = vld [vmem:[#allocation22 + $0x168] sm:$0xff]
    %v3279 = vld [vmem:[#allocation22 + $0x170] sm:$0xff]
    %v3280 = vld [vmem:[#allocation22 + $0x178] sm:$0xff]
    %v3281 = vld [vmem:[#allocation22 + $0x180] sm:$0xff]
    %v3282 = vld [vmem:[#allocation22 + $0x188] sm:$0xff]
    %v3283 = vld [vmem:[#allocation22 + $0x190] sm:$0xff]
    %v3284 = vld [vmem:[#allocation22 + $0x198] sm:$0xff]
    %v3285 = vld [vmem:[#allocation22 + $0x1a0] sm:$0xff]
    %v3286 = vld [vmem:[#allocation22 + $0x1a8] sm:$0xff]
    %v3287 = vld [vmem:[#allocation22 + $0x1b0] sm:$0xff]
    %v3288 = vld [vmem:[#allocation22 + $0x1b8] sm:$0xff]
    %v3289 = vld [vmem:[#allocation22 + $0x1c0] sm:$0xff]
    %v3290 = vld [vmem:[#allocation22 + $0x1c8] sm:$0xff]
    %v3291 = vld [vmem:[#allocation22 + $0x1d0] sm:$0xff]
    %v3292 = vld [vmem:[#allocation22 + $0x1d8] sm:$0xff]
    %v3293 = vld [vmem:[#allocation22 + $0x1e0] sm:$0xff]
    %v3294 = vld [vmem:[#allocation22 + $0x1e8] sm:$0xff]
    %v3295 = vld [vmem:[#allocation22 + $0x1f0] sm:$0xff]
    %v3296 = vld [vmem:[#allocation22 + $0x1f8] sm:$0xff]
    %v3297 = vld [vmem:[#allocation22 + $0x200] sm:$0xff]
    %v3298 = vld [vmem:[#allocation22 + $0x208] sm:$0xff]
    %v3299 = vld [vmem:[#allocation22 + $0x210] sm:$0xff]
    %v3300 = vld [vmem:[#allocation22 + $0x218] sm:$0xff]
    %v3301 = vld [vmem:[#allocation22 + $0x220] sm:$0xff]
    %v3302 = vld [vmem:[#allocation22 + $0x228] sm:$0xff]
    %v3303 = vld [vmem:[#allocation22 + $0x230] sm:$0xff]
    %v3304 = vld [vmem:[#allocation22 + $0x238] sm:$0xff]
    %v3305 = vld [vmem:[#allocation22 + $0x240] sm:$0xff]
    %v3306 = vld [vmem:[#allocation22 + $0x248] sm:$0xff]
    %v3307 = vld [vmem:[#allocation22 + $0x250] sm:$0xff]
    %v3308 = vld [vmem:[#allocation22 + $0x258] sm:$0xff]
    %v3309 = vld [vmem:[#allocation22 + $0x260] sm:$0xff]
    %v3310 = vld [vmem:[#allocation22 + $0x268] sm:$0xff]
    %v3311 = vld [vmem:[#allocation22 + $0x270] sm:$0xff]
    %v3312 = vld [vmem:[#allocation22 + $0x278] sm:$0xff]
    %v3313 = vld [vmem:[#allocation22 + $0x280] sm:$0xff]
    %v3314 = vld [vmem:[#allocation22 + $0x288] sm:$0xff]
    %v3315 = vld [vmem:[#allocation22 + $0x290] sm:$0xff]
    %v3316 = vld [vmem:[#allocation22 + $0x298] sm:$0xff]
    %v3317 = vld [vmem:[#allocation22 + $0x2a0] sm:$0xff]
    %v3318 = vld [vmem:[#allocation22 + $0x2a8] sm:$0xff]
    %v3319 = vld [vmem:[#allocation22 + $0x2b0] sm:$0xff]
    %v3320 = vld [vmem:[#allocation22 + $0x2b8] sm:$0xff]
    %v3321 = vld [vmem:[#allocation22 + $0x2c0] sm:$0xff]
    %v3322 = vld [vmem:[#allocation22 + $0x2c8] sm:$0xff]
    %v3323 = vld [vmem:[#allocation22 + $0x2d0] sm:$0xff]
    %v3324 = vld [vmem:[#allocation22 + $0x2d8] sm:$0xff]
    %v3325 = vld [vmem:[#allocation22 + $0x2e0] sm:$0xff]
    %v3326 = vld [vmem:[#allocation22 + $0x2e8] sm:$0xff]
    %v3327 = vld [vmem:[#allocation22 + $0x2f0] sm:$0xff]
    %v3328 = vld [vmem:[#allocation22 + $0x2f8] sm:$0xff]
    %v3329 = vld [vmem:[#allocation23] sm:$0x3]
    %v3331 = vlaneseq
    %v3332 = vshrl.u32 %v3331, 7
    %v3333 = vsub.s32 0, %v3332
    %v3334 = vrot.slane %v3329, %v3333
    %v3335 = vlaneseq
    %v3336 = vshrl.u32 %v3335, 7
    %v3337 = vsub.s32 1, %v3336
    %v3338 = vrot.slane %v3329, %v3337
    %v3437 = vunpack.c.l.b16 %v3233
    %v3438 = vunpack.c.h.b16 %v3233
    %v3439 = vunpack.c.l.b16 %v3234
    %v3440 = vunpack.c.h.b16 %v3234
    %v3441 = vunpack.c.l.b16 %v3235
    %v3442 = vunpack.c.h.b16 %v3235
    %v3443 = vunpack.c.l.b16 %v3236
    %v3444 = vunpack.c.h.b16 %v3236
    %v3445 = vunpack.c.l.b16 %v3237
    %v3446 = vunpack.c.h.b16 %v3237
    %v3447 = vunpack.c.l.b16 %v3238
    %v3448 = vunpack.c.h.b16 %v3238
    %v3449 = vunpack.c.l.b16 %v3239
    %v3450 = vunpack.c.h.b16 %v3239
    %v3451 = vunpack.c.l.b16 %v3240
    %v3452 = vunpack.c.h.b16 %v3240
    %v3453 = vunpack.c.l.b16 %v3241
    %v3454 = vunpack.c.h.b16 %v3241
    %v3455 = vunpack.c.l.b16 %v3242
    %v3456 = vunpack.c.h.b16 %v3242
    %v3457 = vunpack.c.l.b16 %v3243
    %v3458 = vunpack.c.h.b16 %v3243
    %v3459 = vunpack.c.l.b16 %v3244
    %v3460 = vunpack.c.h.b16 %v3244
    %v3461 = vunpack.c.l.b16 %v3245
    %v3462 = vunpack.c.h.b16 %v3245
    %v3463 = vunpack.c.l.b16 %v3246
    %v3464 = vunpack.c.h.b16 %v3246
    %v3465 = vunpack.c.l.b16 %v3247
    %v3466 = vunpack.c.h.b16 %v3247
    %v3467 = vunpack.c.l.b16 %v3248
    %v3468 = vunpack.c.h.b16 %v3248
    %v3469 = vunpack.c.l.b16 %v3249
    %v3470 = vunpack.c.h.b16 %v3249
    %v3471 = vunpack.c.l.b16 %v3250
    %v3472 = vunpack.c.h.b16 %v3250
    %v3473 = vunpack.c.l.b16 %v3251
    %v3474 = vunpack.c.h.b16 %v3251
    %v3475 = vunpack.c.l.b16 %v3252
    %v3476 = vunpack.c.h.b16 %v3252
    %v3477 = vunpack.c.l.b16 %v3253
    %v3478 = vunpack.c.h.b16 %v3253
    %v3479 = vunpack.c.l.b16 %v3254
    %v3480 = vunpack.c.h.b16 %v3254
    %v3481 = vunpack.c.l.b16 %v3255
    %v3482 = vunpack.c.h.b16 %v3255
    %v3483 = vunpack.c.l.b16 %v3256
    %v3484 = vunpack.c.h.b16 %v3256
    %v3485 = vunpack.c.l.b16 %v3257
    %v3486 = vunpack.c.h.b16 %v3257
    %v3487 = vunpack.c.l.b16 %v3258
    %v3488 = vunpack.c.h.b16 %v3258
    %v3489 = vunpack.c.l.b16 %v3259
    %v3490 = vunpack.c.h.b16 %v3259
    %v3491 = vunpack.c.l.b16 %v3260
    %v3492 = vunpack.c.h.b16 %v3260
    %v3493 = vunpack.c.l.b16 %v3261
    %v3494 = vunpack.c.h.b16 %v3261
    %v3495 = vunpack.c.l.b16 %v3262
    %v3496 = vunpack.c.h.b16 %v3262
    %v3497 = vunpack.c.l.b16 %v3263
    %v3498 = vunpack.c.h.b16 %v3263
    %v3499 = vunpack.c.l.b16 %v3264
    %v3500 = vunpack.c.h.b16 %v3264
    %v3501 = vunpack.c.l.b16 %v3265
    %v3502 = vunpack.c.h.b16 %v3265
    %v3503 = vunpack.c.l.b16 %v3266
    %v3504 = vunpack.c.h.b16 %v3266
    %v3505 = vunpack.c.l.b16 %v3267
    %v3506 = vunpack.c.h.b16 %v3267
    %v3507 = vunpack.c.l.b16 %v3268
    %v3508 = vunpack.c.h.b16 %v3268
    %v3509 = vunpack.c.l.b16 %v3269
    %v3510 = vunpack.c.h.b16 %v3269
    %v3511 = vunpack.c.l.b16 %v3270
    %v3512 = vunpack.c.h.b16 %v3270
    %v3513 = vunpack.c.l.b16 %v3271
    %v3514 = vunpack.c.h.b16 %v3271
    %v3515 = vunpack.c.l.b16 %v3272
    %v3516 = vunpack.c.h.b16 %v3272
    %v3517 = vunpack.c.l.b16 %v3273
    %v3518 = vunpack.c.h.b16 %v3273
    %v3519 = vunpack.c.l.b16 %v3274
    %v3520 = vunpack.c.h.b16 %v3274
    %v3521 = vunpack.c.l.b16 %v3275
    %v3522 = vunpack.c.h.b16 %v3275
    %v3523 = vunpack.c.l.b16 %v3276
    %v3524 = vunpack.c.h.b16 %v3276
    %v3525 = vunpack.c.l.b16 %v3277
    %v3526 = vunpack.c.h.b16 %v3277
    %v3527 = vunpack.c.l.b16 %v3278
    %v3528 = vunpack.c.h.b16 %v3278
    %v3529 = vunpack.c.l.b16 %v3279
    %v3530 = vunpack.c.h.b16 %v3279
    %v3531 = vunpack.c.l.b16 %v3280
    %v3532 = vunpack.c.h.b16 %v3280
    %v3533 = vunpack.c.l.b16 %v3281
    %v3534 = vunpack.c.h.b16 %v3281
    %v3535 = vunpack.c.l.b16 %v3282
    %v3536 = vunpack.c.h.b16 %v3282
    %v3537 = vunpack.c.l.b16 %v3283
    %v3538 = vunpack.c.h.b16 %v3283
    %v3539 = vunpack.c.l.b16 %v3284
    %v3540 = vunpack.c.h.b16 %v3284
    %v3541 = vunpack.c.l.b16 %v3285
    %v3542 = vunpack.c.h.b16 %v3285
    %v3543 = vunpack.c.l.b16 %v3286
    %v3544 = vunpack.c.h.b16 %v3286
    %v3545 = vunpack.c.l.b16 %v3287
    %v3546 = vunpack.c.h.b16 %v3287
    %v3547 = vunpack.c.l.b16 %v3288
    %v3548 = vunpack.c.h.b16 %v3288
    %v3549 = vunpack.c.l.b16 %v3289
    %v3550 = vunpack.c.h.b16 %v3289
    %v3551 = vunpack.c.l.b16 %v3290
    %v3552 = vunpack.c.h.b16 %v3290
    %v3553 = vunpack.c.l.b16 %v3291
    %v3554 = vunpack.c.h.b16 %v3291
    %v3555 = vunpack.c.l.b16 %v3292
    %v3556 = vunpack.c.h.b16 %v3292
    %v3557 = vunpack.c.l.b16 %v3293
    %v3558 = vunpack.c.h.b16 %v3293
    %v3559 = vunpack.c.l.b16 %v3294
    %v3560 = vunpack.c.h.b16 %v3294
    %v3561 = vunpack.c.l.b16 %v3295
    %v3562 = vunpack.c.h.b16 %v3295
    %v3563 = vunpack.c.l.b16 %v3296
    %v3564 = vunpack.c.h.b16 %v3296
    %v3565 = vunpack.c.l.b16 %v3297
    %v3566 = vunpack.c.h.b16 %v3297
    %v3567 = vunpack.c.l.b16 %v3298
    %v3568 = vunpack.c.h.b16 %v3298
    %v3569 = vunpack.c.l.b16 %v3299
    %v3570 = vunpack.c.h.b16 %v3299
    %v3571 = vunpack.c.l.b16 %v3300
    %v3572 = vunpack.c.h.b16 %v3300
    %v3573 = vunpack.c.l.b16 %v3301
    %v3574 = vunpack.c.h.b16 %v3301
    %v3575 = vunpack.c.l.b16 %v3302
    %v3576 = vunpack.c.h.b16 %v3302
    %v3577 = vunpack.c.l.b16 %v3303
    %v3578 = vunpack.c.h.b16 %v3303
    %v3579 = vunpack.c.l.b16 %v3304
    %v3580 = vunpack.c.h.b16 %v3304
    %v3581 = vunpack.c.l.b16 %v3305
    %v3582 = vunpack.c.h.b16 %v3305
    %v3583 = vunpack.c.l.b16 %v3306
    %v3584 = vunpack.c.h.b16 %v3306
    %v3585 = vunpack.c.l.b16 %v3307
    %v3586 = vunpack.c.h.b16 %v3307
    %v3587 = vunpack.c.l.b16 %v3308
    %v3588 = vunpack.c.h.b16 %v3308
    %v3589 = vunpack.c.l.b16 %v3309
    %v3590 = vunpack.c.h.b16 %v3309
    %v3591 = vunpack.c.l.b16 %v3310
    %v3592 = vunpack.c.h.b16 %v3310
    %v3593 = vunpack.c.l.b16 %v3311
    %v3594 = vunpack.c.h.b16 %v3311
    %v3595 = vunpack.c.l.b16 %v3312
    %v3596 = vunpack.c.h.b16 %v3312
    %v3597 = vunpack.c.l.b16 %v3313
    %v3598 = vunpack.c.h.b16 %v3313
    %v3599 = vunpack.c.l.b16 %v3314
    %v3600 = vunpack.c.h.b16 %v3314
    %v3601 = vunpack.c.l.b16 %v3315
    %v3602 = vunpack.c.h.b16 %v3315
    %v3603 = vunpack.c.l.b16 %v3316
    %v3604 = vunpack.c.h.b16 %v3316
    %v3605 = vunpack.c.l.b16 %v3317
    %v3606 = vunpack.c.h.b16 %v3317
    %v3607 = vunpack.c.l.b16 %v3318
    %v3608 = vunpack.c.h.b16 %v3318
    %v3609 = vunpack.c.l.b16 %v3319
    %v3610 = vunpack.c.h.b16 %v3319
    %v3611 = vunpack.c.l.b16 %v3320
    %v3612 = vunpack.c.h.b16 %v3320
    %v3613 = vunpack.c.l.b16 %v3321
    %v3614 = vunpack.c.h.b16 %v3321
    %v3615 = vunpack.c.l.b16 %v3322
    %v3616 = vunpack.c.h.b16 %v3322
    %v3617 = vunpack.c.l.b16 %v3323
    %v3618 = vunpack.c.h.b16 %v3323
    %v3619 = vunpack.c.l.b16 %v3324
    %v3620 = vunpack.c.h.b16 %v3324
    %v3621 = vunpack.c.l.b16 %v3325
    %v3622 = vunpack.c.h.b16 %v3325
    %v3623 = vunpack.c.l.b16 %v3326
    %v3624 = vunpack.c.h.b16 %v3326
    %v3625 = vunpack.c.l.b16 %v3327
    %v3626 = vunpack.c.h.b16 %v3327
    %v3627 = vunpack.c.l.b16 %v3328
    %v3628 = vunpack.c.h.b16 %v3328
    %v3629 = vpack.c.b16 %v3439, %v3437
    %v3630 = vpack.c.b16 %v3440, %v3438
    %v3631 = vpack.c.b16 %v3443, %v3441
    %v3632 = vpack.c.b16 %v3444, %v3442
    %v3633 = vpack.c.b16 %v3447, %v3445
    %v3634 = vpack.c.b16 %v3448, %v3446
    %v3635 = vpack.c.b16 %v3451, %v3449
    %v3636 = vpack.c.b16 %v3452, %v3450
    %v3637 = vpack.c.b16 %v3455, %v3453
    %v3638 = vpack.c.b16 %v3456, %v3454
    %v3639 = vpack.c.b16 %v3459, %v3457
    %v3640 = vpack.c.b16 %v3460, %v3458
    %v3641 = vpack.c.b16 %v3463, %v3461
    %v3642 = vpack.c.b16 %v3464, %v3462
    %v3643 = vpack.c.b16 %v3467, %v3465
    %v3644 = vpack.c.b16 %v3468, %v3466
    %v3645 = vpack.c.b16 %v3471, %v3469
    %v3646 = vpack.c.b16 %v3472, %v3470
    %v3647 = vpack.c.b16 %v3475, %v3473
    %v3648 = vpack.c.b16 %v3476, %v3474
    %v3649 = vpack.c.b16 %v3479, %v3477
    %v3650 = vpack.c.b16 %v3480, %v3478
    %v3651 = vpack.c.b16 %v3483, %v3481
    %v3652 = vpack.c.b16 %v3484, %v3482
    %v3653 = vpack.c.b16 %v3487, %v3485
    %v3654 = vpack.c.b16 %v3488, %v3486
    %v3655 = vpack.c.b16 %v3491, %v3489
    %v3656 = vpack.c.b16 %v3492, %v3490
    %v3657 = vpack.c.b16 %v3495, %v3493
    %v3658 = vpack.c.b16 %v3496, %v3494
    %v3659 = vpack.c.b16 %v3499, %v3497
    %v3660 = vpack.c.b16 %v3500, %v3498
    %v3661 = vpack.c.b16 %v3503, %v3501
    %v3662 = vpack.c.b16 %v3504, %v3502
    %v3663 = vpack.c.b16 %v3507, %v3505
    %v3664 = vpack.c.b16 %v3508, %v3506
    %v3665 = vpack.c.b16 %v3511, %v3509
    %v3666 = vpack.c.b16 %v3512, %v3510
    %v3667 = vpack.c.b16 %v3515, %v3513
    %v3668 = vpack.c.b16 %v3516, %v3514
    %v3669 = vpack.c.b16 %v3519, %v3517
    %v3670 = vpack.c.b16 %v3520, %v3518
    %v3671 = vpack.c.b16 %v3523, %v3521
    %v3672 = vpack.c.b16 %v3524, %v3522
    %v3673 = vpack.c.b16 %v3527, %v3525
    %v3674 = vpack.c.b16 %v3528, %v3526
    %v3675 = vpack.c.b16 %v3531, %v3529
    %v3676 = vpack.c.b16 %v3532, %v3530
    %v3677 = vpack.c.b16 %v3535, %v3533
    %v3678 = vpack.c.b16 %v3536, %v3534
    %v3679 = vpack.c.b16 %v3539, %v3537
    %v3680 = vpack.c.b16 %v3540, %v3538
    %v3681 = vpack.c.b16 %v3543, %v3541
    %v3682 = vpack.c.b16 %v3544, %v3542
    %v3683 = vpack.c.b16 %v3547, %v3545
    %v3684 = vpack.c.b16 %v3548, %v3546
    %v3685 = vpack.c.b16 %v3551, %v3549
    %v3686 = vpack.c.b16 %v3552, %v3550
    %v3687 = vpack.c.b16 %v3555, %v3553
    %v3688 = vpack.c.b16 %v3556, %v3554
    %v3689 = vpack.c.b16 %v3559, %v3557
    %v3690 = vpack.c.b16 %v3560, %v3558
    %v3691 = vpack.c.b16 %v3563, %v3561
    %v3692 = vpack.c.b16 %v3564, %v3562
    %v3693 = vpack.c.b16 %v3567, %v3565
    %v3694 = vpack.c.b16 %v3568, %v3566
    %v3695 = vpack.c.b16 %v3571, %v3569
    %v3696 = vpack.c.b16 %v3572, %v3570
    %v3697 = vpack.c.b16 %v3575, %v3573
    %v3698 = vpack.c.b16 %v3576, %v3574
    %v3699 = vpack.c.b16 %v3579, %v3577
    %v3700 = vpack.c.b16 %v3580, %v3578
    %v3701 = vpack.c.b16 %v3583, %v3581
    %v3702 = vpack.c.b16 %v3584, %v3582
    %v3703 = vpack.c.b16 %v3587, %v3585
    %v3704 = vpack.c.b16 %v3588, %v3586
    %v3705 = vpack.c.b16 %v3591, %v3589
    %v3706 = vpack.c.b16 %v3592, %v3590
    %v3707 = vpack.c.b16 %v3595, %v3593
    %v3708 = vpack.c.b16 %v3596, %v3594
    %v3709 = vpack.c.b16 %v3599, %v3597
    %v3710 = vpack.c.b16 %v3600, %v3598
    %v3711 = vpack.c.b16 %v3603, %v3601
    %v3712 = vpack.c.b16 %v3604, %v3602
    %v3713 = vpack.c.b16 %v3607, %v3605
    %v3714 = vpack.c.b16 %v3608, %v3606
    %v3715 = vpack.c.b16 %v3611, %v3609
    %v3716 = vpack.c.b16 %v3612, %v3610
    %v3717 = vpack.c.b16 %v3615, %v3613
    %v3718 = vpack.c.b16 %v3616, %v3614
    %v3719 = vpack.c.b16 %v3619, %v3617
    %v3720 = vpack.c.b16 %v3620, %v3618
    %v3721 = vpack.c.b16 %v3623, %v3621
    %v3722 = vpack.c.b16 %v3624, %v3622
    %v3723 = vpack.c.b16 %v3627, %v3625
    %v3724 = vpack.c.b16 %v3628, %v3626
    %3821 = vmatprep.subr.bf16.mxu0 %v3644
    %3822 = vmatpush1.bf16.msra.mxu0 %v3643
    %3823 = vmatprep.subr.bf16.mxu0 %v3642
    %3824 = vmatpush1.bf16.msra.mxu0 %v3641
    %3825 = vmatprep.subr.bf16.mxu0 %v3640
    %3826 = vmatpush1.bf16.msra.mxu0 %v3639
    %3827 = vmatprep.subr.bf16.mxu0 %v3638
    %3828 = vmatpush1.bf16.msra.mxu0 %v3637
    %3829 = vmatprep.subr.bf16.mxu0 %v3636
    %3830 = vmatpush1.bf16.msra.mxu0 %v3635
    %3831 = vmatprep.subr.bf16.mxu0 %v3634
    %3832 = vmatpush1.bf16.msra.mxu0 %v3633
    %3833 = vmatprep.subr.bf16.mxu0 %v3632
    %3834 = vmatpush1.bf16.msra.mxu0 %v3631
    %3835 = vmatprep.subr.bf16.mxu0 %v3630
    %3836 = vmatpush1.bf16.msra.mxu0 %v3629
    %3837 = vmatprep.subr.bf16.mxu0 %v3660
    %3838 = vmatpush2.bf16.msra.mxu0 %v3659
    %3839 = vmatprep.subr.bf16.mxu0 %v3658
    %3840 = vmatpush2.bf16.msra.mxu0 %v3657
    %3841 = vmatprep.subr.bf16.mxu0 %v3656
    %3842 = vmatpush2.bf16.msra.mxu0 %v3655
    %3843 = vmatprep.subr.bf16.mxu0 %v3654
    %3844 = vmatpush2.bf16.msra.mxu0 %v3653
    %3845 = vmatprep.subr.bf16.mxu0 %v3652
    %3846 = vmatpush2.bf16.msra.mxu0 %v3651
    %3847 = vmatprep.subr.bf16.mxu0 %v3650
    %3848 = vmatpush2.bf16.msra.mxu0 %v3649
    %3849 = vmatprep.subr.bf16.mxu0 %v3648
    %3850 = vmatpush2.bf16.msra.mxu0 %v3647
    %3851 = vmatprep.subr.bf16.mxu0 %v3646
    %3852 = vmatpush2.bf16.msra.mxu0 %v3645
    %3853 = vmatprep.mubr.bf16.mxu0 %v3228
    %3854 = vmatmul.mubr.bf16.gmra.mxu0 %v3227
    %v3855 = vpop.f32.mrf.mxu0
    %v3856 = vadd.f32 %v3334, %v3855
    %v3857 = vpop.f32.mrf.mxu0
    %v3858 = vadd.f32 %v3338, %v3857
    %v3859 = vpop.f32.mrf.mxu0
    %v3860 = vpop.f32.mrf.mxu0
    %3861 = vdwg.mxu0
    %3862 = vmatprep.subr.bf16.mxu0 %v3676
    %3863 = vmatpush1.bf16.msra.mxu0 %v3675
    %3864 = vmatprep.subr.bf16.mxu0 %v3674
    %3865 = vmatpush1.bf16.msra.mxu0 %v3673
    %3866 = vmatprep.subr.bf16.mxu0 %v3672
    %3867 = vmatpush1.bf16.msra.mxu0 %v3671
    %3868 = vmatprep.subr.bf16.mxu0 %v3670
    %3869 = vmatpush1.bf16.msra.mxu0 %v3669
    %3870 = vmatprep.subr.bf16.mxu0 %v3668
    %3871 = vmatpush1.bf16.msra.mxu0 %v3667
    %3872 = vmatprep.subr.bf16.mxu0 %v3666
    %3873 = vmatpush1.bf16.msra.mxu0 %v3665
    %3874 = vmatprep.subr.bf16.mxu0 %v3664
    %3875 = vmatpush1.bf16.msra.mxu0 %v3663
    %3876 = vmatprep.subr.bf16.mxu0 %v3662
    %3877 = vmatpush1.bf16.msra.mxu0 %v3661
    %3878 = vmatprep.subr.bf16.mxu0 %v3692
    %3879 = vmatpush2.bf16.msra.mxu0 %v3691
    %3880 = vmatprep.subr.bf16.mxu0 %v3690
    %3881 = vmatpush2.bf16.msra.mxu0 %v3689
    %3882 = vmatprep.subr.bf16.mxu0 %v3688
    %3883 = vmatpush2.bf16.msra.mxu0 %v3687
    %3884 = vmatprep.subr.bf16.mxu0 %v3686
    %3885 = vmatpush2.bf16.msra.mxu0 %v3685
    %3886 = vmatprep.subr.bf16.mxu0 %v3684
    %3887 = vmatpush2.bf16.msra.mxu0 %v3683
    %3888 = vmatprep.subr.bf16.mxu0 %v3682
    %3889 = vmatpush2.bf16.msra.mxu0 %v3681
    %3890 = vmatprep.subr.bf16.mxu0 %v3680
    %3891 = vmatpush2.bf16.msra.mxu0 %v3679
    %3892 = vmatprep.subr.bf16.mxu0 %v3678
    %3893 = vmatpush2.bf16.msra.mxu0 %v3677
    %3894 = vmatprep.mubr.bf16.mxu0 %v3230
    %3895 = vmatmul.mubr.bf16.gmra.mxu0 %v3229
    %v3896 = vpop.f32.mrf.mxu0
    %v3897 = vadd.f32 %v3856, %v3896
    %v3898 = vpop.f32.mrf.mxu0
    %v3899 = vadd.f32 %v3858, %v3898
    %v3900 = vpop.f32.mrf.mxu0
    %v3901 = vpop.f32.mrf.mxu0
    %3902 = vdwg.mxu0
    %3903 = vmatprep.subr.bf16.mxu0 %v3708
    %3904 = vmatpush1.bf16.msra.mxu0 %v3707
    %3905 = vmatprep.subr.bf16.mxu0 %v3706
    %3906 = vmatpush1.bf16.msra.mxu0 %v3705
    %3907 = vmatprep.subr.bf16.mxu0 %v3704
    %3908 = vmatpush1.bf16.msra.mxu0 %v3703
    %3909 = vmatprep.subr.bf16.mxu0 %v3702
    %3910 = vmatpush1.bf16.msra.mxu0 %v3701
    %3911 = vmatprep.subr.bf16.mxu0 %v3700
    %3912 = vmatpush1.bf16.msra.mxu0 %v3699
    %3913 = vmatprep.subr.bf16.mxu0 %v3698
    %3914 = vmatpush1.bf16.msra.mxu0 %v3697
    %3915 = vmatprep.subr.bf16.mxu0 %v3696
    %3916 = vmatpush1.bf16.msra.mxu0 %v3695
    %3917 = vmatprep.subr.bf16.mxu0 %v3694
    %3918 = vmatpush1.bf16.msra.mxu0 %v3693
    %3919 = vmatprep.subr.bf16.mxu0 %v3724
    %3920 = vmatpush2.bf16.msra.mxu0 %v3723
    %3921 = vmatprep.subr.bf16.mxu0 %v3722
    %3922 = vmatpush2.bf16.msra.mxu0 %v3721
    %3923 = vmatprep.subr.bf16.mxu0 %v3720
    %3924 = vmatpush2.bf16.msra.mxu0 %v3719
    %3925 = vmatprep.subr.bf16.mxu0 %v3718
    %3926 = vmatpush2.bf16.msra.mxu0 %v3717
    %3927 = vmatprep.subr.bf16.mxu0 %v3716
    %3928 = vmatpush2.bf16.msra.mxu0 %v3715
    %3929 = vmatprep.subr.bf16.mxu0 %v3714
    %3930 = vmatpush2.bf16.msra.mxu0 %v3713
    %3931 = vmatprep.subr.bf16.mxu0 %v3712
    %3932 = vmatpush2.bf16.msra.mxu0 %v3711
    %3933 = vmatprep.subr.bf16.mxu0 %v3710
    %3934 = vmatpush2.bf16.msra.mxu0 %v3709
    %3935 = vmatprep.mubr.bf16.mxu0 %v3232
    %3936 = vmatmul.mubr.bf16.gmra.mxu0 %v3231
    %v3937 = vpop.f32.mrf.mxu0
    %v3938 = vadd.f32 %v3897, %v3937
    %v3939 = vpop.f32.mrf.mxu0
    %v3940 = vadd.f32 %v3899, %v3939
    %v3941 = vpop.f32.mrf.mxu0
    %v3942 = vpop.f32.mrf.mxu0
    %3943 = vdwg.mxu0
    %v3944 = vsel %vm409, %v3938, 0.0
    %v3945 = vrot.slane %v3944, 4
    %v3946 = vadd.f32 %v3944, %v3945
    %v3947 = vrot.slane %v3946, 2
    %v3948 = vadd.f32 %v3946, %v3947
    %v3949 = vrot.slane %v3948, 1
    %v3950 = vadd.f32 %v3948, %v3949
    %v3951 = vsel %vm409, %v3940, 0.0
    %v3952 = vrot.slane %v3951, 4
    %v3953 = vadd.f32 %v3951, %v3952
    %v3954 = vrot.slane %v3953, 2
    %v3955 = vadd.f32 %v3953, %v3954
    %v3956 = vrot.slane %v3955, 1
    %v3957 = vadd.f32 %v3955, %v3956
    %v3958 = vmul.f32 %v3938, %v3938
    %v3959 = vmul.f32 %v3940, %v3940
    %v3960 = vsel %vm409, %v3958, 0.0
    %v3961 = vrot.slane %v3960, 4
    %v3962 = vadd.f32 %v3960, %v3961
    %v3963 = vrot.slane %v3962, 2
    %v3964 = vadd.f32 %v3962, %v3963
    %v3965 = vrot.slane %v3964, 1
    %v3966 = vadd.f32 %v3964, %v3965
    %v3967 = vsel %vm409, %v3959, 0.0
    %v3968 = vrot.slane %v3967, 4
    %v3969 = vadd.f32 %v3967, %v3968
    %v3970 = vrot.slane %v3969, 2
    %v3971 = vadd.f32 %v3969, %v3970
    %v3972 = vrot.slane %v3971, 1
    %v3973 = vadd.f32 %v3971, %v3972
    %v3974 = vrcp.pop 2.0
    %v3975 = vmul.f32 %v3950, %v3974
    %v3976 = vmul.f32 %v3957, %v3974
    %v3977 = vmul.f32 %v3966, %v3974
    %v3978 = vmul.f32 %v3973, %v3974
    %v3979 = vmul.f32 %v3975, %v3975
    %v3980 = vmul.f32 %v3976, %v3976
    %v3981 = vsub.f32 %v3977, %v3979
    %v3982 = vsub.f32 %v3978, %v3980
    %v3983 = vadd.f32 %v3981, 1e-05
    %v3984 = vadd.f32 %v3982, 1e-05
    %v3985 = vrsqrt.pop %v3983
    %v3986 = vrsqrt.pop %v3984
    %v3987 = vld [vmem:[#allocation25] sm:$0x3]
    %v3990 = vcombine.low %v3985, %v3986
    %v3992 = vunpack.c.l.s4 1966171168
    %v3993 = vunpack.c.0.s8 %v3992
    %v3994 = vlaneseq
    %v3995 = vshrl.u32 %v3994, 7
    %v3996 = vsub.s32 %v3993, %v3995
    %v3997 = vrot.slane %v3990, %v3996
    %v3999 = vunpack.c.l.s4 1966171168
    %v4000 = vunpack.c.0.s8 %v3999
    %v4001 = vlaneseq
    %v4002 = vshrl.u32 %v4001, 7
    %v4003 = vsub.s32 %v4000, %v4002
    %v4004 = vrot.slane %v3997, %v4003
    %v4006 = vmul.f32 %v3987, %v4004
    %v4007 = vld [vmem:[#allocation26] sm:$0x3]
    %v4009 = vlaneseq
    %v4010 = vshrl.u32 %v4009, 7
    %v4011 = vsub.s32 0, %v4010
    %v4012 = vrot.slane %v4006, %v4011
    %v4013 = vlaneseq
    %v4014 = vshrl.u32 %v4013, 7
    %v4015 = vsub.s32 1, %v4014
    %v4016 = vrot.slane %v4006, %v4015
    %v4019 = vmul.f32 %v3975, %v4012
    %v4020 = vmul.f32 %v3976, %v4016
    %v4023 = vcombine.low %v4019, %v4020
    %v4025 = vunpack.c.l.s4 1966171168
    %v4026 = vunpack.c.0.s8 %v4025
    %v4027 = vlaneseq
    %v4028 = vshrl.u32 %v4027, 7
    %v4029 = vsub.s32 %v4026, %v4028
    %v4030 = vrot.slane %v4023, %v4029
    %v4032 = vunpack.c.l.s4 1966171168
    %v4033 = vunpack.c.0.s8 %v4032
    %v4034 = vlaneseq
    %v4035 = vshrl.u32 %v4034, 7
    %v4036 = vsub.s32 %v4033, %v4035
    %v4037 = vrot.slane %v4030, %v4036
    %v4039 = vsub.f32 %v4007, %v4037
    %v4040 = vmul.f32 %v3938, %v4012
    %v4041 = vmul.f32 %v3940, %v4016
    %v4043 = vlaneseq
    %v4044 = vshrl.u32 %v4043, 7
    %v4045 = vsub.s32 0, %v4044
    %v4046 = vrot.slane %v4039, %v4045
    %v4047 = vlaneseq
    %v4048 = vshrl.u32 %v4047, 7
    %v4049 = vsub.s32 1, %v4048
    %v4050 = vrot.slane %v4039, %v4049
    %v4053 = vadd.f32 %v4040, %v4046
    %v4054 = vadd.f32 %v4041, %v4050
    %v4055 = vpack.c.bf16 %v4053, %v4053
    %v4056 = vpack.c.bf16 %v4054, %v4054
    %v4057 = vld [vmem:[%s17] sm:$0xf]
    %v4058 = vld [vmem:[%s17 + $0x4] sm:$0xf]
    %v4059 = vld [vmem:[%s17 + $0x8] sm:$0xf]
    %v4060 = vld [vmem:[%s17 + $0xc] sm:$0xf]
    %v4061 = vld [vmem:[%s17 + $0x10] sm:$0xf]
    %v4062 = vld [vmem:[%s17 + $0x14] sm:$0xf]
    %v4063 = vld [vmem:[%s17 + $0x18] sm:$0xf]
    %v4064 = vld [vmem:[%s17 + $0x1c] sm:$0xf]
    %v4065 = vld [vmem:[%s17 + $0x20] sm:$0xf]
    %v4066 = vld [vmem:[%s17 + $0x24] sm:$0xf]
    %v4067 = vld [vmem:[%s17 + $0x28] sm:$0xf]
    %v4068 = vld [vmem:[%s17 + $0x2c] sm:$0xf]
    %v4069 = vld [vmem:[%s17 + $0x30] sm:$0xf]
    %v4070 = vld [vmem:[%s17 + $0x34] sm:$0xf]
    %v4071 = vld [vmem:[%s17 + $0x38] sm:$0xf]
    %v4072 = vld [vmem:[%s17 + $0x3c] sm:$0xf]
    %v4073 = vld [vmem:[%s17 + $0x40] sm:$0xf]
    %v4074 = vld [vmem:[%s17 + $0x44] sm:$0xf]
    %v4075 = vld [vmem:[%s17 + $0x48] sm:$0xf]
    %v4076 = vld [vmem:[%s17 + $0x4c] sm:$0xf]
    %v4077 = vld [vmem:[%s17 + $0x50] sm:$0xf]
    %v4078 = vld [vmem:[%s17 + $0x54] sm:$0xf]
    %v4079 = vld [vmem:[%s17 + $0x58] sm:$0xf]
    %v4080 = vld [vmem:[%s17 + $0x5c] sm:$0xf]
    %v4081 = vld [vmem:[%s17 + $0x60] sm:$0xf]
    %v4082 = vld [vmem:[%s17 + $0x64] sm:$0xf]
    %v4083 = vld [vmem:[%s17 + $0x68] sm:$0xf]
    %v4084 = vld [vmem:[%s17 + $0x6c] sm:$0xf]
    %v4085 = vld [vmem:[%s17 + $0x70] sm:$0xf]
    %v4086 = vld [vmem:[%s17 + $0x74] sm:$0xf]
    %v4087 = vld [vmem:[%s17 + $0x78] sm:$0xf]
    %v4088 = vld [vmem:[%s17 + $0x7c] sm:$0xf]
    %v4089 = vld [vmem:[%s18] sm:$0x1]
    %v4091 = vlaneseq
    %v4092 = vshrl.u32 %v4091, 7
    %v4093 = vsub.s32 0, %v4092
    %v4094 = vrot.slane %v4089, %v4093
    %v4128 = vunpack.c.l.b16 %v4057
    %v4129 = vunpack.c.l.b16 %v4058
    %v4130 = vunpack.c.l.b16 %v4059
    %v4131 = vunpack.c.l.b16 %v4060
    %v4132 = vunpack.c.l.b16 %v4061
    %v4133 = vunpack.c.l.b16 %v4062
    %v4134 = vunpack.c.l.b16 %v4063
    %v4135 = vunpack.c.l.b16 %v4064
    %v4136 = vunpack.c.l.b16 %v4065
    %v4137 = vunpack.c.l.b16 %v4066
    %v4138 = vunpack.c.l.b16 %v4067
    %v4139 = vunpack.c.l.b16 %v4068
    %v4140 = vunpack.c.l.b16 %v4069
    %v4141 = vunpack.c.l.b16 %v4070
    %v4142 = vunpack.c.l.b16 %v4071
    %v4143 = vunpack.c.l.b16 %v4072
    %v4144 = vunpack.c.l.b16 %v4073
    %v4145 = vunpack.c.l.b16 %v4074
    %v4146 = vunpack.c.l.b16 %v4075
    %v4147 = vunpack.c.l.b16 %v4076
    %v4148 = vunpack.c.l.b16 %v4077
    %v4149 = vunpack.c.l.b16 %v4078
    %v4150 = vunpack.c.l.b16 %v4079
    %v4151 = vunpack.c.l.b16 %v4080
    %v4152 = vunpack.c.l.b16 %v4081
    %v4153 = vunpack.c.l.b16 %v4082
    %v4154 = vunpack.c.l.b16 %v4083
    %v4155 = vunpack.c.l.b16 %v4084
    %v4156 = vunpack.c.l.b16 %v4085
    %v4157 = vunpack.c.l.b16 %v4086
    %v4158 = vunpack.c.l.b16 %v4087
    %v4159 = vunpack.c.l.b16 %v4088
    %v4160 = vpack.c.b16 %v4129, %v4128
    %v4161 = vpack.c.b16 %v4131, %v4130
    %v4162 = vpack.c.b16 %v4133, %v4132
    %v4163 = vpack.c.b16 %v4135, %v4134
    %v4164 = vpack.c.b16 %v4137, %v4136
    %v4165 = vpack.c.b16 %v4139, %v4138
    %v4166 = vpack.c.b16 %v4141, %v4140
    %v4167 = vpack.c.b16 %v4143, %v4142
    %v4168 = vpack.c.b16 %v4145, %v4144
    %v4169 = vpack.c.b16 %v4147, %v4146
    %v4170 = vpack.c.b16 %v4149, %v4148
    %v4171 = vpack.c.b16 %v4151, %v4150
    %v4172 = vpack.c.b16 %v4153, %v4152
    %v4173 = vpack.c.b16 %v4155, %v4154
    %v4174 = vpack.c.b16 %v4157, %v4156
    %v4175 = vpack.c.b16 %v4159, %v4158
    %4192 = vmatprep.subr.bf16.mxu0 0
    %4193 = vmatpush1.bf16.msra.mxu0 %v4167
    %4194 = vmatprep.subr.bf16.mxu0 0
    %4195 = vmatpush1.bf16.msra.mxu0 %v4166
    %4196 = vmatprep.subr.bf16.mxu0 0
    %4197 = vmatpush1.bf16.msra.mxu0 %v4165
    %4198 = vmatprep.subr.bf16.mxu0 0
    %4199 = vmatpush1.bf16.msra.mxu0 %v4164
    %4200 = vmatprep.subr.bf16.mxu0 0
    %4201 = vmatpush1.bf16.msra.mxu0 %v4163
    %4202 = vmatprep.subr.bf16.mxu0 0
    %4203 = vmatpush1.bf16.msra.mxu0 %v4162
    %4204 = vmatprep.subr.bf16.mxu0 0
    %4205 = vmatpush1.bf16.msra.mxu0 %v4161
    %4206 = vmatprep.subr.bf16.mxu0 0
    %4207 = vmatpush1.bf16.msra.mxu0 %v4160
    %4208 = vmatprep.subr.bf16.mxu0 0
    %4209 = vmatpush2.bf16.msra.mxu0 %v4175
    %4210 = vmatprep.subr.bf16.mxu0 0
    %4211 = vmatpush2.bf16.msra.mxu0 %v4174
    %4212 = vmatprep.subr.bf16.mxu0 0
    %4213 = vmatpush2.bf16.msra.mxu0 %v4173
    %4214 = vmatprep.subr.bf16.mxu0 0
    %4215 = vmatpush2.bf16.msra.mxu0 %v4172
    %4216 = vmatprep.subr.bf16.mxu0 0
    %4217 = vmatpush2.bf16.msra.mxu0 %v4171
    %4218 = vmatprep.subr.bf16.mxu0 0
    %4219 = vmatpush2.bf16.msra.mxu0 %v4170
    %4220 = vmatprep.subr.bf16.mxu0 0
    %4221 = vmatpush2.bf16.msra.mxu0 %v4169
    %4222 = vmatprep.subr.bf16.mxu0 0
    %4223 = vmatpush2.bf16.msra.mxu0 %v4168
    %4224 = vmatprep.mubr.bf16.mxu0 %v4056
    %4225 = vmatmul.mubr.bf16.gmra.mxu0 %v4055
    %v4226 = vpop.f32.mrf.mxu0
    %v4227 = vadd.f32 %v4094, %v4226
    %v4228 = vpop.f32.mrf.mxu0
    %v4229 = vpop.f32.mrf.mxu0
    %v4230 = vpop.f32.mrf.mxu0
    %4231 = vdwg.mxu0
    %4232 = vst [vmem:[#allocation28] sm:$0x3] %v4227
    // Predicated region
    $region134: #{tpu_custom_call.1} parent=1 // pred_check
      _
    $region135: #{tpu_custom_call.1} parent=1 // pred_check_branch
      %4234 = sbr.rel (0) target = $region137
    $region136: #{tpu_custom_call.1} parent=1 // pred_region
      %s4236 = ssub.s32 32, 32
      %4237 = vsyncadd [#allocation7], %s4236
      %s4239 = sshll.u32 [#allocation28], 4
      %s4240 = int_to_ptr.vmem [resolvable:$true] %s4239
      %4242 = dma.vmem_to_hbm [thread:$0]  %s4240, 32, %s19, [#allocation7]
    $region137: #{tpu_custom_call.1} parent=1 // pred_fallthru
      _
    // Predicated region
    $region138: #{tpu_custom_call.1} parent=1 // pred_check
      _
    $region139: #{tpu_custom_call.1} parent=1 // pred_check_branch
      %4244 = sbr.rel (0) target = $region141
    $region140: #{tpu_custom_call.1} parent=1 // pred_region
      %4245 = dma.done [#allocation7], 32
    $region141: #{tpu_custom_call.1} parent=1 // pred_fallthru
      _
    %4246 = vsyncpa [#allocation6], 1
    %4247 = vsyncpa [#allocation9], 1
    %4248 = vsyncpa [#allocation12], 1
    %4249 = vsyncpa [#allocation15], 1
    %4250 = vsyncpa [#allocation18], 1
    %4251 = vsyncpa [#allocation21], 1
    %4252 = vsyncpa [#allocation24], 1
    %4253 = vsyncpa [#allocation27], 1
    %4254 = vsyncpa [#allocation7], 1

</llo_original>
